<compile_context>
chip_gen: v5e
topology: v5e:2x2
jax: 0.10.0
libtpu: 0.0.40
codegen_flags: <defaults>
</compile_context>

<pallas_src>
import functools
import math

import jax
import jax.numpy as jnp
from jax.experimental import pallas as pl
from jax.experimental.pallas import tpu as pltpu

LN_EPS = 1e-12        # ESPnet LayerNorm eps
BN_EPS = 1e-5         # torch BatchNorm1d eps
VMEM_LIMIT = 32 * 1024 * 1024   # scoped VMEM; headroom on v7x (64 MiB physical)
ROW_TILE = 256        # M-tile (rows of B*T) for the row-wise FFN kernels


# ----------------------------- in-kernel helpers ---------------------------

def _ln_f32(x, g, b):
    """LayerNorm over last dim, f32 math.  g/b are (1, D)."""
    mu = jnp.mean(x, axis=-1, keepdims=True)
    var = jnp.mean(jnp.square(x - mu), axis=-1, keepdims=True)
    return (x - mu) * jax.lax.rsqrt(var + LN_EPS) * g + b


# ----------------------------- Pallas kernels ------------------------------

def _ffn_body(x_ref, lg_ref, lb_ref, w1_ref, b1_ref, w2_ref, b2_ref, scale):
    # out = x + scale * (relu(LN(x) @ W1 + b1) @ W2 + b2)
    x = x_ref[...].astype(jnp.float32)
    xn = _ln_f32(x, lg_ref[...], lb_ref[...])
    h = jnp.dot(xn.astype(jnp.bfloat16), w1_ref[...],
                preferred_element_type=jnp.float32) + b1_ref[...]
    h = jnp.maximum(h, 0.0)
    y = jnp.dot(h.astype(jnp.bfloat16), w2_ref[...],
                preferred_element_type=jnp.float32) + b2_ref[...]
    return x + scale * y


def _ffn_kernel(x_ref, lg_ref, lb_ref, w1_ref, b1_ref, w2_ref, b2_ref, o_ref, *, scale):
    o_ref[...] = _ffn_body(x_ref, lg_ref, lb_ref, w1_ref, b1_ref,
                           w2_ref, b2_ref, scale).astype(o_ref.dtype)


def _ffn_final_kernel(x_ref, lg_ref, lb_ref, w1_ref, b1_ref, w2_ref, b2_ref,
                      fg_ref, fb_ref, o_ref, *, scale):
    # same as _ffn_kernel, plus the final LayerNorm fused into the epilogue
    y = _ffn_body(x_ref, lg_ref, lb_ref, w1_ref, b1_ref, w2_ref, b2_ref, scale)
    o_ref[...] = _ln_f32(y, fg_ref[...], fb_ref[...]).astype(o_ref.dtype)


def _mha_kernel(x_ref, m_ref, lg_ref, lb_ref, wqkv_ref, bqkv_ref, wo_ref, bo_ref,
                o_ref, *, H, dk, D):
    # Whole MHA sub-block for one batch: LN -> fused QKV matmul -> per-head
    # masked softmax attention -> output projection -> +residual.
    # Q is pre-scaled (1/sqrt(dk) folded into Wq/bq).  Heads are static slices
    # of the lane axis — no head transposes; context is written lane-dense.
    x = x_ref[0].astype(jnp.float32)                      # (T, D)
    xn = _ln_f32(x, lg_ref[...], lb_ref[...])
    qkv = (jnp.dot(xn.astype(jnp.bfloat16), wqkv_ref[...],
                   preferred_element_type=jnp.float32) + bqkv_ref[...]
           ).astype(jnp.bfloat16)                         # (T, 3D)
    keep = m_ref[0] > 0.0                                 # (1, T) key mask
    neg = jnp.float32(-1e30)
    heads = []
    for h in range(H):
        q = qkv[:, h * dk:(h + 1) * dk]                   # (T, dk) bf16
        k = qkv[:, D + h * dk:D + (h + 1) * dk]           # (T, dk) bf16
        v = qkv[:, 2 * D + h * dk:2 * D + (h + 1) * dk]   # (T, dk) bf16
        s = jnp.dot(q, k.T, preferred_element_type=jnp.float32)   # (T, T) f32
        s = jnp.where(keep, s, neg)
        e = jnp.exp(s - jnp.max(s, axis=-1, keepdims=True))
        p = e / jnp.sum(e, axis=-1, keepdims=True)
        p = jnp.where(keep, p, 0.0)                       # torch: masked_fill(mask==0, 0.0)
        heads.append(jnp.dot(p.astype(jnp.bfloat16), v,
                             preferred_element_type=jnp.float32))
    ctx = jnp.concatenate(heads, axis=-1).astype(jnp.bfloat16)    # (T, D)
    y = jnp.dot(ctx, wo_ref[...], preferred_element_type=jnp.float32) + bo_ref[...]
    o_ref[0] = (x + y).astype(o_ref.dtype)


def _conv_kernel(x_ref, lg_ref, lb_ref, pw1w_ref, pw1b_ref, dww_ref, dwb_ref,
                 bng_ref, bnb_ref, bnm_ref, bnv_ref, pw2w_ref, pw2b_ref,
                 o_ref, *, K, T):
    # Whole ConvolutionModule for one batch: LN -> pointwise-conv1 -> GLU ->
    # depthwise conv (in-kernel zero padding via pltpu.roll + mask) ->
    # BatchNorm (eval, running stats) -> Swish -> pointwise-conv2 -> +residual.
    x = x_ref[0].astype(jnp.float32)                      # (T, D)
    xn = _ln_f32(x, lg_ref[...], lb_ref[...])
    y = jnp.dot(xn.astype(jnp.bfloat16), pw1w_ref[...],
                preferred_element_type=jnp.float32) + pw1b_ref[...]   # (T, 2D)
    d = y.shape[-1] // 2
    g = y[:, :d] * jax.nn.sigmoid(y[:, d:])               # GLU, (T, D) f32

    pad = (K - 1) // 2
    t = jax.lax.broadcasted_iota(jnp.int32, (T, 1), 0)
    w = dww_ref[...].astype(jnp.float32)                  # (K, D)
    acc = jnp.zeros_like(g)
    for k in range(K):
        off = k - pad
        gs = pltpu.roll(g, (-off) % T, 0)                 # gs[t] = g[(t + off) mod T]
        valid = ((t + off) >= 0) & ((t + off) < T)        # zero-padding outside [0, T)
        acc = acc + jnp.where(valid, gs, 0.0) * w[k:k + 1, :]
    yb = acc + dwb_ref[...]
    yhat = (yb - bnm_ref[...]) * jax.lax.rsqrt(bnv_ref[...] + BN_EPS) * bng_ref[...] + bnb_ref[...]
    sw = yhat * jax.nn.sigmoid(yhat)                      # Swish

    out = jnp.dot(sw.astype(jnp.bfloat16), pw2w_ref[...],
                  preferred_element_type=jnp.float32) + pw2b_ref[...]
    o_ref[0] = (x + out).astype(o_ref.dtype)


# ----------------------------- pallas_call wrappers -------------------------

def _compiler_params():
    return pltpu.CompilerParams(dimension_semantics=("parallel",),
                                vmem_limit_bytes=VMEM_LIMIT)


def _bspec_full(arr):
    # Block-resident array: full extent, constant index_map (not re-streamed).
    nd = arr.ndim
    return pl.BlockSpec(arr.shape, lambda i, nd=nd: (0,) * nd)


def _row_tiled(kernel, row_args, bcast_args, out_d, out_dtype, *, tm=ROW_TILE, cost=None):
    """Run `kernel` tiled over the M (=B*T) axis of `row_args` ((M, d_i) arrays)."""
    M = row_args[0].shape[0]
    tm = min(tm, M)
    Mp = ((M + tm - 1) // tm) * tm
    if Mp != M:  # pad rows so the grid divides evenly (zero rows are harmless)
        row_args = [jnp.pad(a, ((0, Mp - M), (0, 0))) for a in row_args]
    grid = (Mp // tm,)
    in_specs = ([pl.BlockSpec((tm, a.shape[1]), lambda i: (i, 0)) for a in row_args]
                + [_bspec_full(b) for b in bcast_args])
    out = pl.pallas_call(
        kernel,
        out_shape=jax.ShapeDtypeStruct((Mp, out_d), out_dtype),
        grid=grid,
        in_specs=in_specs,
        out_specs=pl.BlockSpec((tm, out_d), lambda i: (i, 0)),
        compiler_params=_compiler_params(),
        cost_estimate=cost,
    )(*row_args, *bcast_args)
    return out[:M] if Mp != M else out


def mha_block(x_btd, mask_b1t, lg, lb, wqkv, bqkv, wo, bo, *, H, dk, D, cost=None):
    B, T, _ = x_btd.shape
    kern = functools.partial(_mha_kernel, H=H, dk=dk, D=D)
    return pl.pallas_call(
        kern,
        out_shape=jax.ShapeDtypeStruct((B, T, D), jnp.float32),
        grid=(B,),
        in_specs=[pl.BlockSpec((1, T, D), lambda b: (b, 0, 0)),
                  pl.BlockSpec((1, 1, T), lambda b: (b, 0, 0)),
                  _bspec_full(lg), _bspec_full(lb), _bspec_full(wqkv),
                  _bspec_full(bqkv), _bspec_full(wo), _bspec_full(bo)],
        out_specs=pl.BlockSpec((1, T, D), lambda b: (b, 0, 0)),
        compiler_params=_compiler_params(),
        cost_estimate=cost,
    )(x_btd, mask_b1t, lg, lb, wqkv, bqkv, wo, bo)


def conv_block(x_btd, lg, lb, pw1_w, pw1_b, dw_w, dw_b, bn_g, bn_b, bn_m, bn_v,
               pw2_w, pw2_b, *, cost=None):
    B, T, D = x_btd.shape
    K = dw_w.shape[0]
    kern = functools.partial(_conv_kernel, K=K, T=T)
    bargs = [lg, lb, pw1_w, pw1_b, dw_w, dw_b, bn_g, bn_b, bn_m, bn_v, pw2_w, pw2_b]
    return pl.pallas_call(
        kern,
        out_shape=jax.ShapeDtypeStruct((B, T, D), jnp.float32),
        grid=(B,),
        in_specs=[pl.BlockSpec((1, T, D), lambda b: (b, 0, 0))]
                 + [_bspec_full(a) for a in bargs],
        out_specs=pl.BlockSpec((1, T, D), lambda b: (b, 0, 0)),
        compiler_params=_compiler_params(),
        cost_estimate=cost,
    )(x_btd, *bargs)


# ----------------------------- EncoderLayer forward ------------------------

def encoder_layer(params, x, mask, n_head):
    """x: (B, T, D) float32, mask: (B, T) bool.  Returns (out, mask)."""
    B, T, D = x.shape
    H = n_head
    dk = D // H
    M = B * T
    ff_scale = 0.5                      # macaron style
    attn_scale = 1.0 / math.sqrt(dk)

    p = params
    ffm, ff, at, cv = p["ff_macaron"], p["ff"], p["attn"], p["conv"]
    Dff = ffm["w1"].shape[1]
    K = cv["dw_w"].shape[0]

    # --- pre-cast MXU weights to bf16; fold 1/sqrt(dk) into the Q projection ---
    w1m, w2m = ffm["w1"].astype(jnp.bfloat16), ffm["w2"].astype(jnp.bfloat16)
    w1f, w2f = ff["w1"].astype(jnp.bfloat16), ff["w2"].astype(jnp.bfloat16)
    wqkv = jnp.concatenate([at["wq"] * attn_scale, at["wk"], at["wv"]],
                           axis=1).astype(jnp.bfloat16)                    # (D, 3D)
    bqkv = jnp.concatenate([at["bq"] * attn_scale, at["bk"], at["bv"]], axis=1)
    wo = at["wo"].astype(jnp.bfloat16)
    pw1_w = cv["pw1_w"].astype(jnp.bfloat16)
    pw2_w = cv["pw2_w"].astype(jnp.bfloat16)

    x2d = x.reshape(M, D)
    mask_b1t = mask[:, None, :].astype(jnp.float32)

    ffn_cost = pl.CostEstimate(flops=4 * M * D * Dff, transcendentals=0,
                               bytes_accessed=2 * M * D * 4 + 4 * D * Dff)
    mha_cost = pl.CostEstimate(flops=2 * M * D * 3 * D + 4 * M * T * D + 2 * M * D * D,
                               transcendentals=M * T * H,
                               bytes_accessed=2 * M * D * 4 + 8 * D * D)
    conv_cost = pl.CostEstimate(flops=4 * M * D * D + 2 * M * D * K + 2 * M * D * D,
                                transcendentals=2 * M * D,
                                bytes_accessed=2 * M * D * 4 + 6 * D * D)

    # 1) macaron feed-forward (LN + FFN + 0.5*scale + residual fused)
    x1 = _row_tiled(functools.partial(_ffn_kernel, scale=ff_scale),
                    [x2d],
                    [p["ln_macaron"]["g"], p["ln_macaron"]["b"],
                     w1m, ffm["b1"], w2m, ffm["b2"]],
                    D, jnp.float32, cost=ffn_cost)

    # 2) multi-headed self-attention, fully fused per batch
    #    (LN + QKV proj + masked softmax attention + output proj + residual)
    x2 = mha_block(x1.reshape(B, T, D), mask_b1t,
                   p["ln_mha"]["g"], p["ln_mha"]["b"], wqkv, bqkv, wo, at["bo"],
                   H=H, dk=dk, D=D, cost=mha_cost)

    # 3) convolution module, fully fused per batch
    #    (LN + pw1 + GLU + depthwise conv + BN(eval) + Swish + pw2 + residual)
    x3 = conv_block(x2, p["ln_conv"]["g"], p["ln_conv"]["b"],
                    pw1_w, cv["pw1_b"], cv["dw_w"], cv["dw_b"],
                    cv["bn_g"], cv["bn_b"], cv["bn_mean"], cv["bn_var"],
                    pw2_w, cv["pw2_b"], cost=conv_cost)

    # 4) feed-forward + 5) final LayerNorm (fully fused)
    out = _row_tiled(functools.partial(_ffn_final_kernel, scale=ff_scale),
                     [x3.reshape(M, D)],
                     [p["ln_ff"]["g"], p["ln_ff"]["b"], w1f, ff["b1"], w2f, ff["b2"],
                      p["ln_final"]["g"], p["ln_final"]["b"]],
                     D, jnp.float32, cost=ffn_cost)

    return out.reshape(B, T, D), mask


# ----------------------------- parameter init ------------------------------

def init_params(key, D, Dff, K):
    ks = iter(jax.random.split(key, 32))

    def w(shape):
        return jax.random.normal(next(ks), shape, jnp.float32) * 0.02

    def ln_p():
        return {"g": jnp.ones((1, D), jnp.float32), "b": jnp.zeros((1, D), jnp.float32)}

    def ff_p():
        return {"w1": w((D, Dff)), "b1": jnp.zeros((1, Dff), jnp.float32),
                "w2": w((Dff, D)), "b2": jnp.zeros((1, D), jnp.float32)}

    attn = {"wq": w((D, D)), "bq": jnp.zeros((1, D), jnp.float32),
            "wk": w((D, D)), "bk": jnp.zeros((1, D), jnp.float32),
            "wv": w((D, D)), "bv": jnp.zeros((1, D), jnp.float32),
            "wo": w((D, D)), "bo": jnp.zeros((1, D), jnp.float32)}

    conv = {"pw1_w": w((D, 2 * D)), "pw1_b": jnp.zeros((1, 2 * D), jnp.float32),
            "dw_w": w((K, D)), "dw_b": jnp.zeros((1, D), jnp.float32),
            "bn_g": jnp.ones((1, D), jnp.float32), "bn_b": jnp.zeros((1, D), jnp.float32),
            "bn_mean": jnp.zeros((1, D), jnp.float32), "bn_var": jnp.ones((1, D), jnp.float32),
            "pw2_w": w((D, D)), "pw2_b": jnp.zeros((1, D), jnp.float32)}

    return {"ln_macaron": ln_p(), "ln_mha": ln_p(), "ln_conv": ln_p(),
            "ln_ff": ln_p(), "ln_final": ln_p(),
            "ff_macaron": ff_p(), "ff": ff_p(),
            "attn": attn, "conv": conv}


# ----------------------------- main -----------------------------------------

if __name__ == "__main__":
    # Lane-dense small config: D is a multiple of 128, T a multiple of 8.
    B, T, D, H, Dff, K = 2, 16, 128, 4, 256, 7
    key = jax.random.PRNGKey(0)
    kx, kp = jax.random.split(key)

    x = jax.random.normal(kx, (B, T, D), jnp.float32)
    mask = jnp.array([[True] * T, [True] * (T - 2) + [False] * 2])  # (B, T)

    params = init_params(kp, D, Dff, K)

    fwd = jax.jit(functools.partial(encoder_layer, n_head=H))
    out, out_mask = fwd(params, x, mask)
    out = jax.block_until_ready(out)

    assert out.shape == (B, T, D)
    assert out.dtype == jnp.float32
    assert bool(jnp.all(jnp.isfinite(out)))
    print("KERNEL_OK")
</pallas_src>

<mosaic_0001>
module attributes {stable_mosaic.version = 11 : i64} {
  func.func @_ffn_kernel(%arg0: i32, %arg1: memref<32x128xf32, #tpu.memory_space<vmem>>, %arg2: memref<1x128xf32, #tpu.memory_space<vmem>>, %arg3: memref<1x128xf32, #tpu.memory_space<vmem>>, %arg4: memref<128x256xbf16, #tpu.memory_space<vmem>>, %arg5: memref<1x256xf32, #tpu.memory_space<vmem>>, %arg6: memref<256x128xbf16, #tpu.memory_space<vmem>>, %arg7: memref<1x128xf32, #tpu.memory_space<vmem>>, %arg8: memref<32x128xf32, #tpu.memory_space<vmem>>) attributes {dimension_semantics = [#tpu.dimension_semantics<parallel>], iteration_bounds = array<i64: 1>, scalar_prefetch = 0 : i64, scratch_operands = 0 : i64, tpu.core_type = #tpu.core_type<tc>, window_params = [{transform_indices = @transform_0, window_bounds = array<i64: 32, 128>}, {pipeline_mode = #tpu.pipeline_mode<synchronous>, transform_indices = @transform_1, window_bounds = array<i64: 1, 128>}, {pipeline_mode = #tpu.pipeline_mode<synchronous>, transform_indices = @transform_2, window_bounds = array<i64: 1, 128>}, {pipeline_mode = #tpu.pipeline_mode<synchronous>, transform_indices = @transform_3, window_bounds = array<i64: 128, 256>}, {pipeline_mode = #tpu.pipeline_mode<synchronous>, transform_indices = @transform_4, window_bounds = array<i64: 1, 256>}, {pipeline_mode = #tpu.pipeline_mode<synchronous>, transform_indices = @transform_5, window_bounds = array<i64: 256, 128>}, {pipeline_mode = #tpu.pipeline_mode<synchronous>, transform_indices = @transform_6, window_bounds = array<i64: 1, 128>}, {transform_indices = @transform_7, window_bounds = array<i64: 32, 128>}]} {
    %c0 = arith.constant 0 : index
    %c0_0 = arith.constant 0 : index
    %0 = vector.load %arg1[%c0, %c0_0] : memref<32x128xf32, #tpu.memory_space<vmem>>, vector<32x128xf32>
    %c0_1 = arith.constant 0 : index
    %c0_2 = arith.constant 0 : index
    %1 = vector.load %arg2[%c0_1, %c0_2] : memref<1x128xf32, #tpu.memory_space<vmem>>, vector<1x128xf32>
    %c0_3 = arith.constant 0 : index
    %c0_4 = arith.constant 0 : index
    %2 = vector.load %arg3[%c0_3, %c0_4] : memref<1x128xf32, #tpu.memory_space<vmem>>, vector<1x128xf32>
    %cst = arith.constant dense<0.000000e+00> : vector<32xf32>
    %3 = vector.multi_reduction <add>, %0, %cst [1] : vector<32x128xf32> to vector<32xf32>
    %4 = vector.shape_cast %3 : vector<32xf32> to vector<32x1xf32>
    %cst_5 = arith.constant 1.280000e+02 : f32
    %5 = vector.broadcast %cst_5 : f32 to vector<32x1xf32>
    %6 = arith.divf %4, %5 : vector<32x1xf32>
    %7 = vector.broadcast %6 : vector<32x1xf32> to vector<32x128xf32>
    %8 = arith.subf %0, %7 : vector<32x128xf32>
    %9 = arith.mulf %8, %8 : vector<32x128xf32>
    %cst_6 = arith.constant dense<0.000000e+00> : vector<32xf32>
    %10 = vector.multi_reduction <add>, %9, %cst_6 [1] : vector<32x128xf32> to vector<32xf32>
    %11 = vector.shape_cast %10 : vector<32xf32> to vector<32x1xf32>
    %cst_7 = arith.constant 1.280000e+02 : f32
    %12 = vector.broadcast %cst_7 : f32 to vector<32x1xf32>
    %13 = arith.divf %11, %12 : vector<32x1xf32>
    %14 = vector.broadcast %6 : vector<32x1xf32> to vector<32x128xf32>
    %15 = arith.subf %0, %14 : vector<32x128xf32>
    %cst_8 = arith.constant 9.99999996E-13 : f32
    %16 = vector.broadcast %cst_8 : f32 to vector<32x1xf32>
    %17 = arith.addf %13, %16 : vector<32x1xf32>
    %18 = math.rsqrt %17 : vector<32x1xf32>
    %19 = vector.broadcast %18 : vector<32x1xf32> to vector<32x128xf32>
    %20 = arith.mulf %15, %19 : vector<32x128xf32>
    %21 = vector.broadcast %1 : vector<1x128xf32> to vector<32x128xf32>
    %22 = arith.mulf %20, %21 : vector<32x128xf32>
    %23 = vector.broadcast %2 : vector<1x128xf32> to vector<32x128xf32>
    %24 = arith.addf %22, %23 : vector<32x128xf32>
    %25 = arith.truncf %24 : vector<32x128xf32> to vector<32x128xbf16>
    %c0_9 = arith.constant 0 : index
    %c0_10 = arith.constant 0 : index
    %26 = vector.load %arg4[%c0_9, %c0_10] : memref<128x256xbf16, #tpu.memory_space<vmem>>, vector<128x256xbf16>
    %cst_11 = arith.constant dense<0.000000e+00> : vector<32x256xf32>
    %27 = tpu.matmul %25, %26, %cst_11 {dimension_numbers = #tpu.dot_dimension_numbers<[1], [0], [0], [1], [0, 0, 1, 1], [], []>} : vector<32x128xbf16>, vector<128x256xbf16>, vector<32x256xf32> -> vector<32x256xf32>
    %c0_12 = arith.constant 0 : index
    %c0_13 = arith.constant 0 : index
    %28 = vector.load %arg5[%c0_12, %c0_13] : memref<1x256xf32, #tpu.memory_space<vmem>>, vector<1x256xf32>
    %29 = vector.broadcast %28 : vector<1x256xf32> to vector<32x256xf32>
    %30 = arith.addf %27, %29 : vector<32x256xf32>
    %cst_14 = arith.constant 0.000000e+00 : f32
    %31 = vector.broadcast %cst_14 : f32 to vector<32x256xf32>
    %32 = arith.maximumf %30, %31 : vector<32x256xf32>
    %33 = arith.truncf %32 : vector<32x256xf32> to vector<32x256xbf16>
    %c0_15 = arith.constant 0 : index
    %c0_16 = arith.constant 0 : index
    %34 = vector.load %arg6[%c0_15, %c0_16] : memref<256x128xbf16, #tpu.memory_space<vmem>>, vector<256x128xbf16>
    %cst_17 = arith.constant dense<0.000000e+00> : vector<32x128xf32>
    %35 = tpu.matmul %33, %34, %cst_17 {dimension_numbers = #tpu.dot_dimension_numbers<[1], [0], [0], [1], [0, 0, 1, 1], [], []>} : vector<32x256xbf16>, vector<256x128xbf16>, vector<32x128xf32> -> vector<32x128xf32>
    %c0_18 = arith.constant 0 : index
    %c0_19 = arith.constant 0 : index
    %36 = vector.load %arg7[%c0_18, %c0_19] : memref<1x128xf32, #tpu.memory_space<vmem>>, vector<1x128xf32>
    %37 = vector.broadcast %36 : vector<1x128xf32> to vector<32x128xf32>
    %38 = arith.addf %35, %37 : vector<32x128xf32>
    %cst_20 = arith.constant 5.000000e-01 : f32
    %39 = vector.broadcast %cst_20 : f32 to vector<32x128xf32>
    %40 = arith.mulf %39, %38 : vector<32x128xf32>
    %41 = arith.addf %0, %40 : vector<32x128xf32>
    %c0_21 = arith.constant 0 : index
    %c0_22 = arith.constant 0 : index
    %42 = vector.load %arg8[%c0_21, %c0_22] : memref<32x128xf32, #tpu.memory_space<vmem>>, vector<32x128xf32>
    tpu.vector_store %arg8[%c0_21, %c0_22], %41 {strides = array<i32>} : memref<32x128xf32, #tpu.memory_space<vmem>>, vector<32x128xf32>,
    return
  }
  func.func @transform_0(%arg0: i32) -> (i32, i32) {
    %c0_i32 = arith.constant 0 : i32
    %c0_i32_0 = arith.constant 0 : i32
    return %arg0, %c0_i32 : i32, i32
  }
  func.func @transform_1(%arg0: i32) -> (i32, i32) {
    %c0_i32 = arith.constant 0 : i32
    %c0_i32_0 = arith.constant 0 : i32
    %c0_i32_1 = arith.constant 0 : i32
    return %c0_i32, %c0_i32_0 : i32, i32
  }
  func.func @transform_2(%arg0: i32) -> (i32, i32) {
    %c0_i32 = arith.constant 0 : i32
    %c0_i32_0 = arith.constant 0 : i32
    %c0_i32_1 = arith.constant 0 : i32
    return %c0_i32, %c0_i32_0 : i32, i32
  }
  func.func @transform_3(%arg0: i32) -> (i32, i32) {
    %c0_i32 = arith.constant 0 : i32
    %c0_i32_0 = arith.constant 0 : i32
    %c0_i32_1 = arith.constant 0 : i32
    return %c0_i32, %c0_i32_0 : i32, i32
  }
  func.func @transform_4(%arg0: i32) -> (i32, i32) {
    %c0_i32 = arith.constant 0 : i32
    %c0_i32_0 = arith.constant 0 : i32
    %c0_i32_1 = arith.constant 0 : i32
    return %c0_i32, %c0_i32_0 : i32, i32
  }
  func.func @transform_5(%arg0: i32) -> (i32, i32) {
    %c0_i32 = arith.constant 0 : i32
    %c0_i32_0 = arith.constant 0 : i32
    %c0_i32_1 = arith.constant 0 : i32
    return %c0_i32, %c0_i32_0 : i32, i32
  }
  func.func @transform_6(%arg0: i32) -> (i32, i32) {
    %c0_i32 = arith.constant 0 : i32
    %c0_i32_0 = arith.constant 0 : i32
    %c0_i32_1 = arith.constant 0 : i32
    return %c0_i32, %c0_i32_0 : i32, i32
  }
  func.func @transform_7(%arg0: i32) -> (i32, i32) {
    %c0_i32 = arith.constant 0 : i32
    %c0_i32_0 = arith.constant 0 : i32
    return %arg0, %c0_i32 : i32, i32
  }
}

module attributes {stable_mosaic.version = 11 : i64} {
  func.func @_mha_kernel(%arg0: i32, %arg1: memref<1x16x128xf32, #tpu.memory_space<vmem>>, %arg2: memref<1x1x16xf32, #tpu.memory_space<vmem>>, %arg3: memref<1x128xf32, #tpu.memory_space<vmem>>, %arg4: memref<1x128xf32, #tpu.memory_space<vmem>>, %arg5: memref<128x384xbf16, #tpu.memory_space<vmem>>, %arg6: memref<1x384xf32, #tpu.memory_space<vmem>>, %arg7: memref<128x128xbf16, #tpu.memory_space<vmem>>, %arg8: memref<1x128xf32, #tpu.memory_space<vmem>>, %arg9: memref<1x16x128xf32, #tpu.memory_space<vmem>>) attributes {dimension_semantics = [#tpu.dimension_semantics<parallel>], iteration_bounds = array<i64: 2>, scalar_prefetch = 0 : i64, scratch_operands = 0 : i64, tpu.core_type = #tpu.core_type<tc>, window_params = [{transform_indices = @transform_0, window_bounds = array<i64: 1, 16, 128>}, {transform_indices = @transform_1, window_bounds = array<i64: 1, 1, 16>}, {pipeline_mode = #tpu.pipeline_mode<synchronous>, transform_indices = @transform_2, window_bounds = array<i64: 1, 128>}, {pipeline_mode = #tpu.pipeline_mode<synchronous>, transform_indices = @transform_3, window_bounds = array<i64: 1, 128>}, {pipeline_mode = #tpu.pipeline_mode<synchronous>, transform_indices = @transform_4, window_bounds = array<i64: 128, 384>}, {pipeline_mode = #tpu.pipeline_mode<synchronous>, transform_indices = @transform_5, window_bounds = array<i64: 1, 384>}, {pipeline_mode = #tpu.pipeline_mode<synchronous>, transform_indices = @transform_6, window_bounds = array<i64: 128, 128>}, {pipeline_mode = #tpu.pipeline_mode<synchronous>, transform_indices = @transform_7, window_bounds = array<i64: 1, 128>}, {transform_indices = @transform_8, window_bounds = array<i64: 1, 16, 128>}]} {
    %c0 = arith.constant 0 : index
    %c0_0 = arith.constant 0 : index
    %c0_1 = arith.constant 0 : index
    %0 = vector.load %arg1[%c0, %c0_0, %c0_1] : memref<1x16x128xf32, #tpu.memory_space<vmem>>, vector<1x16x128xf32>
    %1 = vector.shape_cast %0 : vector<1x16x128xf32> to vector<16x128xf32>
    %c0_2 = arith.constant 0 : index
    %c0_3 = arith.constant 0 : index
    %2 = vector.load %arg3[%c0_2, %c0_3] : memref<1x128xf32, #tpu.memory_space<vmem>>, vector<1x128xf32>
    %c0_4 = arith.constant 0 : index
    %c0_5 = arith.constant 0 : index
    %3 = vector.load %arg4[%c0_4, %c0_5] : memref<1x128xf32, #tpu.memory_space<vmem>>, vector<1x128xf32>
    %cst = arith.constant dense<0.000000e+00> : vector<16xf32>
    %4 = vector.multi_reduction <add>, %1, %cst [1] : vector<16x128xf32> to vector<16xf32>
    %5 = vector.shape_cast %4 : vector<16xf32> to vector<16x1xf32>
    %cst_6 = arith.constant 1.280000e+02 : f32
    %6 = vector.broadcast %cst_6 : f32 to vector<16x1xf32>
    %7 = arith.divf %5, %6 : vector<16x1xf32>
    %8 = vector.broadcast %7 : vector<16x1xf32> to vector<16x128xf32>
    %9 = arith.subf %1, %8 : vector<16x128xf32>
    %10 = arith.mulf %9, %9 : vector<16x128xf32>
    %cst_7 = arith.constant dense<0.000000e+00> : vector<16xf32>
    %11 = vector.multi_reduction <add>, %10, %cst_7 [1] : vector<16x128xf32> to vector<16xf32>
    %12 = vector.shape_cast %11 : vector<16xf32> to vector<16x1xf32>
    %cst_8 = arith.constant 1.280000e+02 : f32
    %13 = vector.broadcast %cst_8 : f32 to vector<16x1xf32>
    %14 = arith.divf %12, %13 : vector<16x1xf32>
    %15 = vector.broadcast %7 : vector<16x1xf32> to vector<16x128xf32>
    %16 = arith.subf %1, %15 : vector<16x128xf32>
    %cst_9 = arith.constant 9.99999996E-13 : f32
    %17 = vector.broadcast %cst_9 : f32 to vector<16x1xf32>
    %18 = arith.addf %14, %17 : vector<16x1xf32>
    %19 = math.rsqrt %18 : vector<16x1xf32>
    %20 = vector.broadcast %19 : vector<16x1xf32> to vector<16x128xf32>
    %21 = arith.mulf %16, %20 : vector<16x128xf32>
    %22 = vector.broadcast %2 : vector<1x128xf32> to vector<16x128xf32>
    %23 = arith.mulf %21, %22 : vector<16x128xf32>
    %24 = vector.broadcast %3 : vector<1x128xf32> to vector<16x128xf32>
    %25 = arith.addf %23, %24 : vector<16x128xf32>
    %26 = arith.truncf %25 : vector<16x128xf32> to vector<16x128xbf16>
    %c0_10 = arith.constant 0 : index
    %c0_11 = arith.constant 0 : index
    %27 = vector.load %arg5[%c0_10, %c0_11] : memref<128x384xbf16, #tpu.memory_space<vmem>>, vector<128x384xbf16>
    %cst_12 = arith.constant dense<0.000000e+00> : vector<16x384xf32>
    %28 = tpu.matmul %26, %27, %cst_12 {dimension_numbers = #tpu.dot_dimension_numbers<[1], [0], [0], [1], [0, 0, 1, 1], [], []>} : vector<16x128xbf16>, vector<128x384xbf16>, vector<16x384xf32> -> vector<16x384xf32>
    %c0_13 = arith.constant 0 : index
    %c0_14 = arith.constant 0 : index
    %29 = vector.load %arg6[%c0_13, %c0_14] : memref<1x384xf32, #tpu.memory_space<vmem>>, vector<1x384xf32>
    %30 = vector.broadcast %29 : vector<1x384xf32> to vector<16x384xf32>
    %31 = arith.addf %28, %30 : vector<16x384xf32>
    %32 = arith.truncf %31 : vector<16x384xf32> to vector<16x384xbf16>
    %c0_15 = arith.constant 0 : index
    %c0_16 = arith.constant 0 : index
    %c0_17 = arith.constant 0 : index
    %33 = vector.load %arg2[%c0_15, %c0_16, %c0_17] : memref<1x1x16xf32, #tpu.memory_space<vmem>>, vector<1x1x16xf32>
    %34 = vector.shape_cast %33 : vector<1x1x16xf32> to vector<1x16xf32>
    %cst_18 = arith.constant 0.000000e+00 : f32
    %35 = vector.broadcast %cst_18 : f32 to vector<1x16xf32>
    %36 = arith.cmpf ogt, %34, %35 : vector<1x16xf32>
    %37 = vector.extract_strided_slice %32 {offsets = [0, 0], sizes = [16, 32], strides = [1, 1]} : vector<16x384xbf16> to vector<16x32xbf16>
    %38 = vector.extract_strided_slice %32 {offsets = [0, 128], sizes = [16, 32], strides = [1, 1]} : vector<16x384xbf16> to vector<16x32xbf16>
    %39 = vector.extract_strided_slice %32 {offsets = [0, 256], sizes = [16, 32], strides = [1, 1]} : vector<16x384xbf16> to vector<16x32xbf16>
    %40 = tpu.transpose %38, [1, 0] : vector<16x32xbf16> -> vector<32x16xbf16>
    %cst_19 = arith.constant dense<0.000000e+00> : vector<16x16xf32>
    %41 = tpu.matmul %37, %40, %cst_19 {dimension_numbers = #tpu.dot_dimension_numbers<[1], [0], [0], [1], [0, 0, 1, 1], [], []>} : vector<16x32xbf16>, vector<32x16xbf16>, vector<16x16xf32> -> vector<16x16xf32>
    %cst_20 = arith.constant -1.000000e+30 : f32
    %42 = vector.shape_cast %36 : vector<1x16xi1> to vector<1x16xi1>
    %43 = vector.broadcast %42 : vector<1x16xi1> to vector<16x16xi1>
    %44 = vector.broadcast %cst_20 : f32 to vector<16x16xf32>
    %45 = arith.select %43, %41, %44 : vector<16x16xi1>, vector<16x16xf32>
    %cst_21 = arith.constant dense<0xFF800000> : vector<16xf32>
    %46 = vector.multi_reduction <maximumf>, %45, %cst_21 [1] : vector<16x16xf32> to vector<16xf32>
    %47 = vector.shape_cast %46 : vector<16xf32> to vector<16x1xf32>
    %48 = vector.broadcast %47 : vector<16x1xf32> to vector<16x16xf32>
    %49 = arith.subf %45, %48 : vector<16x16xf32>
    %50 = math.exp %49 : vector<16x16xf32>
    %cst_22 = arith.constant dense<0.000000e+00> : vector<16xf32>
    %51 = vector.multi_reduction <add>, %50, %cst_22 [1] : vector<16x16xf32> to vector<16xf32>
    %52 = vector.shape_cast %51 : vector<16xf32> to vector<16x1xf32>
    %53 = vector.broadcast %52 : vector<16x1xf32> to vector<16x16xf32>
    %54 = arith.divf %50, %53 : vector<16x16xf32>
    %cst_23 = arith.constant 0.000000e+00 : f32
    %55 = vector.shape_cast %36 : vector<1x16xi1> to vector<1x16xi1>
    %56 = vector.broadcast %55 : vector<1x16xi1> to vector<16x16xi1>
    %57 = vector.broadcast %cst_23 : f32 to vector<16x16xf32>
    %58 = arith.select %56, %54, %57 : vector<16x16xi1>, vector<16x16xf32>
    %59 = arith.truncf %58 : vector<16x16xf32> to vector<16x16xbf16>
    %cst_24 = arith.constant dense<0.000000e+00> : vector<16x32xf32>
    %60 = tpu.matmul %59, %39, %cst_24 {dimension_numbers = #tpu.dot_dimension_numbers<[1], [0], [0], [1], [0, 0, 1, 1], [], []>} : vector<16x16xbf16>, vector<16x32xbf16>, vector<16x32xf32> -> vector<16x32xf32>
    %61 = vector.extract_strided_slice %32 {offsets = [0, 32], sizes = [16, 32], strides = [1, 1]} : vector<16x384xbf16> to vector<16x32xbf16>
    %62 = vector.extract_strided_slice %32 {offsets = [0, 160], sizes = [16, 32], strides = [1, 1]} : vector<16x384xbf16> to vector<16x32xbf16>
    %63 = vector.extract_strided_slice %32 {offsets = [0, 288], sizes = [16, 32], strides = [1, 1]} : vector<16x384xbf16> to vector<16x32xbf16>
    %64 = tpu.transpose %62, [1, 0] : vector<16x32xbf16> -> vector<32x16xbf16>
    %cst_25 = arith.constant dense<0.000000e+00> : vector<16x16xf32>
    %65 = tpu.matmul %61, %64, %cst_25 {dimension_numbers = #tpu.dot_dimension_numbers<[1], [0], [0], [1], [0, 0, 1, 1], [], []>} : vector<16x32xbf16>, vector<32x16xbf16>, vector<16x16xf32> -> vector<16x16xf32>
    %cst_26 = arith.constant -1.000000e+30 : f32
    %66 = vector.shape_cast %36 : vector<1x16xi1> to vector<1x16xi1>
    %67 = vector.broadcast %66 : vector<1x16xi1> to vector<16x16xi1>
    %68 = vector.broadcast %cst_26 : f32 to vector<16x16xf32>
    %69 = arith.select %67, %65, %68 : vector<16x16xi1>, vector<16x16xf32>
    %cst_27 = arith.constant dense<0xFF800000> : vector<16xf32>
    %70 = vector.multi_reduction <maximumf>, %69, %cst_27 [1] : vector<16x16xf32> to vector<16xf32>
    %71 = vector.shape_cast %70 : vector<16xf32> to vector<16x1xf32>
    %72 = vector.broadcast %71 : vector<16x1xf32> to vector<16x16xf32>
    %73 = arith.subf %69, %72 : vector<16x16xf32>
    %74 = math.exp %73 : vector<16x16xf32>
    %cst_28 = arith.constant dense<0.000000e+00> : vector<16xf32>
    %75 = vector.multi_reduction <add>, %74, %cst_28 [1] : vector<16x16xf32> to vector<16xf32>
    %76 = vector.shape_cast %75 : vector<16xf32> to vector<16x1xf32>
    %77 = vector.broadcast %76 : vector<16x1xf32> to vector<16x16xf32>
    %78 = arith.divf %74, %77 : vector<16x16xf32>
    %cst_29 = arith.constant 0.000000e+00 : f32
    %79 = vector.shape_cast %36 : vector<1x16xi1> to vector<1x16xi1>
    %80 = vector.broadcast %79 : vector<1x16xi1> to vector<16x16xi1>
    %81 = vector.broadcast %cst_29 : f32 to vector<16x16xf32>
    %82 = arith.select %80, %78, %81 : vector<16x16xi1>, vector<16x16xf32>
    %83 = arith.truncf %82 : vector<16x16xf32> to vector<16x16xbf16>
    %cst_30 = arith.constant dense<0.000000e+00> : vector<16x32xf32>
    %84 = tpu.matmul %83, %63, %cst_30 {dimension_numbers = #tpu.dot_dimension_numbers<[1], [0], [0], [1], [0, 0, 1, 1], [], []>} : vector<16x16xbf16>, vector<16x32xbf16>, vector<16x32xf32> -> vector<16x32xf32>
    %85 = vector.extract_strided_slice %32 {offsets = [0, 64], sizes = [16, 32], strides = [1, 1]} : vector<16x384xbf16> to vector<16x32xbf16>
    %86 = vector.extract_strided_slice %32 {offsets = [0, 192], sizes = [16, 32], strides = [1, 1]} : vector<16x384xbf16> to vector<16x32xbf16>
    %87 = vector.extract_strided_slice %32 {offsets = [0, 320], sizes = [16, 32], strides = [1, 1]} : vector<16x384xbf16> to vector<16x32xbf16>
    %88 = tpu.transpose %86, [1, 0] : vector<16x32xbf16> -> vector<32x16xbf16>
    %cst_31 = arith.constant dense<0.000000e+00> : vector<16x16xf32>
    %89 = tpu.matmul %85, %88, %cst_31 {dimension_numbers = #tpu.dot_dimension_numbers<[1], [0], [0], [1], [0, 0, 1, 1], [], []>} : vector<16x32xbf16>, vector<32x16xbf16>, vector<16x16xf32> -> vector<16x16xf32>
    %cst_32 = arith.constant -1.000000e+30 : f32
    %90 = vector.shape_cast %36 : vector<1x16xi1> to vector<1x16xi1>
    %91 = vector.broadcast %90 : vector<1x16xi1> to vector<16x16xi1>
    %92 = vector.broadcast %cst_32 : f32 to vector<16x16xf32>
    %93 = arith.select %91, %89, %92 : vector<16x16xi1>, vector<16x16xf32>
    %cst_33 = arith.constant dense<0xFF800000> : vector<16xf32>
    %94 = vector.multi_reduction <maximumf>, %93, %cst_33 [1] : vector<16x16xf32> to vector<16xf32>
    %95 = vector.shape_cast %94 : vector<16xf32> to vector<16x1xf32>
    %96 = vector.broadcast %95 : vector<16x1xf32> to vector<16x16xf32>
    %97 = arith.subf %93, %96 : vector<16x16xf32>
    %98 = math.exp %97 : vector<16x16xf32>
    %cst_34 = arith.constant dense<0.000000e+00> : vector<16xf32>
    %99 = vector.multi_reduction <add>, %98, %cst_34 [1] : vector<16x16xf32> to vector<16xf32>
    %100 = vector.shape_cast %99 : vector<16xf32> to vector<16x1xf32>
    %101 = vector.broadcast %100 : vector<16x1xf32> to vector<16x16xf32>
    %102 = arith.divf %98, %101 : vector<16x16xf32>
    %cst_35 = arith.constant 0.000000e+00 : f32
    %103 = vector.shape_cast %36 : vector<1x16xi1> to vector<1x16xi1>
    %104 = vector.broadcast %103 : vector<1x16xi1> to vector<16x16xi1>
    %105 = vector.broadcast %cst_35 : f32 to vector<16x16xf32>
    %106 = arith.select %104, %102, %105 : vector<16x16xi1>, vector<16x16xf32>
    %107 = arith.truncf %106 : vector<16x16xf32> to vector<16x16xbf16>
    %cst_36 = arith.constant dense<0.000000e+00> : vector<16x32xf32>
    %108 = tpu.matmul %107, %87, %cst_36 {dimension_numbers = #tpu.dot_dimension_numbers<[1], [0], [0], [1], [0, 0, 1, 1], [], []>} : vector<16x16xbf16>, vector<16x32xbf16>, vector<16x32xf32> -> vector<16x32xf32>
    %109 = vector.extract_strided_slice %32 {offsets = [0, 96], sizes = [16, 32], strides = [1, 1]} : vector<16x384xbf16> to vector<16x32xbf16>
    %110 = vector.extract_strided_slice %32 {offsets = [0, 224], sizes = [16, 32], strides = [1, 1]} : vector<16x384xbf16> to vector<16x32xbf16>
    %111 = vector.extract_strided_slice %32 {offsets = [0, 352], sizes = [16, 32], strides = [1, 1]} : vector<16x384xbf16> to vector<16x32xbf16>
    %112 = tpu.transpose %110, [1, 0] : vector<16x32xbf16> -> vector<32x16xbf16>
    %cst_37 = arith.constant dense<0.000000e+00> : vector<16x16xf32>
    %113 = tpu.matmul %109, %112, %cst_37 {dimension_numbers = #tpu.dot_dimension_numbers<[1], [0], [0], [1], [0, 0, 1, 1], [], []>} : vector<16x32xbf16>, vector<32x16xbf16>, vector<16x16xf32> -> vector<16x16xf32>
    %cst_38 = arith.constant -1.000000e+30 : f32
    %114 = vector.shape_cast %36 : vector<1x16xi1> to vector<1x16xi1>
    %115 = vector.broadcast %114 : vector<1x16xi1> to vector<16x16xi1>
    %116 = vector.broadcast %cst_38 : f32 to vector<16x16xf32>
    %117 = arith.select %115, %113, %116 : vector<16x16xi1>, vector<16x16xf32>
    %cst_39 = arith.constant dense<0xFF800000> : vector<16xf32>
    %118 = vector.multi_reduction <maximumf>, %117, %cst_39 [1] : vector<16x16xf32> to vector<16xf32>
    %119 = vector.shape_cast %118 : vector<16xf32> to vector<16x1xf32>
    %120 = vector.broadcast %119 : vector<16x1xf32> to vector<16x16xf32>
    %121 = arith.subf %117, %120 : vector<16x16xf32>
    %122 = math.exp %121 : vector<16x16xf32>
    %cst_40 = arith.constant dense<0.000000e+00> : vector<16xf32>
    %123 = vector.multi_reduction <add>, %122, %cst_40 [1] : vector<16x16xf32> to vector<16xf32>
    %124 = vector.shape_cast %123 : vector<16xf32> to vector<16x1xf32>
    %125 = vector.broadcast %124 : vector<16x1xf32> to vector<16x16xf32>
    %126 = arith.divf %122, %125 : vector<16x16xf32>
    %cst_41 = arith.constant 0.000000e+00 : f32
    %127 = vector.shape_cast %36 : vector<1x16xi1> to vector<1x16xi1>
    %128 = vector.broadcast %127 : vector<1x16xi1> to vector<16x16xi1>
    %129 = vector.broadcast %cst_41 : f32 to vector<16x16xf32>
    %130 = arith.select %128, %126, %129 : vector<16x16xi1>, vector<16x16xf32>
    %131 = arith.truncf %130 : vector<16x16xf32> to vector<16x16xbf16>
    %cst_42 = arith.constant dense<0.000000e+00> : vector<16x32xf32>
    %132 = tpu.matmul %131, %111, %cst_42 {dimension_numbers = #tpu.dot_dimension_numbers<[1], [0], [0], [1], [0, 0, 1, 1], [], []>} : vector<16x16xbf16>, vector<16x32xbf16>, vector<16x32xf32> -> vector<16x32xf32>
    %133 = tpu.concatenate %60, %84, %108, %132 in 1 : vector<16x32xf32>, vector<16x32xf32>, vector<16x32xf32>, vector<16x32xf32> -> vector<16x128xf32>
    %134 = arith.truncf %133 : vector<16x128xf32> to vector<16x128xbf16>
    %c0_43 = arith.constant 0 : index
    %c0_44 = arith.constant 0 : index
    %135 = vector.load %arg7[%c0_43, %c0_44] : memref<128x128xbf16, #tpu.memory_space<vmem>>, vector<128x128xbf16>
    %cst_45 = arith.constant dense<0.000000e+00> : vector<16x128xf32>
    %136 = tpu.matmul %134, %135, %cst_45 {dimension_numbers = #tpu.dot_dimension_numbers<[1], [0], [0], [1], [0, 0, 1, 1], [], []>} : vector<16x128xbf16>, vector<128x128xbf16>, vector<16x128xf32> -> vector<16x128xf32>
    %c0_46 = arith.constant 0 : index
    %c0_47 = arith.constant 0 : index
    %137 = vector.load %arg8[%c0_46, %c0_47] : memref<1x128xf32, #tpu.memory_space<vmem>>, vector<1x128xf32>
    %138 = vector.broadcast %137 : vector<1x128xf32> to vector<16x128xf32>
    %139 = arith.addf %136, %138 : vector<16x128xf32>
    %140 = arith.addf %1, %139 : vector<16x128xf32>
    %c0_48 = arith.constant 0 : index
    %c0_49 = arith.constant 0 : index
    %c0_50 = arith.constant 0 : index
    %141 = vector.load %arg9[%c0_48, %c0_49, %c0_50] : memref<1x16x128xf32, #tpu.memory_space<vmem>>, vector<1x16x128xf32>
    %142 = vector.shape_cast %141 : vector<1x16x128xf32> to vector<16x128xf32>
    %143 = vector.shape_cast %140 : vector<16x128xf32> to vector<1x16x128xf32>
    tpu.vector_store %arg9[%c0_48, %c0_49, %c0_50], %143 {strides = array<i32>} : memref<1x16x128xf32, #tpu.memory_space<vmem>>, vector<1x16x128xf32>,
    return
  }
  func.func @transform_0(%arg0: i32) -> (i32, i32, i32) {
    %c0_i32 = arith.constant 0 : i32
    %c0_i32_0 = arith.constant 0 : i32
    %c0_i32_1 = arith.constant 0 : i32
    return %arg0, %c0_i32, %c0_i32_0 : i32, i32, i32
  }
  func.func @transform_1(%arg0: i32) -> (i32, i32, i32) {
    %c0_i32 = arith.constant 0 : i32
    %c0_i32_0 = arith.constant 0 : i32
    %c0_i32_1 = arith.constant 0 : i32
    return %arg0, %c0_i32, %c0_i32_0 : i32, i32, i32
  }
  func.func @transform_2(%arg0: i32) -> (i32, i32) {
    %c0_i32 = arith.constant 0 : i32
    %c0_i32_0 = arith.constant 0 : i32
    %c0_i32_1 = arith.constant 0 : i32
    return %c0_i32, %c0_i32_0 : i32, i32
  }
  func.func @transform_3(%arg0: i32) -> (i32, i32) {
    %c0_i32 = arith.constant 0 : i32
    %c0_i32_0 = arith.constant 0 : i32
    %c0_i32_1 = arith.constant 0 : i32
    return %c0_i32, %c0_i32_0 : i32, i32
  }
  func.func @transform_4(%arg0: i32) -> (i32, i32) {
    %c0_i32 = arith.constant 0 : i32
    %c0_i32_0 = arith.constant 0 : i32
    %c0_i32_1 = arith.constant 0 : i32
    return %c0_i32, %c0_i32_0 : i32, i32
  }
  func.func @transform_5(%arg0: i32) -> (i32, i32) {
    %c0_i32 = arith.constant 0 : i32
    %c0_i32_0 = arith.constant 0 : i32
    %c0_i32_1 = arith.constant 0 : i32
    return %c0_i32, %c0_i32_0 : i32, i32
  }
  func.func @transform_6(%arg0: i32) -> (i32, i32) {
    %c0_i32 = arith.constant 0 : i32
    %c0_i32_0 = arith.constant 0 : i32
    %c0_i32_1 = arith.constant 0 : i32
    return %c0_i32, %c0_i32_0 : i32, i32
  }
  func.func @transform_7(%arg0: i32) -> (i32, i32) {
    %c0_i32 = arith.constant 0 : i32
    %c0_i32_0 = arith.constant 0 : i32
    %c0_i32_1 = arith.constant 0 : i32
    return %c0_i32, %c0_i32_0 : i32, i32
  }
  func.func @transform_8(%arg0: i32) -> (i32, i32, i32) {
    %c0_i32 = arith.constant 0 : i32
    %c0_i32_0 = arith.constant 0 : i32
    %c0_i32_1 = arith.constant 0 : i32
    return %arg0, %c0_i32, %c0_i32_0 : i32, i32, i32
  }
}

module attributes {stable_mosaic.version = 11 : i64} {
  func.func @_conv_kernel(%arg0: i32, %arg1: memref<1x16x128xf32, #tpu.memory_space<vmem>>, %arg2: memref<1x128xf32, #tpu.memory_space<vmem>>, %arg3: memref<1x128xf32, #tpu.memory_space<vmem>>, %arg4: memref<128x256xbf16, #tpu.memory_space<vmem>>, %arg5: memref<1x256xf32, #tpu.memory_space<vmem>>, %arg6: memref<7x128xf32, #tpu.memory_space<vmem>>, %arg7: memref<1x128xf32, #tpu.memory_space<vmem>>, %arg8: memref<1x128xf32, #tpu.memory_space<vmem>>, %arg9: memref<1x128xf32, #tpu.memory_space<vmem>>, %arg10: memref<1x128xf32, #tpu.memory_space<vmem>>, %arg11: memref<1x128xf32, #tpu.memory_space<vmem>>, %arg12: memref<128x128xbf16, #tpu.memory_space<vmem>>, %arg13: memref<1x128xf32, #tpu.memory_space<vmem>>, %arg14: memref<1x16x128xf32, #tpu.memory_space<vmem>>) attributes {dimension_semantics = [#tpu.dimension_semantics<parallel>], iteration_bounds = array<i64: 2>, scalar_prefetch = 0 : i64, scratch_operands = 0 : i64, tpu.core_type = #tpu.core_type<tc>, window_params = [{transform_indices = @transform_0, window_bounds = array<i64: 1, 16, 128>}, {pipeline_mode = #tpu.pipeline_mode<synchronous>, transform_indices = @transform_1, window_bounds = array<i64: 1, 128>}, {pipeline_mode = #tpu.pipeline_mode<synchronous>, transform_indices = @transform_2, window_bounds = array<i64: 1, 128>}, {pipeline_mode = #tpu.pipeline_mode<synchronous>, transform_indices = @transform_3, window_bounds = array<i64: 128, 256>}, {pipeline_mode = #tpu.pipeline_mode<synchronous>, transform_indices = @transform_4, window_bounds = array<i64: 1, 256>}, {pipeline_mode = #tpu.pipeline_mode<synchronous>, transform_indices = @transform_5, window_bounds = array<i64: 7, 128>}, {pipeline_mode = #tpu.pipeline_mode<synchronous>, transform_indices = @transform_6, window_bounds = array<i64: 1, 128>}, {pipeline_mode = #tpu.pipeline_mode<synchronous>, transform_indices = @transform_7, window_bounds = array<i64: 1, 128>}, {pipeline_mode = #tpu.pipeline_mode<synchronous>, transform_indices = @transform_8, window_bounds = array<i64: 1, 128>}, {pipeline_mode = #tpu.pipeline_mode<synchronous>, transform_indices = @transform_9, window_bounds = array<i64: 1, 128>}, {pipeline_mode = #tpu.pipeline_mode<synchronous>, transform_indices = @transform_10, window_bounds = array<i64: 1, 128>}, {pipeline_mode = #tpu.pipeline_mode<synchronous>, transform_indices = @transform_11, window_bounds = array<i64: 128, 128>}, {pipeline_mode = #tpu.pipeline_mode<synchronous>, transform_indices = @transform_12, window_bounds = array<i64: 1, 128>}, {transform_indices = @transform_13, window_bounds = array<i64: 1, 16, 128>}]} {
    %c0 = arith.constant 0 : index
    %c0_0 = arith.constant 0 : index
    %c0_1 = arith.constant 0 : index
    %0 = vector.load %arg1[%c0, %c0_0, %c0_1] : memref<1x16x128xf32, #tpu.memory_space<vmem>>, vector<1x16x128xf32>
    %1 = vector.shape_cast %0 : vector<1x16x128xf32> to vector<16x128xf32>
    %c0_2 = arith.constant 0 : index
    %c0_3 = arith.constant 0 : index
    %2 = vector.load %arg2[%c0_2, %c0_3] : memref<1x128xf32, #tpu.memory_space<vmem>>, vector<1x128xf32>
    %c0_4 = arith.constant 0 : index
    %c0_5 = arith.constant 0 : index
    %3 = vector.load %arg3[%c0_4, %c0_5] : memref<1x128xf32, #tpu.memory_space<vmem>>, vector<1x128xf32>
    %cst = arith.constant dense<0.000000e+00> : vector<16xf32>
    %4 = vector.multi_reduction <add>, %1, %cst [1] : vector<16x128xf32> to vector<16xf32>
    %5 = vector.shape_cast %4 : vector<16xf32> to vector<16x1xf32>
    %cst_6 = arith.constant 1.280000e+02 : f32
    %6 = vector.broadcast %cst_6 : f32 to vector<16x1xf32>
    %7 = arith.divf %5, %6 : vector<16x1xf32>
    %8 = vector.broadcast %7 : vector<16x1xf32> to vector<16x128xf32>
    %9 = arith.subf %1, %8 : vector<16x128xf32>
    %10 = arith.mulf %9, %9 : vector<16x128xf32>
    %cst_7 = arith.constant dense<0.000000e+00> : vector<16xf32>
    %11 = vector.multi_reduction <add>, %10, %cst_7 [1] : vector<16x128xf32> to vector<16xf32>
    %12 = vector.shape_cast %11 : vector<16xf32> to vector<16x1xf32>
    %cst_8 = arith.constant 1.280000e+02 : f32
    %13 = vector.broadcast %cst_8 : f32 to vector<16x1xf32>
    %14 = arith.divf %12, %13 : vector<16x1xf32>
    %15 = vector.broadcast %7 : vector<16x1xf32> to vector<16x128xf32>
    %16 = arith.subf %1, %15 : vector<16x128xf32>
    %cst_9 = arith.constant 9.99999996E-13 : f32
    %17 = vector.broadcast %cst_9 : f32 to vector<16x1xf32>
    %18 = arith.addf %14, %17 : vector<16x1xf32>
    %19 = math.rsqrt %18 : vector<16x1xf32>
    %20 = vector.broadcast %19 : vector<16x1xf32> to vector<16x128xf32>
    %21 = arith.mulf %16, %20 : vector<16x128xf32>
    %22 = vector.broadcast %2 : vector<1x128xf32> to vector<16x128xf32>
    %23 = arith.mulf %21, %22 : vector<16x128xf32>
    %24 = vector.broadcast %3 : vector<1x128xf32> to vector<16x128xf32>
    %25 = arith.addf %23, %24 : vector<16x128xf32>
    %26 = arith.truncf %25 : vector<16x128xf32> to vector<16x128xbf16>
    %c0_10 = arith.constant 0 : index
    %c0_11 = arith.constant 0 : index
    %27 = vector.load %arg4[%c0_10, %c0_11] : memref<128x256xbf16, #tpu.memory_space<vmem>>, vector<128x256xbf16>
    %cst_12 = arith.constant dense<0.000000e+00> : vector<16x256xf32>
    %28 = tpu.matmul %26, %27, %cst_12 {dimension_numbers = #tpu.dot_dimension_numbers<[1], [0], [0], [1], [0, 0, 1, 1], [], []>} : vector<16x128xbf16>, vector<128x256xbf16>, vector<16x256xf32> -> vector<16x256xf32>
    %c0_13 = arith.constant 0 : index
    %c0_14 = arith.constant 0 : index
    %29 = vector.load %arg5[%c0_13, %c0_14] : memref<1x256xf32, #tpu.memory_space<vmem>>, vector<1x256xf32>
    %30 = vector.broadcast %29 : vector<1x256xf32> to vector<16x256xf32>
    %31 = arith.addf %28, %30 : vector<16x256xf32>
    %32 = vector.extract_strided_slice %31 {offsets = [0, 0], sizes = [16, 128], strides = [1, 1]} : vector<16x256xf32> to vector<16x128xf32>
    %33 = vector.extract_strided_slice %31 {offsets = [0, 128], sizes = [16, 128], strides = [1, 1]} : vector<16x256xf32> to vector<16x128xf32>
    %34 = arith.negf %33 : vector<16x128xf32>
    %35 = math.exp %34 : vector<16x128xf32>
    %cst_15 = arith.constant 1.000000e+00 : f32
    %36 = vector.broadcast %cst_15 : f32 to vector<16x128xf32>
    %37 = arith.addf %36, %35 : vector<16x128xf32>
    %38 = arith.divf %36, %37 : vector<16x128xf32>
    %39 = arith.mulf %32, %38 : vector<16x128xf32>
    %40 = tpu.iota {dimensions = array<i32: 0>} : vector<16x1xi32>
    %c0_16 = arith.constant 0 : index
    %c0_17 = arith.constant 0 : index
    %41 = vector.load %arg6[%c0_16, %c0_17] : memref<7x128xf32, #tpu.memory_space<vmem>>, vector<7x128xf32>
    %cst_18 = arith.constant 0.000000e+00 : f32
    %42 = vector.broadcast %cst_18 : f32 to vector<16x128xf32>
    %c3_i32 = arith.constant 3 : i32
    %43 = tpu.dynamic_rotate %39 by %c3_i32 dim 0 : vector<16x128xf32>, i32 -> vector<16x128xf32>
    %c-3_i32 = arith.constant -3 : i32
    %44 = vector.broadcast %c-3_i32 : i32 to vector<16x1xi32>
    %45 = arith.addi %40, %44 : vector<16x1xi32>
    %c0_i32 = arith.constant 0 : i32
    %46 = vector.broadcast %c0_i32 : i32 to vector<16x1xi32>
    %47 = arith.cmpi sge, %45, %46 : vector<16x1xi32>
    %c-3_i32_19 = arith.constant -3 : i32
    %48 = vector.broadcast %c-3_i32_19 : i32 to vector<16x1xi32>
    %49 = arith.addi %40, %48 : vector<16x1xi32>
    %c16_i32 = arith.constant 16 : i32
    %50 = vector.broadcast %c16_i32 : i32 to vector<16x1xi32>
    %51 = arith.cmpi slt, %49, %50 : vector<16x1xi32>
    %52 = arith.andi %47, %51 : vector<16x1xi1>
    %cst_20 = arith.constant 0.000000e+00 : f32
    %53 = vector.shape_cast %52 : vector<16x1xi1> to vector<16x1xi1>
    %54 = vector.broadcast %53 : vector<16x1xi1> to vector<16x128xi1>
    %55 = vector.broadcast %cst_20 : f32 to vector<16x128xf32>
    %56 = arith.select %54, %43, %55 : vector<16x128xi1>, vector<16x128xf32>
    %57 = vector.extract_strided_slice %41 {offsets = [0, 0], sizes = [1, 128], strides = [1, 1]} : vector<7x128xf32> to vector<1x128xf32>
    %58 = vector.broadcast %57 : vector<1x128xf32> to vector<16x128xf32>
    %59 = arith.mulf %56, %58 : vector<16x128xf32>
    %60 = arith.addf %42, %59 : vector<16x128xf32>
    %c2_i32 = arith.constant 2 : i32
    %61 = tpu.dynamic_rotate %39 by %c2_i32 dim 0 : vector<16x128xf32>, i32 -> vector<16x128xf32>
    %c-2_i32 = arith.constant -2 : i32
    %62 = vector.broadcast %c-2_i32 : i32 to vector<16x1xi32>
    %63 = arith.addi %40, %62 : vector<16x1xi32>
    %c0_i32_21 = arith.constant 0 : i32
    %64 = vector.broadcast %c0_i32_21 : i32 to vector<16x1xi32>
    %65 = arith.cmpi sge, %63, %64 : vector<16x1xi32>
    %c-2_i32_22 = arith.constant -2 : i32
    %66 = vector.broadcast %c-2_i32_22 : i32 to vector<16x1xi32>
    %67 = arith.addi %40, %66 : vector<16x1xi32>
    %c16_i32_23 = arith.constant 16 : i32
    %68 = vector.broadcast %c16_i32_23 : i32 to vector<16x1xi32>
    %69 = arith.cmpi slt, %67, %68 : vector<16x1xi32>
    %70 = arith.andi %65, %69 : vector<16x1xi1>
    %cst_24 = arith.constant 0.000000e+00 : f32
    %71 = vector.shape_cast %70 : vector<16x1xi1> to vector<16x1xi1>
    %72 = vector.broadcast %71 : vector<16x1xi1> to vector<16x128xi1>
    %73 = vector.broadcast %cst_24 : f32 to vector<16x128xf32>
    %74 = arith.select %72, %61, %73 : vector<16x128xi1>, vector<16x128xf32>
    %75 = vector.extract_strided_slice %41 {offsets = [1, 0], sizes = [1, 128], strides = [1, 1]} : vector<7x128xf32> to vector<1x128xf32>
    %76 = vector.broadcast %75 : vector<1x128xf32> to vector<16x128xf32>
    %77 = arith.mulf %74, %76 : vector<16x128xf32>
    %78 = arith.addf %60, %77 : vector<16x128xf32>
    %c1_i32 = arith.constant 1 : i32
    %79 = tpu.dynamic_rotate %39 by %c1_i32 dim 0 : vector<16x128xf32>, i32 -> vector<16x128xf32>
    %c-1_i32 = arith.constant -1 : i32
    %80 = vector.broadcast %c-1_i32 : i32 to vector<16x1xi32>
    %81 = arith.addi %40, %80 : vector<16x1xi32>
    %c0_i32_25 = arith.constant 0 : i32
    %82 = vector.broadcast %c0_i32_25 : i32 to vector<16x1xi32>
    %83 = arith.cmpi sge, %81, %82 : vector<16x1xi32>
    %c-1_i32_26 = arith.constant -1 : i32
    %84 = vector.broadcast %c-1_i32_26 : i32 to vector<16x1xi32>
    %85 = arith.addi %40, %84 : vector<16x1xi32>
    %c16_i32_27 = arith.constant 16 : i32
    %86 = vector.broadcast %c16_i32_27 : i32 to vector<16x1xi32>
    %87 = arith.cmpi slt, %85, %86 : vector<16x1xi32>
    %88 = arith.andi %83, %87 : vector<16x1xi1>
    %cst_28 = arith.constant 0.000000e+00 : f32
    %89 = vector.shape_cast %88 : vector<16x1xi1> to vector<16x1xi1>
    %90 = vector.broadcast %89 : vector<16x1xi1> to vector<16x128xi1>
    %91 = vector.broadcast %cst_28 : f32 to vector<16x128xf32>
    %92 = arith.select %90, %79, %91 : vector<16x128xi1>, vector<16x128xf32>
    %93 = vector.extract_strided_slice %41 {offsets = [2, 0], sizes = [1, 128], strides = [1, 1]} : vector<7x128xf32> to vector<1x128xf32>
    %94 = vector.broadcast %93 : vector<1x128xf32> to vector<16x128xf32>
    %95 = arith.mulf %92, %94 : vector<16x128xf32>
    %96 = arith.addf %78, %95 : vector<16x128xf32>
    %c0_i32_29 = arith.constant 0 : i32
    %97 = tpu.dynamic_rotate %39 by %c0_i32_29 dim 0 : vector<16x128xf32>, i32 -> vector<16x128xf32>
    %c0_i32_30 = arith.constant 0 : i32
    %98 = vector.broadcast %c0_i32_30 : i32 to vector<16x1xi32>
    %99 = arith.addi %40, %98 : vector<16x1xi32>
    %c0_i32_31 = arith.constant 0 : i32
    %100 = vector.broadcast %c0_i32_31 : i32 to vector<16x1xi32>
    %101 = arith.cmpi sge, %99, %100 : vector<16x1xi32>
    %c0_i32_32 = arith.constant 0 : i32
    %102 = vector.broadcast %c0_i32_32 : i32 to vector<16x1xi32>
    %103 = arith.addi %40, %102 : vector<16x1xi32>
    %c16_i32_33 = arith.constant 16 : i32
    %104 = vector.broadcast %c16_i32_33 : i32 to vector<16x1xi32>
    %105 = arith.cmpi slt, %103, %104 : vector<16x1xi32>
    %106 = arith.andi %101, %105 : vector<16x1xi1>
    %cst_34 = arith.constant 0.000000e+00 : f32
    %107 = vector.shape_cast %106 : vector<16x1xi1> to vector<16x1xi1>
    %108 = vector.broadcast %107 : vector<16x1xi1> to vector<16x128xi1>
    %109 = vector.broadcast %cst_34 : f32 to vector<16x128xf32>
    %110 = arith.select %108, %97, %109 : vector<16x128xi1>, vector<16x128xf32>
    %111 = vector.extract_strided_slice %41 {offsets = [3, 0], sizes = [1, 128], strides = [1, 1]} : vector<7x128xf32> to vector<1x128xf32>
    %112 = vector.broadcast %111 : vector<1x128xf32> to vector<16x128xf32>
    %113 = arith.mulf %110, %112 : vector<16x128xf32>
    %114 = arith.addf %96, %113 : vector<16x128xf32>
    %c15_i32 = arith.constant 15 : i32
    %115 = tpu.dynamic_rotate %39 by %c15_i32 dim 0 : vector<16x128xf32>, i32 -> vector<16x128xf32>
    %c1_i32_35 = arith.constant 1 : i32
    %116 = vector.broadcast %c1_i32_35 : i32 to vector<16x1xi32>
    %117 = arith.addi %40, %116 : vector<16x1xi32>
    %c0_i32_36 = arith.constant 0 : i32
    %118 = vector.broadcast %c0_i32_36 : i32 to vector<16x1xi32>
    %119 = arith.cmpi sge, %117, %118 : vector<16x1xi32>
    %c1_i32_37 = arith.constant 1 : i32
    %120 = vector.broadcast %c1_i32_37 : i32 to vector<16x1xi32>
    %121 = arith.addi %40, %120 : vector<16x1xi32>
    %c16_i32_38 = arith.constant 16 : i32
    %122 = vector.broadcast %c16_i32_38 : i32 to vector<16x1xi32>
    %123 = arith.cmpi slt, %121, %122 : vector<16x1xi32>
    %124 = arith.andi %119, %123 : vector<16x1xi1>
    %cst_39 = arith.constant 0.000000e+00 : f32
    %125 = vector.shape_cast %124 : vector<16x1xi1> to vector<16x1xi1>
    %126 = vector.broadcast %125 : vector<16x1xi1> to vector<16x128xi1>
    %127 = vector.broadcast %cst_39 : f32 to vector<16x128xf32>
    %128 = arith.select %126, %115, %127 : vector<16x128xi1>, vector<16x128xf32>
    %129 = vector.extract_strided_slice %41 {offsets = [4, 0], sizes = [1, 128], strides = [1, 1]} : vector<7x128xf32> to vector<1x128xf32>
    %130 = vector.broadcast %129 : vector<1x128xf32> to vector<16x128xf32>
    %131 = arith.mulf %128, %130 : vector<16x128xf32>
    %132 = arith.addf %114, %131 : vector<16x128xf32>
    %c14_i32 = arith.constant 14 : i32
    %133 = tpu.dynamic_rotate %39 by %c14_i32 dim 0 : vector<16x128xf32>, i32 -> vector<16x128xf32>
    %c2_i32_40 = arith.constant 2 : i32
    %134 = vector.broadcast %c2_i32_40 : i32 to vector<16x1xi32>
    %135 = arith.addi %40, %134 : vector<16x1xi32>
    %c0_i32_41 = arith.constant 0 : i32
    %136 = vector.broadcast %c0_i32_41 : i32 to vector<16x1xi32>
    %137 = arith.cmpi sge, %135, %136 : vector<16x1xi32>
    %c2_i32_42 = arith.constant 2 : i32
    %138 = vector.broadcast %c2_i32_42 : i32 to vector<16x1xi32>
    %139 = arith.addi %40, %138 : vector<16x1xi32>
    %c16_i32_43 = arith.constant 16 : i32
    %140 = vector.broadcast %c16_i32_43 : i32 to vector<16x1xi32>
    %141 = arith.cmpi slt, %139, %140 : vector<16x1xi32>
    %142 = arith.andi %137, %141 : vector<16x1xi1>
    %cst_44 = arith.constant 0.000000e+00 : f32
    %143 = vector.shape_cast %142 : vector<16x1xi1> to vector<16x1xi1>
    %144 = vector.broadcast %143 : vector<16x1xi1> to vector<16x128xi1>
    %145 = vector.broadcast %cst_44 : f32 to vector<16x128xf32>
    %146 = arith.select %144, %133, %145 : vector<16x128xi1>, vector<16x128xf32>
    %147 = vector.extract_strided_slice %41 {offsets = [5, 0], sizes = [1, 128], strides = [1, 1]} : vector<7x128xf32> to vector<1x128xf32>
    %148 = vector.broadcast %147 : vector<1x128xf32> to vector<16x128xf32>
    %149 = arith.mulf %146, %148 : vector<16x128xf32>
    %150 = arith.addf %132, %149 : vector<16x128xf32>
    %c13_i32 = arith.constant 13 : i32
    %151 = tpu.dynamic_rotate %39 by %c13_i32 dim 0 : vector<16x128xf32>, i32 -> vector<16x128xf32>
    %c3_i32_45 = arith.constant 3 : i32
    %152 = vector.broadcast %c3_i32_45 : i32 to vector<16x1xi32>
    %153 = arith.addi %40, %152 : vector<16x1xi32>
    %c0_i32_46 = arith.constant 0 : i32
    %154 = vector.broadcast %c0_i32_46 : i32 to vector<16x1xi32>
    %155 = arith.cmpi sge, %153, %154 : vector<16x1xi32>
    %c3_i32_47 = arith.constant 3 : i32
    %156 = vector.broadcast %c3_i32_47 : i32 to vector<16x1xi32>
    %157 = arith.addi %40, %156 : vector<16x1xi32>
    %c16_i32_48 = arith.constant 16 : i32
    %158 = vector.broadcast %c16_i32_48 : i32 to vector<16x1xi32>
    %159 = arith.cmpi slt, %157, %158 : vector<16x1xi32>
    %160 = arith.andi %155, %159 : vector<16x1xi1>
    %cst_49 = arith.constant 0.000000e+00 : f32
    %161 = vector.shape_cast %160 : vector<16x1xi1> to vector<16x1xi1>
    %162 = vector.broadcast %161 : vector<16x1xi1> to vector<16x128xi1>
    %163 = vector.broadcast %cst_49 : f32 to vector<16x128xf32>
    %164 = arith.select %162, %151, %163 : vector<16x128xi1>, vector<16x128xf32>
    %165 = vector.extract_strided_slice %41 {offsets = [6, 0], sizes = [1, 128], strides = [1, 1]} : vector<7x128xf32> to vector<1x128xf32>
    %166 = vector.broadcast %165 : vector<1x128xf32> to vector<16x128xf32>
    %167 = arith.mulf %164, %166 : vector<16x128xf32>
    %168 = arith.addf %150, %167 : vector<16x128xf32>
    %c0_50 = arith.constant 0 : index
    %c0_51 = arith.constant 0 : index
    %169 = vector.load %arg7[%c0_50, %c0_51] : memref<1x128xf32, #tpu.memory_space<vmem>>, vector<1x128xf32>
    %170 = vector.broadcast %169 : vector<1x128xf32> to vector<16x128xf32>
    %171 = arith.addf %168, %170 : vector<16x128xf32>
    %c0_52 = arith.constant 0 : index
    %c0_53 = arith.constant 0 : index
    %172 = vector.load %arg10[%c0_52, %c0_53] : memref<1x128xf32, #tpu.memory_space<vmem>>, vector<1x128xf32>
    %173 = vector.broadcast %172 : vector<1x128xf32> to vector<16x128xf32>
    %174 = arith.subf %171, %173 : vector<16x128xf32>
    %c0_54 = arith.constant 0 : index
    %c0_55 = arith.constant 0 : index
    %175 = vector.load %arg11[%c0_54, %c0_55] : memref<1x128xf32, #tpu.memory_space<vmem>>, vector<1x128xf32>
    %cst_56 = arith.constant 9.99999974E-6 : f32
    %176 = vector.broadcast %cst_56 : f32 to vector<1x128xf32>
    %177 = arith.addf %175, %176 : vector<1x128xf32>
    %178 = math.rsqrt %177 : vector<1x128xf32>
    %179 = vector.broadcast %178 : vector<1x128xf32> to vector<16x128xf32>
    %180 = arith.mulf %174, %179 : vector<16x128xf32>
    %c0_57 = arith.constant 0 : index
    %c0_58 = arith.constant 0 : index
    %181 = vector.load %arg8[%c0_57, %c0_58] : memref<1x128xf32, #tpu.memory_space<vmem>>, vector<1x128xf32>
    %182 = vector.broadcast %181 : vector<1x128xf32> to vector<16x128xf32>
    %183 = arith.mulf %180, %182 : vector<16x128xf32>
    %c0_59 = arith.constant 0 : index
    %c0_60 = arith.constant 0 : index
    %184 = vector.load %arg9[%c0_59, %c0_60] : memref<1x128xf32, #tpu.memory_space<vmem>>, vector<1x128xf32>
    %185 = vector.broadcast %184 : vector<1x128xf32> to vector<16x128xf32>
    %186 = arith.addf %183, %185 : vector<16x128xf32>
    %187 = arith.negf %186 : vector<16x128xf32>
    %188 = math.exp %187 : vector<16x128xf32>
    %cst_61 = arith.constant 1.000000e+00 : f32
    %189 = vector.broadcast %cst_61 : f32 to vector<16x128xf32>
    %190 = arith.addf %189, %188 : vector<16x128xf32>
    %191 = arith.divf %189, %190 : vector<16x128xf32>
    %192 = arith.mulf %186, %191 : vector<16x128xf32>
    %193 = arith.truncf %192 : vector<16x128xf32> to vector<16x128xbf16>
    %c0_62 = arith.constant 0 : index
    %c0_63 = arith.constant 0 : index
    %194 = vector.load %arg12[%c0_62, %c0_63] : memref<128x128xbf16, #tpu.memory_space<vmem>>, vector<128x128xbf16>
    %cst_64 = arith.constant dense<0.000000e+00> : vector<16x128xf32>
    %195 = tpu.matmul %193, %194, %cst_64 {dimension_numbers = #tpu.dot_dimension_numbers<[1], [0], [0], [1], [0, 0, 1, 1], [], []>} : vector<16x128xbf16>, vector<128x128xbf16>, vector<16x128xf32> -> vector<16x128xf32>
    %c0_65 = arith.constant 0 : index
    %c0_66 = arith.constant 0 : index
    %196 = vector.load %arg13[%c0_65, %c0_66] : memref<1x128xf32, #tpu.memory_space<vmem>>, vector<1x128xf32>
    %197 = vector.broadcast %196 : vector<1x128xf32> to vector<16x128xf32>
    %198 = arith.addf %195, %197 : vector<16x128xf32>
    %199 = arith.addf %1, %198 : vector<16x128xf32>
    %c0_67 = arith.constant 0 : index
    %c0_68 = arith.constant 0 : index
    %c0_69 = arith.constant 0 : index
    %200 = vector.load %arg14[%c0_67, %c0_68, %c0_69] : memref<1x16x128xf32, #tpu.memory_space<vmem>>, vector<1x16x128xf32>
    %201 = vector.shape_cast %200 : vector<1x16x128xf32> to vector<16x128xf32>
    %202 = vector.shape_cast %199 : vector<16x128xf32> to vector<1x16x128xf32>
    tpu.vector_store %arg14[%c0_67, %c0_68, %c0_69], %202 {strides = array<i32>} : memref<1x16x128xf32, #tpu.memory_space<vmem>>, vector<1x16x128xf32>,
    return
  }
  func.func @transform_0(%arg0: i32) -> (i32, i32, i32) {
    %c0_i32 = arith.constant 0 : i32
    %c0_i32_0 = arith.constant 0 : i32
    %c0_i32_1 = arith.constant 0 : i32
    return %arg0, %c0_i32, %c0_i32_0 : i32, i32, i32
  }
  func.func @transform_1(%arg0: i32) -> (i32, i32) {
    %c0_i32 = arith.constant 0 : i32
    %c0_i32_0 = arith.constant 0 : i32
    %c0_i32_1 = arith.constant 0 : i32
    return %c0_i32, %c0_i32_0 : i32, i32
  }
  func.func @transform_2(%arg0: i32) -> (i32, i32) {
    %c0_i32 = arith.constant 0 : i32
    %c0_i32_0 = arith.constant 0 : i32
    %c0_i32_1 = arith.constant 0 : i32
    return %c0_i32, %c0_i32_0 : i32, i32
  }
  func.func @transform_3(%arg0: i32) -> (i32, i32) {
    %c0_i32 = arith.constant 0 : i32
    %c0_i32_0 = arith.constant 0 : i32
    %c0_i32_1 = arith.constant 0 : i32
    return %c0_i32, %c0_i32_0 : i32, i32
  }
  func.func @transform_4(%arg0: i32) -> (i32, i32) {
    %c0_i32 = arith.constant 0 : i32
    %c0_i32_0 = arith.constant 0 : i32
    %c0_i32_1 = arith.constant 0 : i32
    return %c0_i32, %c0_i32_0 : i32, i32
  }
  func.func @transform_5(%arg0: i32) -> (i32, i32) {
    %c0_i32 = arith.constant 0 : i32
    %c0_i32_0 = arith.constant 0 : i32
    %c0_i32_1 = arith.constant 0 : i32
    return %c0_i32, %c0_i32_0 : i32, i32
  }
  func.func @transform_6(%arg0: i32) -> (i32, i32) {
    %c0_i32 = arith.constant 0 : i32
    %c0_i32_0 = arith.constant 0 : i32
    %c0_i32_1 = arith.constant 0 : i32
    return %c0_i32, %c0_i32_0 : i32, i32
  }
  func.func @transform_7(%arg0: i32) -> (i32, i32) {
    %c0_i32 = arith.constant 0 : i32
    %c0_i32_0 = arith.constant 0 : i32
    %c0_i32_1 = arith.constant 0 : i32
    return %c0_i32, %c0_i32_0 : i32, i32
  }
  func.func @transform_8(%arg0: i32) -> (i32, i32) {
    %c0_i32 = arith.constant 0 : i32
    %c0_i32_0 = arith.constant 0 : i32
    %c0_i32_1 = arith.constant 0 : i32
    return %c0_i32, %c0_i32_0 : i32, i32
  }
  func.func @transform_9(%arg0: i32) -> (i32, i32) {
    %c0_i32 = arith.constant 0 : i32
    %c0_i32_0 = arith.constant 0 : i32
    %c0_i32_1 = arith.constant 0 : i32
    return %c0_i32, %c0_i32_0 : i32, i32
  }
  func.func @transform_10(%arg0: i32) -> (i32, i32) {
    %c0_i32 = arith.constant 0 : i32
    %c0_i32_0 = arith.constant 0 : i32
    %c0_i32_1 = arith.constant 0 : i32
    return %c0_i32, %c0_i32_0 : i32, i32
  }
  func.func @transform_11(%arg0: i32) -> (i32, i32) {
    %c0_i32 = arith.constant 0 : i32
    %c0_i32_0 = arith.constant 0 : i32
    %c0_i32_1 = arith.constant 0 : i32
    return %c0_i32, %c0_i32_0 : i32, i32
  }
  func.func @transform_12(%arg0: i32) -> (i32, i32) {
    %c0_i32 = arith.constant 0 : i32
    %c0_i32_0 = arith.constant 0 : i32
    %c0_i32_1 = arith.constant 0 : i32
    return %c0_i32, %c0_i32_0 : i32, i32
  }
  func.func @transform_13(%arg0: i32) -> (i32, i32, i32) {
    %c0_i32 = arith.constant 0 : i32
    %c0_i32_0 = arith.constant 0 : i32
    %c0_i32_1 = arith.constant 0 : i32
    return %arg0, %c0_i32, %c0_i32_0 : i32, i32, i32
  }
}

module attributes {stable_mosaic.version = 11 : i64} {
  func.func @_ffn_final_kernel(%arg0: i32, %arg1: memref<32x128xf32, #tpu.memory_space<vmem>>, %arg2: memref<1x128xf32, #tpu.memory_space<vmem>>, %arg3: memref<1x128xf32, #tpu.memory_space<vmem>>, %arg4: memref<128x256xbf16, #tpu.memory_space<vmem>>, %arg5: memref<1x256xf32, #tpu.memory_space<vmem>>, %arg6: memref<256x128xbf16, #tpu.memory_space<vmem>>, %arg7: memref<1x128xf32, #tpu.memory_space<vmem>>, %arg8: memref<1x128xf32, #tpu.memory_space<vmem>>, %arg9: memref<1x128xf32, #tpu.memory_space<vmem>>, %arg10: memref<32x128xf32, #tpu.memory_space<vmem>>) attributes {dimension_semantics = [#tpu.dimension_semantics<parallel>], iteration_bounds = array<i64: 1>, scalar_prefetch = 0 : i64, scratch_operands = 0 : i64, tpu.core_type = #tpu.core_type<tc>, window_params = [{transform_indices = @transform_0, window_bounds = array<i64: 32, 128>}, {pipeline_mode = #tpu.pipeline_mode<synchronous>, transform_indices = @transform_1, window_bounds = array<i64: 1, 128>}, {pipeline_mode = #tpu.pipeline_mode<synchronous>, transform_indices = @transform_2, window_bounds = array<i64: 1, 128>}, {pipeline_mode = #tpu.pipeline_mode<synchronous>, transform_indices = @transform_3, window_bounds = array<i64: 128, 256>}, {pipeline_mode = #tpu.pipeline_mode<synchronous>, transform_indices = @transform_4, window_bounds = array<i64: 1, 256>}, {pipeline_mode = #tpu.pipeline_mode<synchronous>, transform_indices = @transform_5, window_bounds = array<i64: 256, 128>}, {pipeline_mode = #tpu.pipeline_mode<synchronous>, transform_indices = @transform_6, window_bounds = array<i64: 1, 128>}, {pipeline_mode = #tpu.pipeline_mode<synchronous>, transform_indices = @transform_7, window_bounds = array<i64: 1, 128>}, {pipeline_mode = #tpu.pipeline_mode<synchronous>, transform_indices = @transform_8, window_bounds = array<i64: 1, 128>}, {transform_indices = @transform_9, window_bounds = array<i64: 32, 128>}]} {
    %c0 = arith.constant 0 : index
    %c0_0 = arith.constant 0 : index
    %0 = vector.load %arg1[%c0, %c0_0] : memref<32x128xf32, #tpu.memory_space<vmem>>, vector<32x128xf32>
    %c0_1 = arith.constant 0 : index
    %c0_2 = arith.constant 0 : index
    %1 = vector.load %arg2[%c0_1, %c0_2] : memref<1x128xf32, #tpu.memory_space<vmem>>, vector<1x128xf32>
    %c0_3 = arith.constant 0 : index
    %c0_4 = arith.constant 0 : index
    %2 = vector.load %arg3[%c0_3, %c0_4] : memref<1x128xf32, #tpu.memory_space<vmem>>, vector<1x128xf32>
    %cst = arith.constant dense<0.000000e+00> : vector<32xf32>
    %3 = vector.multi_reduction <add>, %0, %cst [1] : vector<32x128xf32> to vector<32xf32>
    %4 = vector.shape_cast %3 : vector<32xf32> to vector<32x1xf32>
    %cst_5 = arith.constant 1.280000e+02 : f32
    %5 = vector.broadcast %cst_5 : f32 to vector<32x1xf32>
    %6 = arith.divf %4, %5 : vector<32x1xf32>
    %7 = vector.broadcast %6 : vector<32x1xf32> to vector<32x128xf32>
    %8 = arith.subf %0, %7 : vector<32x128xf32>
    %9 = arith.mulf %8, %8 : vector<32x128xf32>
    %cst_6 = arith.constant dense<0.000000e+00> : vector<32xf32>
    %10 = vector.multi_reduction <add>, %9, %cst_6 [1] : vector<32x128xf32> to vector<32xf32>
    %11 = vector.shape_cast %10 : vector<32xf32> to vector<32x1xf32>
    %cst_7 = arith.constant 1.280000e+02 : f32
    %12 = vector.broadcast %cst_7 : f32 to vector<32x1xf32>
    %13 = arith.divf %11, %12 : vector<32x1xf32>
    %14 = vector.broadcast %6 : vector<32x1xf32> to vector<32x128xf32>
    %15 = arith.subf %0, %14 : vector<32x128xf32>
    %cst_8 = arith.constant 9.99999996E-13 : f32
    %16 = vector.broadcast %cst_8 : f32 to vector<32x1xf32>
    %17 = arith.addf %13, %16 : vector<32x1xf32>
    %18 = math.rsqrt %17 : vector<32x1xf32>
    %19 = vector.broadcast %18 : vector<32x1xf32> to vector<32x128xf32>
    %20 = arith.mulf %15, %19 : vector<32x128xf32>
    %21 = vector.broadcast %1 : vector<1x128xf32> to vector<32x128xf32>
    %22 = arith.mulf %20, %21 : vector<32x128xf32>
    %23 = vector.broadcast %2 : vector<1x128xf32> to vector<32x128xf32>
    %24 = arith.addf %22, %23 : vector<32x128xf32>
    %25 = arith.truncf %24 : vector<32x128xf32> to vector<32x128xbf16>
    %c0_9 = arith.constant 0 : index
    %c0_10 = arith.constant 0 : index
    %26 = vector.load %arg4[%c0_9, %c0_10] : memref<128x256xbf16, #tpu.memory_space<vmem>>, vector<128x256xbf16>
    %cst_11 = arith.constant dense<0.000000e+00> : vector<32x256xf32>
    %27 = tpu.matmul %25, %26, %cst_11 {dimension_numbers = #tpu.dot_dimension_numbers<[1], [0], [0], [1], [0, 0, 1, 1], [], []>} : vector<32x128xbf16>, vector<128x256xbf16>, vector<32x256xf32> -> vector<32x256xf32>
    %c0_12 = arith.constant 0 : index
    %c0_13 = arith.constant 0 : index
    %28 = vector.load %arg5[%c0_12, %c0_13] : memref<1x256xf32, #tpu.memory_space<vmem>>, vector<1x256xf32>
    %29 = vector.broadcast %28 : vector<1x256xf32> to vector<32x256xf32>
    %30 = arith.addf %27, %29 : vector<32x256xf32>
    %cst_14 = arith.constant 0.000000e+00 : f32
    %31 = vector.broadcast %cst_14 : f32 to vector<32x256xf32>
    %32 = arith.maximumf %30, %31 : vector<32x256xf32>
    %33 = arith.truncf %32 : vector<32x256xf32> to vector<32x256xbf16>
    %c0_15 = arith.constant 0 : index
    %c0_16 = arith.constant 0 : index
    %34 = vector.load %arg6[%c0_15, %c0_16] : memref<256x128xbf16, #tpu.memory_space<vmem>>, vector<256x128xbf16>
    %cst_17 = arith.constant dense<0.000000e+00> : vector<32x128xf32>
    %35 = tpu.matmul %33, %34, %cst_17 {dimension_numbers = #tpu.dot_dimension_numbers<[1], [0], [0], [1], [0, 0, 1, 1], [], []>} : vector<32x256xbf16>, vector<256x128xbf16>, vector<32x128xf32> -> vector<32x128xf32>
    %c0_18 = arith.constant 0 : index
    %c0_19 = arith.constant 0 : index
    %36 = vector.load %arg7[%c0_18, %c0_19] : memref<1x128xf32, #tpu.memory_space<vmem>>, vector<1x128xf32>
    %37 = vector.broadcast %36 : vector<1x128xf32> to vector<32x128xf32>
    %38 = arith.addf %35, %37 : vector<32x128xf32>
    %cst_20 = arith.constant 5.000000e-01 : f32
    %39 = vector.broadcast %cst_20 : f32 to vector<32x128xf32>
    %40 = arith.mulf %39, %38 : vector<32x128xf32>
    %41 = arith.addf %0, %40 : vector<32x128xf32>
    %c0_21 = arith.constant 0 : index
    %c0_22 = arith.constant 0 : index
    %42 = vector.load %arg8[%c0_21, %c0_22] : memref<1x128xf32, #tpu.memory_space<vmem>>, vector<1x128xf32>
    %c0_23 = arith.constant 0 : index
    %c0_24 = arith.constant 0 : index
    %43 = vector.load %arg9[%c0_23, %c0_24] : memref<1x128xf32, #tpu.memory_space<vmem>>, vector<1x128xf32>
    %cst_25 = arith.constant dense<0.000000e+00> : vector<32xf32>
    %44 = vector.multi_reduction <add>, %41, %cst_25 [1] : vector<32x128xf32> to vector<32xf32>
    %45 = vector.shape_cast %44 : vector<32xf32> to vector<32x1xf32>
    %cst_26 = arith.constant 1.280000e+02 : f32
    %46 = vector.broadcast %cst_26 : f32 to vector<32x1xf32>
    %47 = arith.divf %45, %46 : vector<32x1xf32>
    %48 = vector.broadcast %47 : vector<32x1xf32> to vector<32x128xf32>
    %49 = arith.subf %41, %48 : vector<32x128xf32>
    %50 = arith.mulf %49, %49 : vector<32x128xf32>
    %cst_27 = arith.constant dense<0.000000e+00> : vector<32xf32>
    %51 = vector.multi_reduction <add>, %50, %cst_27 [1] : vector<32x128xf32> to vector<32xf32>
    %52 = vector.shape_cast %51 : vector<32xf32> to vector<32x1xf32>
    %cst_28 = arith.constant 1.280000e+02 : f32
    %53 = vector.broadcast %cst_28 : f32 to vector<32x1xf32>
    %54 = arith.divf %52, %53 : vector<32x1xf32>
    %55 = vector.broadcast %47 : vector<32x1xf32> to vector<32x128xf32>
    %56 = arith.subf %41, %55 : vector<32x128xf32>
    %cst_29 = arith.constant 9.99999996E-13 : f32
    %57 = vector.broadcast %cst_29 : f32 to vector<32x1xf32>
    %58 = arith.addf %54, %57 : vector<32x1xf32>
    %59 = math.rsqrt %58 : vector<32x1xf32>
    %60 = vector.broadcast %59 : vector<32x1xf32> to vector<32x128xf32>
    %61 = arith.mulf %56, %60 : vector<32x128xf32>
    %62 = vector.broadcast %42 : vector<1x128xf32> to vector<32x128xf32>
    %63 = arith.mulf %61, %62 : vector<32x128xf32>
    %64 = vector.broadcast %43 : vector<1x128xf32> to vector<32x128xf32>
    %65 = arith.addf %63, %64 : vector<32x128xf32>
    %c0_30 = arith.constant 0 : index
    %c0_31 = arith.constant 0 : index
    %66 = vector.load %arg10[%c0_30, %c0_31] : memref<32x128xf32, #tpu.memory_space<vmem>>, vector<32x128xf32>
    tpu.vector_store %arg10[%c0_30, %c0_31], %65 {strides = array<i32>} : memref<32x128xf32, #tpu.memory_space<vmem>>, vector<32x128xf32>,
    return
  }
  func.func @transform_0(%arg0: i32) -> (i32, i32) {
    %c0_i32 = arith.constant 0 : i32
    %c0_i32_0 = arith.constant 0 : i32
    return %arg0, %c0_i32 : i32, i32
  }
  func.func @transform_1(%arg0: i32) -> (i32, i32) {
    %c0_i32 = arith.constant 0 : i32
    %c0_i32_0 = arith.constant 0 : i32
    %c0_i32_1 = arith.constant 0 : i32
    return %c0_i32, %c0_i32_0 : i32, i32
  }
  func.func @transform_2(%arg0: i32) -> (i32, i32) {
    %c0_i32 = arith.constant 0 : i32
    %c0_i32_0 = arith.constant 0 : i32
    %c0_i32_1 = arith.constant 0 : i32
    return %c0_i32, %c0_i32_0 : i32, i32
  }
  func.func @transform_3(%arg0: i32) -> (i32, i32) {
    %c0_i32 = arith.constant 0 : i32
    %c0_i32_0 = arith.constant 0 : i32
    %c0_i32_1 = arith.constant 0 : i32
    return %c0_i32, %c0_i32_0 : i32, i32
  }
  func.func @transform_4(%arg0: i32) -> (i32, i32) {
    %c0_i32 = arith.constant 0 : i32
    %c0_i32_0 = arith.constant 0 : i32
    %c0_i32_1 = arith.constant 0 : i32
    return %c0_i32, %c0_i32_0 : i32, i32
  }
  func.func @transform_5(%arg0: i32) -> (i32, i32) {
    %c0_i32 = arith.constant 0 : i32
    %c0_i32_0 = arith.constant 0 : i32
    %c0_i32_1 = arith.constant 0 : i32
    return %c0_i32, %c0_i32_0 : i32, i32
  }
  func.func @transform_6(%arg0: i32) -> (i32, i32) {
    %c0_i32 = arith.constant 0 : i32
    %c0_i32_0 = arith.constant 0 : i32
    %c0_i32_1 = arith.constant 0 : i32
    return %c0_i32, %c0_i32_0 : i32, i32
  }
  func.func @transform_7(%arg0: i32) -> (i32, i32) {
    %c0_i32 = arith.constant 0 : i32
    %c0_i32_0 = arith.constant 0 : i32
    %c0_i32_1 = arith.constant 0 : i32
    return %c0_i32, %c0_i32_0 : i32, i32
  }
  func.func @transform_8(%arg0: i32) -> (i32, i32) {
    %c0_i32 = arith.constant 0 : i32
    %c0_i32_0 = arith.constant 0 : i32
    %c0_i32_1 = arith.constant 0 : i32
    return %c0_i32, %c0_i32_0 : i32, i32
  }
  func.func @transform_9(%arg0: i32) -> (i32, i32) {
    %c0_i32 = arith.constant 0 : i32
    %c0_i32_0 = arith.constant 0 : i32
    return %arg0, %c0_i32 : i32, i32
  }
}

</mosaic_0001>

<llo_original>
// kernel: encoder_layer.4
$region0: #{encoder_layer.4}
  #allocation0 [shape = 'u32[]', space=smem, size = 0x4, offset = 0x4, fixed_abs, tag = 'smem constant byte address 0x4 - core index']
  #allocation1 [shape = 'u32[72,128]{1,0:T(1,128)}', space=vmem, size = 0x9000, scoped, tag = 'internal scratch']
  %s0 = inlined_call_operand.vmem [shape: f32[32,128], index: 0, kind: input, shape index: {}]
  %s1 = inlined_call_operand.vmem [shape: f32[1,128], index: 1, kind: input, shape index: {}]
  %s2 = inlined_call_operand.vmem [shape: f32[1,128], index: 2, kind: input, shape index: {}]
  %s3 = inlined_call_operand.vmem [shape: bf16[128,256], index: 3, kind: input, shape index: {}]
  %s4 = inlined_call_operand.vmem [shape: f32[1,256], index: 4, kind: input, shape index: {}]
  %s5 = inlined_call_operand.vmem [shape: bf16[256,128], index: 5, kind: input, shape index: {}]
  %s6 = inlined_call_operand.vmem [shape: f32[1,128], index: 6, kind: input, shape index: {}]
  %s7 = inlined_call_operand.vmem [shape: f32[32,128], index: 7, kind: output, shape index: {}]
  %s8 = sld [smem:[#allocation0]]
  $region38: #{encoder_layer.4} parent=0
    _
  %s10 = ssub.s32 1, %s8
  %s11 = scalar_select 0, %s10, %s8
  // Predicated region
  $region2: #{encoder_layer.4} parent=0 // pred_check
    _
  $region3: #{encoder_layer.4} parent=0 // pred_check_branch
    %13 = sbr.rel (0) target = $region5
  $region4: #{encoder_layer.4} parent=0 // pred_region
    _
  $region5: #{encoder_layer.4} parent=0 // pred_fallthru
    _
  // Predicated region
  $region6: #{encoder_layer.4} parent=0 // pred_check
    _
  $region7: #{encoder_layer.4} parent=0 // pred_check_branch
    %15 = sbr.rel (0) target = $region9
  $region8: #{encoder_layer.4} parent=0 // pred_region
    _
  $region9: #{encoder_layer.4} parent=0 // pred_fallthru
    _
  // Predicated region
  $region10: #{encoder_layer.4} parent=0 // pred_check
    _
  $region11: #{encoder_layer.4} parent=0 // pred_check_branch
    %17 = sbr.rel (0) target = $region13
  $region12: #{encoder_layer.4} parent=0 // pred_region
    _
  $region13: #{encoder_layer.4} parent=0 // pred_fallthru
    _
  // Predicated region
  $region14: #{encoder_layer.4} parent=0 // pred_check
    _
  $region15: #{encoder_layer.4} parent=0 // pred_check_branch
    %19 = sbr.rel (0) target = $region17
  $region16: #{encoder_layer.4} parent=0 // pred_region
    _
  $region17: #{encoder_layer.4} parent=0 // pred_fallthru
    _
  // Predicated region
  $region18: #{encoder_layer.4} parent=0 // pred_check
    _
  $region19: #{encoder_layer.4} parent=0 // pred_check_branch
    %21 = sbr.rel (0) target = $region21
  $region20: #{encoder_layer.4} parent=0 // pred_region
    _
  $region21: #{encoder_layer.4} parent=0 // pred_fallthru
    _
  // Predicated region
  $region22: #{encoder_layer.4} parent=0 // pred_check
    _
  $region23: #{encoder_layer.4} parent=0 // pred_check_branch
    %23 = sbr.rel (0) target = $region25
  $region24: #{encoder_layer.4} parent=0 // pred_region
    _
  $region25: #{encoder_layer.4} parent=0 // pred_fallthru
    _
  // Predicated region
  $region26: #{encoder_layer.4} parent=0 // pred_check
    _
  $region27: #{encoder_layer.4} parent=0 // pred_check_branch
    %25 = sbr.rel (0) target = $region29
  $region28: #{encoder_layer.4} parent=0 // pred_region
    _
  $region29: #{encoder_layer.4} parent=0 // pred_fallthru
    _
  %v26 = vld [vmem:[%s0] sm:$0xff]
  %v27 = vld [vmem:[%s0 + $0x8] sm:$0xff]
  %v28 = vld [vmem:[%s0 + $0x10] sm:$0xff]
  %v29 = vld [vmem:[%s0 + $0x18] sm:$0xff]
  %v30 = vld [vmem:[%s1] sm:$0x1]
  %v31 = vld [vmem:[%s2] sm:$0x1]
  %32 = vadd.xlane.f32.xlu0 %v26
  %v33 = vpop.xlane.xlu0 %32
  %34 = vadd.xlane.f32.xlu0 %v27
  %v35 = vpop.xlane.xlu0 %34
  %36 = vadd.xlane.f32.xlu0 %v28
  %v37 = vpop.xlane.xlu0 %36
  %38 = vadd.xlane.f32.xlu0 %v29
  %v39 = vpop.xlane.xlu0 %38
  %v40 = vrcp.pop 128.0
  %v41 = vmul.f32 128.0, %v40
  %v42 = vsub.f32 1.0, %v41
  %v43 = vmul.f32 %v40, %v42
  %v44 = vadd.f32 %v40, %v43
  %vm45 = vweird.f32 %v40
  %v46 = vsel %vm45, %v40, %v44
  %v47 = vmul.f32 %v33, %v46
  %v48 = vmul.f32 %v35, %v46
  %v49 = vmul.f32 %v37, %v46
  %v50 = vmul.f32 %v39, %v46
  %v51 = vsub.f32 %v26, %v47
  %v52 = vsub.f32 %v27, %v48
  %v53 = vsub.f32 %v28, %v49
  %v54 = vsub.f32 %v29, %v50
  %v55 = vmul.f32 %v51, %v51
  %v56 = vmul.f32 %v52, %v52
  %v57 = vmul.f32 %v53, %v53
  %v58 = vmul.f32 %v54, %v54
  %59 = vadd.xlane.f32.xlu0 %v55
  %v60 = vpop.xlane.xlu0 %59
  %61 = vadd.xlane.f32.xlu0 %v56
  %v62 = vpop.xlane.xlu0 %61
  %63 = vadd.xlane.f32.xlu0 %v57
  %v64 = vpop.xlane.xlu0 %63
  %65 = vadd.xlane.f32.xlu0 %v58
  %v66 = vpop.xlane.xlu0 %65
  %v67 = vmul.f32 %v60, %v46
  %v68 = vmul.f32 %v62, %v46
  %v69 = vmul.f32 %v64, %v46
  %v70 = vmul.f32 %v66, %v46
  %v71 = vadd.f32 %v67, 1e-12
  %v72 = vadd.f32 %v68, 1e-12
  %v73 = vadd.f32 %v69, 1e-12
  %v74 = vadd.f32 %v70, 1e-12
  %v75 = vrsqrt.pop %v71
  %v76 = vmul.f32 %v75, %v71
  %v77 = vmul.f32 %v76, %v75
  %v78 = vmul.f32 0.5, %v77
  %v79 = vsub.f32 1.5, %v78
  %v80 = vmul.f32 %v75, %v79
  %vm81 = vweird.f32 %v71
  %vm82 = vweird.f32 %v75
  %vm83 = vmor %vm81, %vm82
  %v84 = vsel %vm83, %v75, %v80
  %v85 = vrsqrt.pop %v72
  %v86 = vmul.f32 %v85, %v72
  %v87 = vmul.f32 %v86, %v85
  %v88 = vmul.f32 0.5, %v87
  %v89 = vsub.f32 1.5, %v88
  %v90 = vmul.f32 %v85, %v89
  %vm91 = vweird.f32 %v72
  %vm92 = vweird.f32 %v85
  %vm93 = vmor %vm91, %vm92
  %v94 = vsel %vm93, %v85, %v90
  %v95 = vrsqrt.pop %v73
  %v96 = vmul.f32 %v95, %v73
  %v97 = vmul.f32 %v96, %v95
  %v98 = vmul.f32 0.5, %v97
  %v99 = vsub.f32 1.5, %v98
  %v100 = vmul.f32 %v95, %v99
  %vm101 = vweird.f32 %v73
  %vm102 = vweird.f32 %v95
  %vm103 = vmor %vm101, %vm102
  %v104 = vsel %vm103, %v95, %v100
  %v105 = vrsqrt.pop %v74
  %v106 = vmul.f32 %v105, %v74
  %v107 = vmul.f32 %v106, %v105
  %v108 = vmul.f32 0.5, %v107
  %v109 = vsub.f32 1.5, %v108
  %v110 = vmul.f32 %v105, %v109
  %vm111 = vweird.f32 %v74
  %vm112 = vweird.f32 %v105
  %vm113 = vmor %vm111, %vm112
  %v114 = vsel %vm113, %v105, %v110
  %v115 = vmul.f32 %v51, %v84
  %v116 = vmul.f32 %v52, %v94
  %v117 = vmul.f32 %v53, %v104
  %v118 = vmul.f32 %v54, %v114
  %v120 = vperm.slane %v30, 0
  %v122 = vmul.f32 %v115, %v120
  %v123 = vmul.f32 %v116, %v120
  %v124 = vmul.f32 %v117, %v120
  %v125 = vmul.f32 %v118, %v120
  %v127 = vperm.slane %v31, 0
  %v129 = vadd.f32 %v122, %v127
  %v130 = vadd.f32 %v123, %v127
  %v131 = vadd.f32 %v124, %v127
  %v132 = vadd.f32 %v125, %v127
  %v133 = vpack.c.bf16 %v130, %v129
  %v134 = vpack.c.bf16 %v132, %v131
  %v135 = vld [vmem:[%s3] sm:$0xff]
  %v136 = vld [vmem:[%s3 + $0x8] sm:$0xff]
  %v137 = vld [vmem:[%s3 + $0x10] sm:$0xff]
  %v138 = vld [vmem:[%s3 + $0x18] sm:$0xff]
  %v139 = vld [vmem:[%s3 + $0x20] sm:$0xff]
  %v140 = vld [vmem:[%s3 + $0x28] sm:$0xff]
  %v141 = vld [vmem:[%s3 + $0x30] sm:$0xff]
  %v142 = vld [vmem:[%s3 + $0x38] sm:$0xff]
  %v143 = vld [vmem:[%s3 + $0x40] sm:$0xff]
  %v144 = vld [vmem:[%s3 + $0x48] sm:$0xff]
  %v145 = vld [vmem:[%s3 + $0x50] sm:$0xff]
  %v146 = vld [vmem:[%s3 + $0x58] sm:$0xff]
  %v147 = vld [vmem:[%s3 + $0x60] sm:$0xff]
  %v148 = vld [vmem:[%s3 + $0x68] sm:$0xff]
  %v149 = vld [vmem:[%s3 + $0x70] sm:$0xff]
  %v150 = vld [vmem:[%s3 + $0x78] sm:$0xff]
  %v151 = vld [vmem:[%s4] sm:$0x3]
  %v153 = vperm.slane %v151, 0
  %v154 = vperm.slane %v151, 1
  %v173 = vunpack.c.l.b16 %v135
  %v174 = vunpack.c.h.b16 %v135
  %v175 = vunpack.c.l.b16 %v136
  %v176 = vunpack.c.h.b16 %v136
  %v177 = vunpack.c.l.b16 %v137
  %v178 = vunpack.c.h.b16 %v137
  %v179 = vunpack.c.l.b16 %v138
  %v180 = vunpack.c.h.b16 %v138
  %v181 = vunpack.c.l.b16 %v139
  %v182 = vunpack.c.h.b16 %v139
  %v183 = vunpack.c.l.b16 %v140
  %v184 = vunpack.c.h.b16 %v140
  %v185 = vunpack.c.l.b16 %v141
  %v186 = vunpack.c.h.b16 %v141
  %v187 = vunpack.c.l.b16 %v142
  %v188 = vunpack.c.h.b16 %v142
  %v189 = vunpack.c.l.b16 %v143
  %v190 = vunpack.c.h.b16 %v143
  %v191 = vunpack.c.l.b16 %v144
  %v192 = vunpack.c.h.b16 %v144
  %v193 = vunpack.c.l.b16 %v145
  %v194 = vunpack.c.h.b16 %v145
  %v195 = vunpack.c.l.b16 %v146
  %v196 = vunpack.c.h.b16 %v146
  %v197 = vunpack.c.l.b16 %v147
  %v198 = vunpack.c.h.b16 %v147
  %v199 = vunpack.c.l.b16 %v148
  %v200 = vunpack.c.h.b16 %v148
  %v201 = vunpack.c.l.b16 %v149
  %v202 = vunpack.c.h.b16 %v149
  %v203 = vunpack.c.l.b16 %v150
  %v204 = vunpack.c.h.b16 %v150
  %v205 = vpack.c.b16 %v175, %v173
  %v206 = vpack.c.b16 %v176, %v174
  %v207 = vpack.c.b16 %v179, %v177
  %v208 = vpack.c.b16 %v180, %v178
  %v209 = vpack.c.b16 %v183, %v181
  %v210 = vpack.c.b16 %v184, %v182
  %v211 = vpack.c.b16 %v187, %v185
  %v212 = vpack.c.b16 %v188, %v186
  %v213 = vpack.c.b16 %v191, %v189
  %v214 = vpack.c.b16 %v192, %v190
  %v215 = vpack.c.b16 %v195, %v193
  %v216 = vpack.c.b16 %v196, %v194
  %v217 = vpack.c.b16 %v199, %v197
  %v218 = vpack.c.b16 %v200, %v198
  %v219 = vpack.c.b16 %v203, %v201
  %v220 = vpack.c.b16 %v204, %v202
  %237 = vmatpush.bf16.msra.mxu0 %v219
  %238 = vmatpush.bf16.msra.mxu0 %v217
  %239 = vmatpush.bf16.msra.mxu0 %v215
  %240 = vmatpush.bf16.msra.mxu0 %v213
  %241 = vmatpush.bf16.msra.mxu0 %v211
  %242 = vmatpush.bf16.msra.mxu0 %v209
  %243 = vmatpush.bf16.msra.mxu0 %v207
  %244 = vmatpush.bf16.msra.mxu0 %v205
  %245 = vmatmul.bf16.gmra.mxu0 %v133
  %v246 = vpop.f32.mrf.mxu0
  %v247 = vadd.f32 %v153, %v246
  %v248 = vpop.f32.mrf.mxu0
  %v249 = vadd.f32 %v153, %v248
  %250 = vmatmul.bf16.gmra.mxu0 %v134
  %v251 = vpop.f32.mrf.mxu0
  %v252 = vadd.f32 %v153, %v251
  %v253 = vpop.f32.mrf.mxu0
  %v254 = vadd.f32 %v153, %v253
  %255 = vdwg.mxu0
  %256 = vmatpush.bf16.msra.mxu0 %v220
  %257 = vmatpush.bf16.msra.mxu0 %v218
  %258 = vmatpush.bf16.msra.mxu0 %v216
  %259 = vmatpush.bf16.msra.mxu0 %v214
  %260 = vmatpush.bf16.msra.mxu0 %v212
  %261 = vmatpush.bf16.msra.mxu0 %v210
  %262 = vmatpush.bf16.msra.mxu0 %v208
  %263 = vmatpush.bf16.msra.mxu0 %v206
  %264 = vmatmul.bf16.gmra.mxu0 %v133
  %v265 = vpop.f32.mrf.mxu0
  %v266 = vadd.f32 %v154, %v265
  %v267 = vpop.f32.mrf.mxu0
  %v268 = vadd.f32 %v154, %v267
  %269 = vmatmul.bf16.gmra.mxu0 %v134
  %v270 = vpop.f32.mrf.mxu0
  %v271 = vadd.f32 %v154, %v270
  %v272 = vpop.f32.mrf.mxu0
  %v273 = vadd.f32 %v154, %v272
  %274 = vdwg.mxu0
  %v275 = vmax.f32 %v247, 0.0
  %v276 = vmax.f32 %v266, 0.0
  %v277 = vmax.f32 %v249, 0.0
  %v278 = vmax.f32 %v268, 0.0
  %v279 = vmax.f32 %v252, 0.0
  %v280 = vmax.f32 %v271, 0.0
  %v281 = vmax.f32 %v254, 0.0
  %v282 = vmax.f32 %v273, 0.0
  %v283 = vpack.c.bf16 %v277, %v275
  %v284 = vpack.c.bf16 %v278, %v276
  %v285 = vpack.c.bf16 %v281, %v279
  %v286 = vpack.c.bf16 %v282, %v280
  %v287 = vld [vmem:[%s5] sm:$0xf]
  %v288 = vld [vmem:[%s5 + $0x4] sm:$0xf]
  %v289 = vld [vmem:[%s5 + $0x8] sm:$0xf]
  %v290 = vld [vmem:[%s5 + $0xc] sm:$0xf]
  %v291 = vld [vmem:[%s5 + $0x10] sm:$0xf]
  %v292 = vld [vmem:[%s5 + $0x14] sm:$0xf]
  %v293 = vld [vmem:[%s5 + $0x18] sm:$0xf]
  %v294 = vld [vmem:[%s5 + $0x1c] sm:$0xf]
  %v295 = vld [vmem:[%s5 + $0x20] sm:$0xf]
  %v296 = vld [vmem:[%s5 + $0x24] sm:$0xf]
  %v297 = vld [vmem:[%s5 + $0x28] sm:$0xf]
  %v298 = vld [vmem:[%s5 + $0x2c] sm:$0xf]
  %v299 = vld [vmem:[%s5 + $0x30] sm:$0xf]
  %v300 = vld [vmem:[%s5 + $0x34] sm:$0xf]
  %v301 = vld [vmem:[%s5 + $0x38] sm:$0xf]
  %v302 = vld [vmem:[%s5 + $0x3c] sm:$0xf]
  %v303 = vld [vmem:[%s5 + $0x40] sm:$0xf]
  %v304 = vld [vmem:[%s5 + $0x44] sm:$0xf]
  %v305 = vld [vmem:[%s5 + $0x48] sm:$0xf]
  %v306 = vld [vmem:[%s5 + $0x4c] sm:$0xf]
  %v307 = vld [vmem:[%s5 + $0x50] sm:$0xf]
  %v308 = vld [vmem:[%s5 + $0x54] sm:$0xf]
  %v309 = vld [vmem:[%s5 + $0x58] sm:$0xf]
  %v310 = vld [vmem:[%s5 + $0x5c] sm:$0xf]
  %v311 = vld [vmem:[%s5 + $0x60] sm:$0xf]
  %v312 = vld [vmem:[%s5 + $0x64] sm:$0xf]
  %v313 = vld [vmem:[%s5 + $0x68] sm:$0xf]
  %v314 = vld [vmem:[%s5 + $0x6c] sm:$0xf]
  %v315 = vld [vmem:[%s5 + $0x70] sm:$0xf]
  %v316 = vld [vmem:[%s5 + $0x74] sm:$0xf]
  %v317 = vld [vmem:[%s5 + $0x78] sm:$0xf]
  %v318 = vld [vmem:[%s5 + $0x7c] sm:$0xf]
  %v319 = vld [vmem:[%s6] sm:$0x1]
  %v321 = vperm.slane %v319, 0
  %v355 = vunpack.c.l.b16 %v287
  %v356 = vunpack.c.l.b16 %v288
  %v357 = vunpack.c.l.b16 %v289
  %v358 = vunpack.c.l.b16 %v290
  %v359 = vunpack.c.l.b16 %v291
  %v360 = vunpack.c.l.b16 %v292
  %v361 = vunpack.c.l.b16 %v293
  %v362 = vunpack.c.l.b16 %v294
  %v363 = vunpack.c.l.b16 %v295
  %v364 = vunpack.c.l.b16 %v296
  %v365 = vunpack.c.l.b16 %v297
  %v366 = vunpack.c.l.b16 %v298
  %v367 = vunpack.c.l.b16 %v299
  %v368 = vunpack.c.l.b16 %v300
  %v369 = vunpack.c.l.b16 %v301
  %v370 = vunpack.c.l.b16 %v302
  %v371 = vunpack.c.l.b16 %v303
  %v372 = vunpack.c.l.b16 %v304
  %v373 = vunpack.c.l.b16 %v305
  %v374 = vunpack.c.l.b16 %v306
  %v375 = vunpack.c.l.b16 %v307
  %v376 = vunpack.c.l.b16 %v308
  %v377 = vunpack.c.l.b16 %v309
  %v378 = vunpack.c.l.b16 %v310
  %v379 = vunpack.c.l.b16 %v311
  %v380 = vunpack.c.l.b16 %v312
  %v381 = vunpack.c.l.b16 %v313
  %v382 = vunpack.c.l.b16 %v314
  %v383 = vunpack.c.l.b16 %v315
  %v384 = vunpack.c.l.b16 %v316
  %v385 = vunpack.c.l.b16 %v317
  %v386 = vunpack.c.l.b16 %v318
  %v387 = vpack.c.b16 %v356, %v355
  %v388 = vpack.c.b16 %v358, %v357
  %v389 = vpack.c.b16 %v360, %v359
  %v390 = vpack.c.b16 %v362, %v361
  %v391 = vpack.c.b16 %v364, %v363
  %v392 = vpack.c.b16 %v366, %v365
  %v393 = vpack.c.b16 %v368, %v367
  %v394 = vpack.c.b16 %v370, %v369
  %v395 = vpack.c.b16 %v372, %v371
  %v396 = vpack.c.b16 %v374, %v373
  %v397 = vpack.c.b16 %v376, %v375
  %v398 = vpack.c.b16 %v378, %v377
  %v399 = vpack.c.b16 %v380, %v379
  %v400 = vpack.c.b16 %v382, %v381
  %v401 = vpack.c.b16 %v384, %v383
  %v402 = vpack.c.b16 %v386, %v385
  %419 = vmatpush.bf16.msra.mxu0 %v394
  %420 = vmatpush.bf16.msra.mxu0 %v393
  %421 = vmatpush.bf16.msra.mxu0 %v392
  %422 = vmatpush.bf16.msra.mxu0 %v391
  %423 = vmatpush.bf16.msra.mxu0 %v390
  %424 = vmatpush.bf16.msra.mxu0 %v389
  %425 = vmatpush.bf16.msra.mxu0 %v388
  %426 = vmatpush.bf16.msra.mxu0 %v387
  %427 = vmatmul.bf16.gmra.mxu0 %v283
  %v428 = vpop.f32.mrf.mxu0
  %v429 = vadd.f32 %v321, %v428
  %v430 = vpop.f32.mrf.mxu0
  %v431 = vadd.f32 %v321, %v430
  %432 = vmatmul.bf16.gmra.mxu0 %v285
  %v433 = vpop.f32.mrf.mxu0
  %v434 = vadd.f32 %v321, %v433
  %v435 = vpop.f32.mrf.mxu0
  %v436 = vadd.f32 %v321, %v435
  %437 = vdwg.mxu0
  %438 = vmatpush.bf16.msra.mxu0 %v402
  %439 = vmatpush.bf16.msra.mxu0 %v401
  %440 = vmatpush.bf16.msra.mxu0 %v400
  %441 = vmatpush.bf16.msra.mxu0 %v399
  %442 = vmatpush.bf16.msra.mxu0 %v398
  %443 = vmatpush.bf16.msra.mxu0 %v397
  %444 = vmatpush.bf16.msra.mxu0 %v396
  %445 = vmatpush.bf16.msra.mxu0 %v395
  %446 = vmatmul.bf16.gmra.mxu0 %v284
  %v447 = vpop.f32.mrf.mxu0
  %v448 = vadd.f32 %v429, %v447
  %v449 = vpop.f32.mrf.mxu0
  %v450 = vadd.f32 %v431, %v449
  %451 = vmatmul.bf16.gmra.mxu0 %v286
  %v452 = vpop.f32.mrf.mxu0
  %v453 = vadd.f32 %v434, %v452
  %v454 = vpop.f32.mrf.mxu0
  %v455 = vadd.f32 %v436, %v454
  %456 = vdwg.mxu0
  %v457 = vmul.f32 %v448, 0.5
  %v458 = vmul.f32 %v450, 0.5
  %v459 = vmul.f32 %v453, 0.5
  %v460 = vmul.f32 %v455, 0.5
  %v461 = vadd.f32 %v26, %v457
  %v462 = vadd.f32 %v27, %v458
  %v463 = vadd.f32 %v28, %v459
  %v464 = vadd.f32 %v29, %v460
  %465 = vst [vmem:[%s7] sm:$0xff] %v461
  %466 = vst [vmem:[%s7 + $0x8] sm:$0xff] %v462
  %467 = vst [vmem:[%s7 + $0x10] sm:$0xff] %v463
  %468 = vst [vmem:[%s7 + $0x18] sm:$0xff] %v464
  // Predicated region
  $region30: #{encoder_layer.4} parent=0 // pred_check
    _
  $region31: #{encoder_layer.4} parent=0 // pred_check_branch
    %470 = sbr.rel (0) target = $region33
  $region32: #{encoder_layer.4} parent=0 // pred_region
    _
  $region33: #{encoder_layer.4} parent=0 // pred_fallthru
    _
  // Predicated region
  $region34: #{encoder_layer.4} parent=0 // pred_check
    _
  $region35: #{encoder_layer.4} parent=0 // pred_check_branch
    %472 = sbr.rel (0) target = $region37
  $region36: #{encoder_layer.4} parent=0 // pred_region
    _
  $region37: #{encoder_layer.4} parent=0 // pred_fallthru
    _

// kernel: encoder_layer.5
$region0: #{encoder_layer.5}
  #allocation0 [shape = 'u32[]', space=smem, size = 0x4, offset = 0x4, fixed_abs, tag = 'smem constant byte address 0x4 - core index']
  #allocation1 [shape = 'u32[72,128]{1,0:T(1,128)}', space=vmem, size = 0x9000, scoped, tag = 'internal scratch']
  %s0 = inlined_call_operand.vmem [shape: f32[2,16,128], index: 0, kind: input, shape index: {}]
  %s1 = inlined_call_operand.vmem [shape: f32[2,1,16], index: 1, kind: input, shape index: {}]
  %s2 = inlined_call_operand.vmem [shape: f32[1,128], index: 2, kind: input, shape index: {}]
  %s3 = inlined_call_operand.vmem [shape: f32[1,128], index: 3, kind: input, shape index: {}]
  %s4 = inlined_call_operand.vmem [shape: bf16[128,384], index: 4, kind: input, shape index: {}]
  %s5 = inlined_call_operand.vmem [shape: f32[1,384], index: 5, kind: input, shape index: {}]
  %s6 = inlined_call_operand.vmem [shape: bf16[128,128], index: 6, kind: input, shape index: {}]
  %s7 = inlined_call_operand.vmem [shape: f32[1,128], index: 7, kind: input, shape index: {}]
  %s8 = inlined_call_operand.vmem [shape: f32[2,16,128], index: 8, kind: output, shape index: {}]
  %s9 = sld [smem:[#allocation0]]
  $region65: #{encoder_layer.5} parent=0
    _
  %s11 = ssub.s32 1, %s9
  %s12 = scalar_select 0, %s11, %s9
  loop: start=0, step=1, limit=4
  $region2: #{encoder_layer.5} parent=0 // loop_pre_header
    _
  $region3: #{encoder_layer.5} parent=0 // loop_header
    %s14 = sphi 0, %s18
    %p15 = scmp.ge.s32.totalorder %s14, 4
    %s24 = sphi 0, %s26
    %s27 = sphi 0, %s24
    %s28 = sphi 0, %s27
    %s44 = sphi 0, %s28
    %s50 = sphi 0, %s52
    %s53 = sphi 0, %s50
    %s54 = sphi 0, %s53
    %s70 = sphi 0, %s54
    %s74 = sphi 0, %s74
    %s76 = sphi 0, %s74
    %s77 = sphi 0, %s76
    %s91 = sphi 0, %s77
    %s95 = sphi 0, %s95
    %s97 = sphi 0, %s95
    %s98 = sphi 0, %s97
    %s112 = sphi 0, %s98
    %s116 = sphi 0, %s116
    %s118 = sphi 0, %s116
    %s119 = sphi 0, %s118
    %s133 = sphi 0, %s119
    %s137 = sphi 0, %s137
    %s139 = sphi 0, %s137
    %s140 = sphi 0, %s139
    %s154 = sphi 0, %s140
    %s158 = sphi 0, %s158
    %s160 = sphi 0, %s158
    %s161 = sphi 0, %s160
    %s175 = sphi 0, %s161
    %s179 = sphi 0, %s179
    %s181 = sphi 0, %s179
    %s182 = sphi 0, %s181
    %s196 = sphi 0, %s182
    %s202 = sphi 0, %s204
    %s205 = sphi 0, %s202
    %s206 = sphi 0, %s205
    %s222 = sphi 0, %s206
  $region4: #{encoder_layer.5} parent=0 // loop_header_branch
    %17 = sbr.rel (%p15) target = $region8
  $region5: #{encoder_layer.5} parent=0 // loop_body
    %s19 = ssub.s32 %s14, 1
    %s20 = ssub.s32 %s14, 2
    %s21 = sadd.s32 %s14, 1
    %s22 = ssub.s32 %s14, %s21
    %p23 = scmp.eq.s32.totalorder %s22, 0
    %s25 = sadd.s32 %s24, 1
    %s26 = scalar_select %p23, %s24, %s25
    %p29 = pneg %p23
    %p30 = scmp.eq.s32.totalorder %s14, 1
    %p31 = por %p29, %p30
    %p32 = scmp.ne.s32.totalorder %s24, %s27
    %p33 = scmp.eq.s32.totalorder %s14, 0
    %p34 = por %p32, %p33
    %p35 = scmp.ne.s32.totalorder %s24, %s27
    %p36 = scmp.eq.s32.totalorder %s19, 1
    %p37 = por %p35, %p36
    %p38 = scmp.ne.s32.totalorder %s27, %s28
    %p39 = scmp.eq.s32.totalorder %s19, 0
    %p40 = por %p38, %p39
    %p41 = scmp.ne.s32.totalorder %s27, %s28
    %p42 = scmp.eq.s32.totalorder %s20, 1
    %p43 = por %p41, %p42
    %p45 = scmp.ne.s32.totalorder %s28, %s44
    %p46 = scmp.eq.s32.totalorder %s20, 0
    %p47 = por %p45, %p46
    %s48 = ssub.s32 %s14, %s21
    %p49 = scmp.eq.s32.totalorder %s48, 0
    %s51 = sadd.s32 %s50, 1
    %s52 = scalar_select %p49, %s50, %s51
    %p55 = pneg %p49
    %p56 = scmp.eq.s32.totalorder %s14, 1
    %p57 = por %p55, %p56
    %p58 = scmp.ne.s32.totalorder %s50, %s53
    %p59 = scmp.eq.s32.totalorder %s14, 0
    %p60 = por %p58, %p59
    %p61 = scmp.ne.s32.totalorder %s50, %s53
    %p62 = scmp.eq.s32.totalorder %s19, 1
    %p63 = por %p61, %p62
    %p64 = scmp.ne.s32.totalorder %s53, %s54
    %p65 = scmp.eq.s32.totalorder %s19, 0
    %p66 = por %p64, %p65
    %p67 = scmp.ne.s32.totalorder %s53, %s54
    %p68 = scmp.eq.s32.totalorder %s20, 1
    %p69 = por %p67, %p68
    %p71 = scmp.ne.s32.totalorder %s54, %s70
    %p72 = scmp.eq.s32.totalorder %s20, 0
    %p73 = por %p71, %p72
    %s75 = sadd.s32 %s74, 1
    %p78 = scmp.eq.s32.totalorder %s14, 1
    %p79 = scmp.ne.s32.totalorder %s74, %s76
    %p80 = scmp.eq.s32.totalorder %s14, 0
    %p81 = por %p79, %p80
    %p82 = scmp.ne.s32.totalorder %s74, %s76
    %p83 = scmp.eq.s32.totalorder %s19, 1
    %p84 = por %p82, %p83
    %p85 = scmp.ne.s32.totalorder %s76, %s77
    %p86 = scmp.eq.s32.totalorder %s19, 0
    %p87 = por %p85, %p86
    %p88 = scmp.ne.s32.totalorder %s76, %s77
    %p89 = scmp.eq.s32.totalorder %s20, 1
    %p90 = por %p88, %p89
    %p92 = scmp.ne.s32.totalorder %s77, %s91
    %p93 = scmp.eq.s32.totalorder %s20, 0
    %p94 = por %p92, %p93
    %s96 = sadd.s32 %s95, 1
    %p99 = scmp.eq.s32.totalorder %s14, 1
    %p100 = scmp.ne.s32.totalorder %s95, %s97
    %p101 = scmp.eq.s32.totalorder %s14, 0
    %p102 = por %p100, %p101
    %p103 = scmp.ne.s32.totalorder %s95, %s97
    %p104 = scmp.eq.s32.totalorder %s19, 1
    %p105 = por %p103, %p104
    %p106 = scmp.ne.s32.totalorder %s97, %s98
    %p107 = scmp.eq.s32.totalorder %s19, 0
    %p108 = por %p106, %p107
    %p109 = scmp.ne.s32.totalorder %s97, %s98
    %p110 = scmp.eq.s32.totalorder %s20, 1
    %p111 = por %p109, %p110
    %p113 = scmp.ne.s32.totalorder %s98, %s112
    %p114 = scmp.eq.s32.totalorder %s20, 0
    %p115 = por %p113, %p114
    %s117 = sadd.s32 %s116, 1
    %p120 = scmp.eq.s32.totalorder %s14, 1
    %p121 = scmp.ne.s32.totalorder %s116, %s118
    %p122 = scmp.eq.s32.totalorder %s14, 0
    %p123 = por %p121, %p122
    %p124 = scmp.ne.s32.totalorder %s116, %s118
    %p125 = scmp.eq.s32.totalorder %s19, 1
    %p126 = por %p124, %p125
    %p127 = scmp.ne.s32.totalorder %s118, %s119
    %p128 = scmp.eq.s32.totalorder %s19, 0
    %p129 = por %p127, %p128
    %p130 = scmp.ne.s32.totalorder %s118, %s119
    %p131 = scmp.eq.s32.totalorder %s20, 1
    %p132 = por %p130, %p131
    %p134 = scmp.ne.s32.totalorder %s119, %s133
    %p135 = scmp.eq.s32.totalorder %s20, 0
    %p136 = por %p134, %p135
    %s138 = sadd.s32 %s137, 1
    %p141 = scmp.eq.s32.totalorder %s14, 1
    %p142 = scmp.ne.s32.totalorder %s137, %s139
    %p143 = scmp.eq.s32.totalorder %s14, 0
    %p144 = por %p142, %p143
    %p145 = scmp.ne.s32.totalorder %s137, %s139
    %p146 = scmp.eq.s32.totalorder %s19, 1
    %p147 = por %p145, %p146
    %p148 = scmp.ne.s32.totalorder %s139, %s140
    %p149 = scmp.eq.s32.totalorder %s19, 0
    %p150 = por %p148, %p149
    %p151 = scmp.ne.s32.totalorder %s139, %s140
    %p152 = scmp.eq.s32.totalorder %s20, 1
    %p153 = por %p151, %p152
    %p155 = scmp.ne.s32.totalorder %s140, %s154
    %p156 = scmp.eq.s32.totalorder %s20, 0
    %p157 = por %p155, %p156
    %s159 = sadd.s32 %s158, 1
    %p162 = scmp.eq.s32.totalorder %s14, 1
    %p163 = scmp.ne.s32.totalorder %s158, %s160
    %p164 = scmp.eq.s32.totalorder %s14, 0
    %p165 = por %p163, %p164
    %p166 = scmp.ne.s32.totalorder %s158, %s160
    %p167 = scmp.eq.s32.totalorder %s19, 1
    %p168 = por %p166, %p167
    %p169 = scmp.ne.s32.totalorder %s160, %s161
    %p170 = scmp.eq.s32.totalorder %s19, 0
    %p171 = por %p169, %p170
    %p172 = scmp.ne.s32.totalorder %s160, %s161
    %p173 = scmp.eq.s32.totalorder %s20, 1
    %p174 = por %p172, %p173
    %p176 = scmp.ne.s32.totalorder %s161, %s175
    %p177 = scmp.eq.s32.totalorder %s20, 0
    %p178 = por %p176, %p177
    %s180 = sadd.s32 %s179, 1
    %p183 = scmp.eq.s32.totalorder %s14, 1
    %p184 = scmp.ne.s32.totalorder %s179, %s181
    %p185 = scmp.eq.s32.totalorder %s14, 0
    %p186 = por %p184, %p185
    %p187 = scmp.ne.s32.totalorder %s179, %s181
    %p188 = scmp.eq.s32.totalorder %s19, 1
    %p189 = por %p187, %p188
    %p190 = scmp.ne.s32.totalorder %s181, %s182
    %p191 = scmp.eq.s32.totalorder %s19, 0
    %p192 = por %p190, %p191
    %p193 = scmp.ne.s32.totalorder %s181, %s182
    %p194 = scmp.eq.s32.totalorder %s20, 1
    %p195 = por %p193, %p194
    %p197 = scmp.ne.s32.totalorder %s182, %s196
    %p198 = scmp.eq.s32.totalorder %s20, 0
    %p199 = por %p197, %p198
    %s200 = ssub.s32 %s14, %s21
    %p201 = scmp.eq.s32.totalorder %s200, 0
    %s203 = sadd.s32 %s202, 1
    %s204 = scalar_select %p201, %s202, %s203
    %p207 = pneg %p201
    %p208 = scmp.eq.s32.totalorder %s14, 1
    %p209 = por %p207, %p208
    %p210 = scmp.ne.s32.totalorder %s202, %s205
    %p211 = scmp.eq.s32.totalorder %s14, 0
    %p212 = por %p210, %p211
    %p213 = scmp.ne.s32.totalorder %s202, %s205
    %p214 = scmp.eq.s32.totalorder %s19, 1
    %p215 = por %p213, %p214
    %p216 = scmp.ne.s32.totalorder %s205, %s206
    %p217 = scmp.eq.s32.totalorder %s19, 0
    %p218 = por %p216, %p217
    %p219 = scmp.ne.s32.totalorder %s205, %s206
    %p220 = scmp.eq.s32.totalorder %s20, 1
    %p221 = por %p219, %p220
    %p223 = scmp.ne.s32.totalorder %s206, %s222
    %p224 = scmp.eq.s32.totalorder %s20, 0
    %p225 = por %p223, %p224
    %p226 = scmp.le.s32.totalorder 1, %s14
    %p227 = scmp.lt.s32.totalorder %s14, 3
    %p228 = pnand %p226, %p227
    %p229 = pneg %p228
    // Predicated region
    $region9: #{encoder_layer.5} parent=5 // pred_check
      _
    $region10: #{encoder_layer.5} parent=5 // pred_check_branch
      %231 = sbr.rel (%p228) target = $region12
    $region11: #{encoder_layer.5} parent=5 // pred_region
      %s232 = ssub.s32 %s14, 1
      // Predicated region
      $region13: #{encoder_layer.5} parent=11 // pred_check
        %p233 = pneg %p87
      $region14: #{encoder_layer.5} parent=11 // pred_check_branch
        %235 = sbr.rel (%p233) target = $region16
      $region15: #{encoder_layer.5} parent=11 // pred_region
        _
      $region16: #{encoder_layer.5} parent=11 // pred_fallthru
        _
      // Predicated region
      $region17: #{encoder_layer.5} parent=11 // pred_check
        %p236 = pneg %p108
      $region18: #{encoder_layer.5} parent=11 // pred_check_branch
        %238 = sbr.rel (%p236) target = $region20
      $region19: #{encoder_layer.5} parent=11 // pred_region
        _
      $region20: #{encoder_layer.5} parent=11 // pred_fallthru
        _
      // Predicated region
      $region21: #{encoder_layer.5} parent=11 // pred_check
        %p239 = pneg %p129
      $region22: #{encoder_layer.5} parent=11 // pred_check_branch
        %241 = sbr.rel (%p239) target = $region24
      $region23: #{encoder_layer.5} parent=11 // pred_region
        _
      $region24: #{encoder_layer.5} parent=11 // pred_fallthru
        _
      // Predicated region
      $region25: #{encoder_layer.5} parent=11 // pred_check
        %p242 = pneg %p150
      $region26: #{encoder_layer.5} parent=11 // pred_check_branch
        %244 = sbr.rel (%p242) target = $region28
      $region27: #{encoder_layer.5} parent=11 // pred_region
        _
      $region28: #{encoder_layer.5} parent=11 // pred_fallthru
        _
      // Predicated region
      $region29: #{encoder_layer.5} parent=11 // pred_check
        %p245 = pneg %p171
      $region30: #{encoder_layer.5} parent=11 // pred_check_branch
        %247 = sbr.rel (%p245) target = $region32
      $region31: #{encoder_layer.5} parent=11 // pred_region
        _
      $region32: #{encoder_layer.5} parent=11 // pred_fallthru
        _
      // Predicated region
      $region33: #{encoder_layer.5} parent=11 // pred_check
        %p248 = pneg %p192
      $region34: #{encoder_layer.5} parent=11 // pred_check_branch
        %250 = sbr.rel (%p248) target = $region36
      $region35: #{encoder_layer.5} parent=11 // pred_region
        _
      $region36: #{encoder_layer.5} parent=11 // pred_fallthru
        _
    $region12: #{encoder_layer.5} parent=5 // pred_fallthru
      _
    %p251 = scmp.lt.s32.totalorder %s14, 2
    // Predicated region
    $region37: #{encoder_layer.5} parent=5 // pred_check
      %p252 = pneg %p251
    $region38: #{encoder_layer.5} parent=5 // pred_check_branch
      %254 = sbr.rel (%p252) target = $region40
    $region39: #{encoder_layer.5} parent=5 // pred_region
      // Predicated region
      $region41: #{encoder_layer.5} parent=39 // pred_check
        %p255 = pneg %p34
      $region42: #{encoder_layer.5} parent=39 // pred_check_branch
        %257 = sbr.rel (%p255) target = $region44
      $region43: #{encoder_layer.5} parent=39 // pred_region
        %p258 = scmp.lt.s32.totalorder %s14, 1
        %s259 = scalar_select %p258, %s14, 1
        %s260 = smul.addr %s259, 2
        %s261 = smul.addr %s260, 8
        %s262 = scalar_lea.vmem %s0, %s261
      $region44: #{encoder_layer.5} parent=39 // pred_fallthru
        _
      // Predicated region
      $region45: #{encoder_layer.5} parent=39 // pred_check
        %p263 = pneg %p60
      $region46: #{encoder_layer.5} parent=39 // pred_check_branch
        %265 = sbr.rel (%p263) target = $region48
      $region47: #{encoder_layer.5} parent=39 // pred_region
        %p266 = scmp.lt.s32.totalorder %s14, 1
        %s267 = scalar_select %p266, %s14, 1
        %s268 = scalar_lea.vmem %s1, %s267
      $region48: #{encoder_layer.5} parent=39 // pred_fallthru
        _
    $region40: #{encoder_layer.5} parent=5 // pred_fallthru
      _
    %p269 = scmp.le.s32.totalorder 1, %s14
    %p270 = scmp.lt.s32.totalorder %s14, 3
    %p271 = pnand %p269, %p270
    %p272 = pneg %p271
    // Predicated region
    $region49: #{encoder_layer.5} parent=5 // pred_check
      _
    $region50: #{encoder_layer.5} parent=5 // pred_check_branch
      %274 = sbr.rel (%p271) target = $region52
    $region51: #{encoder_layer.5} parent=5 // pred_region
      %s275 = ssub.s32 %s14, 1
      %p276 = scmp.lt.s32.totalorder %s19, 1
      %s277 = scalar_select %p276, %s19, 1
      %s278 = smul.addr %s277, 2
      %s279 = smul.addr %s278, 8
      %s280 = scalar_lea.vmem %s0, %s279
      %p281 = pneg %p40
      %p282 = pneg %p37
      %p283 = scmp.lt.s32.totalorder %s19, 1
      %s284 = scalar_select %p283, %s19, 1
      %s285 = scalar_lea.vmem %s1, %s284
      %p286 = pneg %p66
      %p287 = pneg %p63
      %p288 = pneg %p87
      %p289 = pneg %p84
      %p290 = pneg %p108
      %p291 = pneg %p105
      %p292 = pneg %p129
      %p293 = pneg %p126
      %p294 = pneg %p150
      %p295 = pneg %p147
      %p296 = pneg %p171
      %p297 = pneg %p168
      %p298 = pneg %p192
      %p299 = pneg %p189
      %p300 = pneg %p218
      %p301 = pneg %p215
      %p302 = scmp.lt.s32.totalorder %s19, 1
      %s303 = scalar_select %p302, %s19, 1
      %s304 = smul.addr %s303, 2
      %s305 = smul.addr %s304, 8
      %s306 = scalar_lea.vmem %s8, %s305
      %p307 = scmp.lt.s32.totalorder %s19, 1
      %s308 = scalar_select %p307, %s19, 1
      %s309 = smul.addr %s308, 2
      %s310 = smul.addr %s309, 8
      %s311 = scalar_lea.vmem %s0, %s310
      %p312 = scmp.lt.s32.totalorder %s19, 1
      %s313 = scalar_select %p312, %s19, 1
      %s314 = scalar_lea.vmem %s1, %s313
      %p315 = scmp.lt.s32.totalorder %s19, 1
      %s316 = scalar_select %p315, %s19, 1
      %s317 = smul.addr %s316, 2
      %s318 = smul.addr %s317, 8
      %s319 = scalar_lea.vmem %s8, %s318
      %v321 = vld [vmem:[%s311] sm:$0xff]
      %v322 = vld [vmem:[%s311 + $0x8] sm:$0xff]
      %v323 = vld [vmem:[%s2] sm:$0x1]
      %v324 = vld [vmem:[%s3] sm:$0x1]
      %325 = vadd.xlane.f32.xlu0 %v321
      %v326 = vpop.xlane.xlu0 %325
      %327 = vadd.xlane.f32.xlu0 %v322
      %v328 = vpop.xlane.xlu0 %327
      %v329 = vrcp.pop 128.0
      %v330 = vmul.f32 128.0, %v329
      %v331 = vsub.f32 1.0, %v330
      %v332 = vmul.f32 %v329, %v331
      %v333 = vadd.f32 %v329, %v332
      %vm334 = vweird.f32 %v329
      %v335 = vsel %vm334, %v329, %v333
      %v336 = vmul.f32 %v326, %v335
      %v337 = vmul.f32 %v328, %v335
      %v338 = vsub.f32 %v321, %v336
      %v339 = vsub.f32 %v322, %v337
      %v340 = vmul.f32 %v338, %v338
      %v341 = vmul.f32 %v339, %v339
      %342 = vadd.xlane.f32.xlu0 %v340
      %v343 = vpop.xlane.xlu0 %342
      %344 = vadd.xlane.f32.xlu0 %v341
      %v345 = vpop.xlane.xlu0 %344
      %v346 = vmul.f32 %v343, %v335
      %v347 = vmul.f32 %v345, %v335
      %v348 = vadd.f32 %v346, 1e-12
      %v349 = vadd.f32 %v347, 1e-12
      %v350 = vrsqrt.pop %v348
      %v351 = vmul.f32 %v350, %v348
      %v352 = vmul.f32 %v351, %v350
      %v353 = vmul.f32 0.5, %v352
      %v354 = vsub.f32 1.5, %v353
      %v355 = vmul.f32 %v350, %v354
      %vm356 = vweird.f32 %v348
      %vm357 = vweird.f32 %v350
      %vm358 = vmor %vm356, %vm357
      %v359 = vsel %vm358, %v350, %v355
      %v360 = vrsqrt.pop %v349
      %v361 = vmul.f32 %v360, %v349
      %v362 = vmul.f32 %v361, %v360
      %v363 = vmul.f32 0.5, %v362
      %v364 = vsub.f32 1.5, %v363
      %v365 = vmul.f32 %v360, %v364
      %vm366 = vweird.f32 %v349
      %vm367 = vweird.f32 %v360
      %vm368 = vmor %vm366, %vm367
      %v369 = vsel %vm368, %v360, %v365
      %v370 = vmul.f32 %v338, %v359
      %v371 = vmul.f32 %v339, %v369
      %v373 = vperm.slane %v323, 0
      %v375 = vmul.f32 %v370, %v373
      %v376 = vmul.f32 %v371, %v373
      %v378 = vperm.slane %v324, 0
      %v380 = vadd.f32 %v375, %v378
      %v381 = vadd.f32 %v376, %v378
      %v382 = vpack.c.bf16 %v381, %v380
      %v383 = vld [vmem:[%s4] sm:$0xff]
      %v384 = vld [vmem:[%s4 + $0x8] sm:$0xf]
      %v385 = vld [vmem:[%s4 + $0xc] sm:$0xff]
      %v386 = vld [vmem:[%s4 + $0x14] sm:$0xf]
      %v387 = vld [vmem:[%s4 + $0x18] sm:$0xff]
      %v388 = vld [vmem:[%s4 + $0x20] sm:$0xf]
      %v389 = vld [vmem:[%s4 + $0x24] sm:$0xff]
      %v390 = vld [vmem:[%s4 + $0x2c] sm:$0xf]
      %v391 = vld [vmem:[%s4 + $0x30] sm:$0xff]
      %v392 = vld [vmem:[%s4 + $0x38] sm:$0xf]
      %v393 = vld [vmem:[%s4 + $0x3c] sm:$0xff]
      %v394 = vld [vmem:[%s4 + $0x44] sm:$0xf]
      %v395 = vld [vmem:[%s4 + $0x48] sm:$0xff]
      %v396 = vld [vmem:[%s4 + $0x50] sm:$0xf]
      %v397 = vld [vmem:[%s4 + $0x54] sm:$0xff]
      %v398 = vld [vmem:[%s4 + $0x5c] sm:$0xf]
      %v399 = vld [vmem:[%s4 + $0x60] sm:$0xff]
      %v400 = vld [vmem:[%s4 + $0x68] sm:$0xf]
      %v401 = vld [vmem:[%s4 + $0x6c] sm:$0xff]
      %v402 = vld [vmem:[%s4 + $0x74] sm:$0xf]
      %v403 = vld [vmem:[%s4 + $0x78] sm:$0xff]
      %v404 = vld [vmem:[%s4 + $0x80] sm:$0xf]
      %v405 = vld [vmem:[%s4 + $0x84] sm:$0xff]
      %v406 = vld [vmem:[%s4 + $0x8c] sm:$0xf]
      %v407 = vld [vmem:[%s4 + $0x90] sm:$0xff]
      %v408 = vld [vmem:[%s4 + $0x98] sm:$0xf]
      %v409 = vld [vmem:[%s4 + $0x9c] sm:$0xff]
      %v410 = vld [vmem:[%s4 + $0xa4] sm:$0xf]
      %v411 = vld [vmem:[%s4 + $0xa8] sm:$0xff]
      %v412 = vld [vmem:[%s4 + $0xb0] sm:$0xf]
      %v413 = vld [vmem:[%s4 + $0xb4] sm:$0xff]
      %v414 = vld [vmem:[%s4 + $0xbc] sm:$0xf]
      %v415 = vld [vmem:[%s5] sm:$0x7]
      %v417 = vperm.slane %v415, 0
      %v418 = vperm.slane %v415, 1
      %v419 = vperm.slane %v415, 2
      %v455 = vunpack.c.l.b16 %v383
      %v456 = vunpack.c.h.b16 %v383
      %v457 = vunpack.c.l.b16 %v384
      %v458 = vunpack.c.l.b16 %v385
      %v459 = vunpack.c.h.b16 %v385
      %v460 = vunpack.c.l.b16 %v386
      %v461 = vunpack.c.l.b16 %v387
      %v462 = vunpack.c.h.b16 %v387
      %v463 = vunpack.c.l.b16 %v388
      %v464 = vunpack.c.l.b16 %v389
      %v465 = vunpack.c.h.b16 %v389
      %v466 = vunpack.c.l.b16 %v390
      %v467 = vunpack.c.l.b16 %v391
      %v468 = vunpack.c.h.b16 %v391
      %v469 = vunpack.c.l.b16 %v392
      %v470 = vunpack.c.l.b16 %v393
      %v471 = vunpack.c.h.b16 %v393
      %v472 = vunpack.c.l.b16 %v394
      %v473 = vunpack.c.l.b16 %v395
      %v474 = vunpack.c.h.b16 %v395
      %v475 = vunpack.c.l.b16 %v396
      %v476 = vunpack.c.l.b16 %v397
      %v477 = vunpack.c.h.b16 %v397
      %v478 = vunpack.c.l.b16 %v398
      %v479 = vunpack.c.l.b16 %v399
      %v480 = vunpack.c.h.b16 %v399
      %v481 = vunpack.c.l.b16 %v400
      %v482 = vunpack.c.l.b16 %v401
      %v483 = vunpack.c.h.b16 %v401
      %v484 = vunpack.c.l.b16 %v402
      %v485 = vunpack.c.l.b16 %v403
      %v486 = vunpack.c.h.b16 %v403
      %v487 = vunpack.c.l.b16 %v404
      %v488 = vunpack.c.l.b16 %v405
      %v489 = vunpack.c.h.b16 %v405
      %v490 = vunpack.c.l.b16 %v406
      %v491 = vunpack.c.l.b16 %v407
      %v492 = vunpack.c.h.b16 %v407
      %v493 = vunpack.c.l.b16 %v408
      %v494 = vunpack.c.l.b16 %v409
      %v495 = vunpack.c.h.b16 %v409
      %v496 = vunpack.c.l.b16 %v410
      %v497 = vunpack.c.l.b16 %v411
      %v498 = vunpack.c.h.b16 %v411
      %v499 = vunpack.c.l.b16 %v412
      %v500 = vunpack.c.l.b16 %v413
      %v501 = vunpack.c.h.b16 %v413
      %v502 = vunpack.c.l.b16 %v414
      %v503 = vpack.c.b16 %v458, %v455
      %v504 = vpack.c.b16 %v459, %v456
      %v505 = vpack.c.b16 %v460, %v457
      %v506 = vpack.c.b16 %v464, %v461
      %v507 = vpack.c.b16 %v465, %v462
      %v508 = vpack.c.b16 %v466, %v463
      %v509 = vpack.c.b16 %v470, %v467
      %v510 = vpack.c.b16 %v471, %v468
      %v511 = vpack.c.b16 %v472, %v469
      %v512 = vpack.c.b16 %v476, %v473
      %v513 = vpack.c.b16 %v477, %v474
      %v514 = vpack.c.b16 %v478, %v475
      %v515 = vpack.c.b16 %v482, %v479
      %v516 = vpack.c.b16 %v483, %v480
      %v517 = vpack.c.b16 %v484, %v481
      %v518 = vpack.c.b16 %v488, %v485
      %v519 = vpack.c.b16 %v489, %v486
      %v520 = vpack.c.b16 %v490, %v487
      %v521 = vpack.c.b16 %v494, %v491
      %v522 = vpack.c.b16 %v495, %v492
      %v523 = vpack.c.b16 %v496, %v493
      %v524 = vpack.c.b16 %v500, %v497
      %v525 = vpack.c.b16 %v501, %v498
      %v526 = vpack.c.b16 %v502, %v499
      %551 = vmatpush.bf16.msra.mxu0 %v524
      %552 = vmatpush.bf16.msra.mxu0 %v521
      %553 = vmatpush.bf16.msra.mxu0 %v518
      %554 = vmatpush.bf16.msra.mxu0 %v515
      %555 = vmatpush.bf16.msra.mxu0 %v512
      %556 = vmatpush.bf16.msra.mxu0 %v509
      %557 = vmatpush.bf16.msra.mxu0 %v506
      %558 = vmatpush.bf16.msra.mxu0 %v503
      %559 = vmatmul.bf16.gmra.mxu0 %v382
      %v560 = vpop.f32.mrf.mxu0
      %v561 = vadd.f32 %v417, %v560
      %v562 = vpop.f32.mrf.mxu0
      %v563 = vadd.f32 %v417, %v562
      %564 = vdwg.mxu0
      %565 = vmatpush.bf16.msra.mxu0 %v525
      %566 = vmatpush.bf16.msra.mxu0 %v522
      %567 = vmatpush.bf16.msra.mxu0 %v519
      %568 = vmatpush.bf16.msra.mxu0 %v516
      %569 = vmatpush.bf16.msra.mxu0 %v513
      %570 = vmatpush.bf16.msra.mxu0 %v510
      %571 = vmatpush.bf16.msra.mxu0 %v507
      %572 = vmatpush.bf16.msra.mxu0 %v504
      %573 = vmatmul.bf16.gmra.mxu0 %v382
      %v574 = vpop.f32.mrf.mxu0
      %v575 = vadd.f32 %v418, %v574
      %v576 = vpop.f32.mrf.mxu0
      %v577 = vadd.f32 %v418, %v576
      %578 = vdwg.mxu0
      %579 = vmatpush.bf16.msra.mxu0 %v526
      %580 = vmatpush.bf16.msra.mxu0 %v523
      %581 = vmatpush.bf16.msra.mxu0 %v520
      %582 = vmatpush.bf16.msra.mxu0 %v517
      %583 = vmatpush.bf16.msra.mxu0 %v514
      %584 = vmatpush.bf16.msra.mxu0 %v511
      %585 = vmatpush.bf16.msra.mxu0 %v508
      %586 = vmatpush.bf16.msra.mxu0 %v505
      %587 = vmatmul.bf16.gmra.mxu0 %v382
      %v588 = vpop.f32.mrf.mxu0
      %v589 = vadd.f32 %v419, %v588
      %v590 = vpop.f32.mrf.mxu0
      %v591 = vadd.f32 %v419, %v590
      %592 = vdwg.mxu0
      %v593 = vpack.c.bf16 %v575, %v561
      %v594 = vpack.c.bf16 %v589, %v589
      %v595 = vpack.c.bf16 %v577, %v563
      %v596 = vpack.c.bf16 %v591, %v591
      %v597 = vld [vmem:[%s314] sm:$0x1]
      %vm598 = vcmp.gt.f32.partialorder %v597, 0.0
      %v601 = vunpack.c.l.b16 %v593
      %v602 = vunpack.c.l.b16 %v595
      %v603 = vpack.c.b16 %v602, %v601
      %v604 = vunpack.c.h.b16 %v593
      %v605 = vunpack.c.h.b16 %v595
      %v606 = vpack.c.b16 %v605, %v604
      %vm607 = vcmask 261120
      %v609 = vsel %vm607, %v603, 0
      %v612 = vsel %vm607, %v606, 0
      %614 = vmatpush.bf16.xpose.msra.mxu0 0
      %615 = vmatpush.bf16.xpose.msra.mxu0 0
      %616 = vmatpush.bf16.xpose.msra.mxu0 0
      %617 = vmatpush.bf16.xpose.msra.mxu0 0
      %618 = vmatpush.bf16.xpose.msra.mxu0 0
      %619 = vmatpush.bf16.xpose.msra.mxu0 0
      %620 = vmatpush.bf16.xpose.msra.mxu0 0
      %621 = vmatpush.bf16.xpose.msra.mxu0 %v612
      %622 = vmatmul.bf16.gmra.mxu0 %v609
      %v623 = vpop.f32.mrf.mxu0
      %v624 = vadd.f32 0.0, %v623
      %v625 = vpop.f32.mrf.mxu0
      %v626 = vadd.f32 0.0, %v625
      %627 = vdwg.mxu0
      %v628 = vsel %vm598, 1, 0
      %v629 = vperm.slane %v628, 0
      %vm630 = vcmp.eq.s32.totalorder %v629, 1
      %v631 = vsel %vm630, %v624, -1e+30
      %v632 = vsel %vm630, %v626, -1e+30
      %vm633 = vcmask 130048
      %v634 = vsel %vm633, %v631, -inf
      %635 = vmax.xlane.f32.xlu0 %v634
      %v636 = vpop.xlane.xlu0 %635
      %v637 = vsel %vm633, %v632, -inf
      %638 = vmax.xlane.f32.xlu0 %v637
      %v639 = vpop.xlane.xlu0 %638
      %v640 = vsub.f32 %v631, %v636
      %v641 = vsub.f32 %v632, %v639
      %v642 = vmul.f32 %v640, 1.442695
      %v643 = vpow.pop %v642
      %v644 = vmul.f32 %v641, 1.442695
      %v645 = vpow.pop %v644
      %v646 = vsel %vm633, %v643, 0.0
      %647 = vadd.xlane.f32.xlu0 %v646
      %v648 = vpop.xlane.xlu0 %647
      %v649 = vsel %vm633, %v645, 0.0
      %650 = vadd.xlane.f32.xlu0 %v649
      %v651 = vpop.xlane.xlu0 %650
      %v652 = vrcp.pop %v648
      %v653 = vmul.f32 %v648, %v652
      %v654 = vsub.f32 1.0, %v653
      %v655 = vmul.f32 %v652, %v654
      %v656 = vadd.f32 %v652, %v655
      %vm657 = vweird.f32 %v648
      %vm658 = vweird.f32 %v652
      %vm659 = vmor %vm657, %vm658
      %v660 = vsel %vm659, %v652, %v656
      %v661 = vand.u32 2147483647, %v648
      %vm662 = vcmp.eq.f32.partialorder %v661, 8.507059e+37
      %v663 = vand.u32 %v648, 2147483648
      %v664 = vor.u32 1.1754944e-38, %v663
      %v665 = vsel %vm662, %v664, %v660
      %v666 = vmul.f32 %v643, %v665
      %v667 = vrcp.pop %v651
      %v668 = vmul.f32 %v651, %v667
      %v669 = vsub.f32 1.0, %v668
      %v670 = vmul.f32 %v667, %v669
      %v671 = vadd.f32 %v667, %v670
      %vm672 = vweird.f32 %v651
      %vm673 = vweird.f32 %v667
      %vm674 = vmor %vm672, %vm673
      %v675 = vsel %vm674, %v667, %v671
      %v676 = vand.u32 2147483647, %v651
      %vm677 = vcmp.eq.f32.partialorder %v676, 8.507059e+37
      %v678 = vand.u32 %v651, 2147483648
      %v679 = vor.u32 1.1754944e-38, %v678
      %v680 = vsel %vm677, %v679, %v675
      %v681 = vmul.f32 %v645, %v680
      %v682 = vsel %vm630, %v666, 0.0
      %v683 = vsel %vm630, %v681, 0.0
      %v684 = vpack.c.bf16 %v683, %v682
      %v687 = vunpack.c.l.b16 %v594
      %v688 = vunpack.c.l.b16 %v596
      %v689 = vpack.c.b16 %v688, %v687
      %v692 = vsel %vm633, %v684, 0
      %694 = vmatpush.bf16.msra.mxu0 0
      %695 = vmatpush.bf16.msra.mxu0 0
      %696 = vmatpush.bf16.msra.mxu0 0
      %697 = vmatpush.bf16.msra.mxu0 0
      %698 = vmatpush.bf16.msra.mxu0 0
      %699 = vmatpush.bf16.msra.mxu0 0
      %700 = vmatpush.bf16.msra.mxu0 0
      %701 = vmatpush.bf16.msra.mxu0 %v689
      %702 = vmatmul.bf16.gmra.mxu0 %v692
      %v703 = vpop.f32.mrf.mxu0
      %v704 = vadd.f32 0.0, %v703
      %v705 = vpop.f32.mrf.mxu0
      %v706 = vadd.f32 0.0, %v705
      %707 = vdwg.mxu0
      %708 = vrot.lane.b32.xlu0 %v603, 96
      %v709 = vpop.permute.xlu0 %708
      %710 = vrot.lane.b32.xlu0 %v606, 96
      %v711 = vpop.permute.xlu0 %710
      %v713 = vsel %vm607, %v709, 0
      %v716 = vsel %vm607, %v711, 0
      %718 = vmatpush.bf16.xpose.msra.mxu0 0
      %719 = vmatpush.bf16.xpose.msra.mxu0 0
      %720 = vmatpush.bf16.xpose.msra.mxu0 0
      %721 = vmatpush.bf16.xpose.msra.mxu0 0
      %722 = vmatpush.bf16.xpose.msra.mxu0 0
      %723 = vmatpush.bf16.xpose.msra.mxu0 0
      %724 = vmatpush.bf16.xpose.msra.mxu0 0
      %725 = vmatpush.bf16.xpose.msra.mxu0 %v716
      %726 = vmatmul.bf16.gmra.mxu0 %v713
      %v727 = vpop.f32.mrf.mxu0
      %v728 = vadd.f32 0.0, %v727
      %v729 = vpop.f32.mrf.mxu0
      %v730 = vadd.f32 0.0, %v729
      %731 = vdwg.mxu0
      %v732 = vsel %vm630, %v728, -1e+30
      %v733 = vsel %vm630, %v730, -1e+30
      %v734 = vsel %vm633, %v732, -inf
      %735 = vmax.xlane.f32.xlu0 %v734
      %v736 = vpop.xlane.xlu0 %735
      %v737 = vsel %vm633, %v733, -inf
      %738 = vmax.xlane.f32.xlu0 %v737
      %v739 = vpop.xlane.xlu0 %738
      %v740 = vsub.f32 %v732, %v736
      %v741 = vsub.f32 %v733, %v739
      %v742 = vmul.f32 %v740, 1.442695
      %v743 = vpow.pop %v742
      %v744 = vmul.f32 %v741, 1.442695
      %v745 = vpow.pop %v744
      %v746 = vsel %vm633, %v743, 0.0
      %747 = vadd.xlane.f32.xlu0 %v746
      %v748 = vpop.xlane.xlu0 %747
      %v749 = vsel %vm633, %v745, 0.0
      %750 = vadd.xlane.f32.xlu0 %v749
      %v751 = vpop.xlane.xlu0 %750
      %v752 = vrcp.pop %v748
      %v753 = vmul.f32 %v748, %v752
      %v754 = vsub.f32 1.0, %v753
      %v755 = vmul.f32 %v752, %v754
      %v756 = vadd.f32 %v752, %v755
      %vm757 = vweird.f32 %v748
      %vm758 = vweird.f32 %v752
      %vm759 = vmor %vm757, %vm758
      %v760 = vsel %vm759, %v752, %v756
      %v761 = vand.u32 2147483647, %v748
      %vm762 = vcmp.eq.f32.partialorder %v761, 8.507059e+37
      %v763 = vand.u32 %v748, 2147483648
      %v764 = vor.u32 1.1754944e-38, %v763
      %v765 = vsel %vm762, %v764, %v760
      %v766 = vmul.f32 %v743, %v765
      %v767 = vrcp.pop %v751
      %v768 = vmul.f32 %v751, %v767
      %v769 = vsub.f32 1.0, %v768
      %v770 = vmul.f32 %v767, %v769
      %v771 = vadd.f32 %v767, %v770
      %vm772 = vweird.f32 %v751
      %vm773 = vweird.f32 %v767
      %vm774 = vmor %vm772, %vm773
      %v775 = vsel %vm774, %v767, %v771
      %v776 = vand.u32 2147483647, %v751
      %vm777 = vcmp.eq.f32.partialorder %v776, 8.507059e+37
      %v778 = vand.u32 %v751, 2147483648
      %v779 = vor.u32 1.1754944e-38, %v778
      %v780 = vsel %vm777, %v779, %v775
      %v781 = vmul.f32 %v745, %v780
      %v782 = vsel %vm630, %v766, 0.0
      %v783 = vsel %vm630, %v781, 0.0
      %v784 = vpack.c.bf16 %v783, %v782
      %785 = vrot.lane.b32.xlu0 %v689, 96
      %v786 = vpop.permute.xlu0 %785
      %v789 = vsel %vm633, %v784, 0
      %791 = vmatpush.bf16.msra.mxu0 0
      %792 = vmatpush.bf16.msra.mxu0 0
      %793 = vmatpush.bf16.msra.mxu0 0
      %794 = vmatpush.bf16.msra.mxu0 0
      %795 = vmatpush.bf16.msra.mxu0 0
      %796 = vmatpush.bf16.msra.mxu0 0
      %797 = vmatpush.bf16.msra.mxu0 0
      %798 = vmatpush.bf16.msra.mxu0 %v786
      %799 = vmatmul.bf16.gmra.mxu0 %v789
      %v800 = vpop.f32.mrf.mxu0
      %v801 = vadd.f32 0.0, %v800
      %v802 = vpop.f32.mrf.mxu0
      %v803 = vadd.f32 0.0, %v802
      %804 = vdwg.mxu0
      %805 = vrot.lane.b32.xlu0 %v603, 64
      %v806 = vpop.permute.xlu0 %805
      %807 = vrot.lane.b32.xlu0 %v606, 64
      %v808 = vpop.permute.xlu0 %807
      %v810 = vsel %vm607, %v806, 0
      %v813 = vsel %vm607, %v808, 0
      %815 = vmatpush.bf16.xpose.msra.mxu0 0
      %816 = vmatpush.bf16.xpose.msra.mxu0 0
      %817 = vmatpush.bf16.xpose.msra.mxu0 0
      %818 = vmatpush.bf16.xpose.msra.mxu0 0
      %819 = vmatpush.bf16.xpose.msra.mxu0 0
      %820 = vmatpush.bf16.xpose.msra.mxu0 0
      %821 = vmatpush.bf16.xpose.msra.mxu0 0
      %822 = vmatpush.bf16.xpose.msra.mxu0 %v813
      %823 = vmatmul.bf16.gmra.mxu0 %v810
      %v824 = vpop.f32.mrf.mxu0
      %v825 = vadd.f32 0.0, %v824
      %v826 = vpop.f32.mrf.mxu0
      %v827 = vadd.f32 0.0, %v826
      %828 = vdwg.mxu0
      %v829 = vsel %vm630, %v825, -1e+30
      %v830 = vsel %vm630, %v827, -1e+30
      %v831 = vsel %vm633, %v829, -inf
      %832 = vmax.xlane.f32.xlu0 %v831
      %v833 = vpop.xlane.xlu0 %832
      %v834 = vsel %vm633, %v830, -inf
      %835 = vmax.xlane.f32.xlu0 %v834
      %v836 = vpop.xlane.xlu0 %835
      %v837 = vsub.f32 %v829, %v833
      %v838 = vsub.f32 %v830, %v836
      %v839 = vmul.f32 %v837, 1.442695
      %v840 = vpow.pop %v839
      %v841 = vmul.f32 %v838, 1.442695
      %v842 = vpow.pop %v841
      %v843 = vsel %vm633, %v840, 0.0
      %844 = vadd.xlane.f32.xlu0 %v843
      %v845 = vpop.xlane.xlu0 %844
      %v846 = vsel %vm633, %v842, 0.0
      %847 = vadd.xlane.f32.xlu0 %v846
      %v848 = vpop.xlane.xlu0 %847
      %v849 = vrcp.pop %v845
      %v850 = vmul.f32 %v845, %v849
      %v851 = vsub.f32 1.0, %v850
      %v852 = vmul.f32 %v849, %v851
      %v853 = vadd.f32 %v849, %v852
      %vm854 = vweird.f32 %v845
      %vm855 = vweird.f32 %v849
      %vm856 = vmor %vm854, %vm855
      %v857 = vsel %vm856, %v849, %v853
      %v858 = vand.u32 2147483647, %v845
      %vm859 = vcmp.eq.f32.partialorder %v858, 8.507059e+37
      %v860 = vand.u32 %v845, 2147483648
      %v861 = vor.u32 1.1754944e-38, %v860
      %v862 = vsel %vm859, %v861, %v857
      %v863 = vmul.f32 %v840, %v862
      %v864 = vrcp.pop %v848
      %v865 = vmul.f32 %v848, %v864
      %v866 = vsub.f32 1.0, %v865
      %v867 = vmul.f32 %v864, %v866
      %v868 = vadd.f32 %v864, %v867
      %vm869 = vweird.f32 %v848
      %vm870 = vweird.f32 %v864
      %vm871 = vmor %vm869, %vm870
      %v872 = vsel %vm871, %v864, %v868
      %v873 = vand.u32 2147483647, %v848
      %vm874 = vcmp.eq.f32.partialorder %v873, 8.507059e+37
      %v875 = vand.u32 %v848, 2147483648
      %v876 = vor.u32 1.1754944e-38, %v875
      %v877 = vsel %vm874, %v876, %v872
      %v878 = vmul.f32 %v842, %v877
      %v879 = vsel %vm630, %v863, 0.0
      %v880 = vsel %vm630, %v878, 0.0
      %v881 = vpack.c.bf16 %v880, %v879
      %882 = vrot.lane.b32.xlu0 %v689, 64
      %v883 = vpop.permute.xlu0 %882
      %v886 = vsel %vm633, %v881, 0
      %888 = vmatpush.bf16.msra.mxu0 0
      %889 = vmatpush.bf16.msra.mxu0 0
      %890 = vmatpush.bf16.msra.mxu0 0
      %891 = vmatpush.bf16.msra.mxu0 0
      %892 = vmatpush.bf16.msra.mxu0 0
      %893 = vmatpush.bf16.msra.mxu0 0
      %894 = vmatpush.bf16.msra.mxu0 0
      %895 = vmatpush.bf16.msra.mxu0 %v883
      %896 = vmatmul.bf16.gmra.mxu0 %v886
      %v897 = vpop.f32.mrf.mxu0
      %v898 = vadd.f32 0.0, %v897
      %v899 = vpop.f32.mrf.mxu0
      %v900 = vadd.f32 0.0, %v899
      %901 = vdwg.mxu0
      %902 = vrot.lane.b32.xlu0 %v603, 32
      %v903 = vpop.permute.xlu0 %902
      %904 = vrot.lane.b32.xlu0 %v606, 32
      %v905 = vpop.permute.xlu0 %904
      %v907 = vsel %vm607, %v903, 0
      %v910 = vsel %vm607, %v905, 0
      %912 = vmatpush.bf16.xpose.msra.mxu0 0
      %913 = vmatpush.bf16.xpose.msra.mxu0 0
      %914 = vmatpush.bf16.xpose.msra.mxu0 0
      %915 = vmatpush.bf16.xpose.msra.mxu0 0
      %916 = vmatpush.bf16.xpose.msra.mxu0 0
      %917 = vmatpush.bf16.xpose.msra.mxu0 0
      %918 = vmatpush.bf16.xpose.msra.mxu0 0
      %919 = vmatpush.bf16.xpose.msra.mxu0 %v910
      %920 = vmatmul.bf16.gmra.mxu0 %v907
      %v921 = vpop.f32.mrf.mxu0
      %v922 = vadd.f32 0.0, %v921
      %v923 = vpop.f32.mrf.mxu0
      %v924 = vadd.f32 0.0, %v923
      %925 = vdwg.mxu0
      %v926 = vsel %vm630, %v922, -1e+30
      %v927 = vsel %vm630, %v924, -1e+30
      %v928 = vsel %vm633, %v926, -inf
      %929 = vmax.xlane.f32.xlu0 %v928
      %v930 = vpop.xlane.xlu0 %929
      %v931 = vsel %vm633, %v927, -inf
      %932 = vmax.xlane.f32.xlu0 %v931
      %v933 = vpop.xlane.xlu0 %932
      %v934 = vsub.f32 %v926, %v930
      %v935 = vsub.f32 %v927, %v933
      %v936 = vmul.f32 %v934, 1.442695
      %v937 = vpow.pop %v936
      %v938 = vmul.f32 %v935, 1.442695
      %v939 = vpow.pop %v938
      %v940 = vsel %vm633, %v937, 0.0
      %941 = vadd.xlane.f32.xlu0 %v940
      %v942 = vpop.xlane.xlu0 %941
      %v943 = vsel %vm633, %v939, 0.0
      %944 = vadd.xlane.f32.xlu0 %v943
      %v945 = vpop.xlane.xlu0 %944
      %v946 = vrcp.pop %v942
      %v947 = vmul.f32 %v942, %v946
      %v948 = vsub.f32 1.0, %v947
      %v949 = vmul.f32 %v946, %v948
      %v950 = vadd.f32 %v946, %v949
      %vm951 = vweird.f32 %v942
      %vm952 = vweird.f32 %v946
      %vm953 = vmor %vm951, %vm952
      %v954 = vsel %vm953, %v946, %v950
      %v955 = vand.u32 2147483647, %v942
      %vm956 = vcmp.eq.f32.partialorder %v955, 8.507059e+37
      %v957 = vand.u32 %v942, 2147483648
      %v958 = vor.u32 1.1754944e-38, %v957
      %v959 = vsel %vm956, %v958, %v954
      %v960 = vmul.f32 %v937, %v959
      %v961 = vrcp.pop %v945
      %v962 = vmul.f32 %v945, %v961
      %v963 = vsub.f32 1.0, %v962
      %v964 = vmul.f32 %v961, %v963
      %v965 = vadd.f32 %v961, %v964
      %vm966 = vweird.f32 %v945
      %vm967 = vweird.f32 %v961
      %vm968 = vmor %vm966, %vm967
      %v969 = vsel %vm968, %v961, %v965
      %v970 = vand.u32 2147483647, %v945
      %vm971 = vcmp.eq.f32.partialorder %v970, 8.507059e+37
      %v972 = vand.u32 %v945, 2147483648
      %v973 = vor.u32 1.1754944e-38, %v972
      %v974 = vsel %vm971, %v973, %v969
      %v975 = vmul.f32 %v939, %v974
      %v976 = vsel %vm630, %v960, 0.0
      %v977 = vsel %vm630, %v975, 0.0
      %v978 = vpack.c.bf16 %v977, %v976
      %979 = vrot.lane.b32.xlu0 %v689, 32
      %v980 = vpop.permute.xlu0 %979
      %v983 = vsel %vm633, %v978, 0
      %985 = vmatpush.bf16.msra.mxu0 0
      %986 = vmatpush.bf16.msra.mxu0 0
      %987 = vmatpush.bf16.msra.mxu0 0
      %988 = vmatpush.bf16.msra.mxu0 0
      %989 = vmatpush.bf16.msra.mxu0 0
      %990 = vmatpush.bf16.msra.mxu0 0
      %991 = vmatpush.bf16.msra.mxu0 0
      %992 = vmatpush.bf16.msra.mxu0 %v980
      %993 = vmatmul.bf16.gmra.mxu0 %v983
      %v994 = vpop.f32.mrf.mxu0
      %v995 = vadd.f32 0.0, %v994
      %v996 = vpop.f32.mrf.mxu0
      %v997 = vadd.f32 0.0, %v996
      %998 = vdwg.mxu0
      %1001 = vrot.lane.b32.xlu0 %v801, 32
      %v1002 = vpop.permute.xlu0 %1001
      %1003 = vrot.lane.b32.xlu0 %v803, 32
      %v1004 = vpop.permute.xlu0 %1003
      %1009 = vrot.lane.b32.xlu0 %v898, 64
      %v1010 = vpop.permute.xlu0 %1009
      %1011 = vrot.lane.b32.xlu0 %v900, 64
      %v1012 = vpop.permute.xlu0 %1011
      %1017 = vrot.lane.b32.xlu0 %v995, 96
      %v1018 = vpop.permute.xlu0 %1017
      %1019 = vrot.lane.b32.xlu0 %v997, 96
      %v1020 = vpop.permute.xlu0 %1019
      %v1023 = vsel %vm607, %v704, %v1002
      %v1024 = vsel %vm607, %v706, %v1004
      %vm1025 = vcmask 523264
      %v1026 = vsel %vm1025, %v1023, %v1010
      %v1027 = vsel %vm1025, %v1024, %v1012
      %vm1028 = vcmask 785408
      %v1029 = vsel %vm1028, %v1026, %v1018
      %v1030 = vsel %vm1028, %v1027, %v1020
      %v1031 = vpack.c.bf16 %v1030, %v1029
      %v1032 = vld [vmem:[%s6] sm:$0xf]
      %v1033 = vld [vmem:[%s6 + $0x4] sm:$0xf]
      %v1034 = vld [vmem:[%s6 + $0x8] sm:$0xf]
      %v1035 = vld [vmem:[%s6 + $0xc] sm:$0xf]
      %v1036 = vld [vmem:[%s6 + $0x10] sm:$0xf]
      %v1037 = vld [vmem:[%s6 + $0x14] sm:$0xf]
      %v1038 = vld [vmem:[%s6 + $0x18] sm:$0xf]
      %v1039 = vld [vmem:[%s6 + $0x1c] sm:$0xf]
      %v1040 = vld [vmem:[%s6 + $0x20] sm:$0xf]
      %v1041 = vld [vmem:[%s6 + $0x24] sm:$0xf]
      %v1042 = vld [vmem:[%s6 + $0x28] sm:$0xf]
      %v1043 = vld [vmem:[%s6 + $0x2c] sm:$0xf]
      %v1044 = vld [vmem:[%s6 + $0x30] sm:$0xf]
      %v1045 = vld [vmem:[%s6 + $0x34] sm:$0xf]
      %v1046 = vld [vmem:[%s6 + $0x38] sm:$0xf]
      %v1047 = vld [vmem:[%s6 + $0x3c] sm:$0xf]
      %v1048 = vld [vmem:[%s7] sm:$0x1]
      %v1050 = vperm.slane %v1048, 0
      %v1068 = vunpack.c.l.b16 %v1032
      %v1069 = vunpack.c.l.b16 %v1033
      %v1070 = vunpack.c.l.b16 %v1034
      %v1071 = vunpack.c.l.b16 %v1035
      %v1072 = vunpack.c.l.b16 %v1036
      %v1073 = vunpack.c.l.b16 %v1037
      %v1074 = vunpack.c.l.b16 %v1038
      %v1075 = vunpack.c.l.b16 %v1039
      %v1076 = vunpack.c.l.b16 %v1040
      %v1077 = vunpack.c.l.b16 %v1041
      %v1078 = vunpack.c.l.b16 %v1042
      %v1079 = vunpack.c.l.b16 %v1043
      %v1080 = vunpack.c.l.b16 %v1044
      %v1081 = vunpack.c.l.b16 %v1045
      %v1082 = vunpack.c.l.b16 %v1046
      %v1083 = vunpack.c.l.b16 %v1047
      %v1084 = vpack.c.b16 %v1069, %v1068
      %v1085 = vpack.c.b16 %v1071, %v1070
      %v1086 = vpack.c.b16 %v1073, %v1072
      %v1087 = vpack.c.b16 %v1075, %v1074
      %v1088 = vpack.c.b16 %v1077, %v1076
      %v1089 = vpack.c.b16 %v1079, %v1078
      %v1090 = vpack.c.b16 %v1081, %v1080
      %v1091 = vpack.c.b16 %v1083, %v1082
      %1100 = vmatpush.bf16.msra.mxu0 %v1091
      %1101 = vmatpush.bf16.msra.mxu0 %v1090
      %1102 = vmatpush.bf16.msra.mxu0 %v1089
      %1103 = vmatpush.bf16.msra.mxu0 %v1088
      %1104 = vmatpush.bf16.msra.mxu0 %v1087
      %1105 = vmatpush.bf16.msra.mxu0 %v1086
      %1106 = vmatpush.bf16.msra.mxu0 %v1085
      %1107 = vmatpush.bf16.msra.mxu0 %v1084
      %1108 = vmatmul.bf16.gmra.mxu0 %v1031
      %v1109 = vpop.f32.mrf.mxu0
      %v1110 = vadd.f32 %v1050, %v1109
      %v1111 = vpop.f32.mrf.mxu0
      %v1112 = vadd.f32 %v1050, %v1111
      %1113 = vdwg.mxu0
      %v1114 = vadd.f32 %v321, %v1110
      %v1115 = vadd.f32 %v322, %v1112
      %1116 = vst [vmem:[%s319] sm:$0xff] %v1114
      %1117 = vst [vmem:[%s319 + $0x8] sm:$0xff] %v1115
      %p1118 = scmp.lt.s32.totalorder %s19, 1
      %s1119 = scalar_select %p1118, %s19, 1
      %s1120 = smul.addr %s1119, 2
      %s1121 = smul.addr %s1120, 8
      %s1122 = scalar_lea.vmem %s8, %s1121
      // Predicated region
      $region53: #{encoder_layer.5} parent=51 // pred_check
        %p1123 = pneg %p215
      $region54: #{encoder_layer.5} parent=51 // pred_check_branch
        %1125 = sbr.rel (%p1123) target = $region56
      $region55: #{encoder_layer.5} parent=51 // pred_region
        _
      $region56: #{encoder_layer.5} parent=51 // pred_fallthru
        _
    $region52: #{encoder_layer.5} parent=5 // pred_fallthru
      _
    %p1126 = scmp.le.s32.totalorder 2, %s14
    // Predicated region
    $region57: #{encoder_layer.5} parent=5 // pred_check
      %p1127 = pneg %p1126
    $region58: #{encoder_layer.5} parent=5 // pred_check_branch
      %1129 = sbr.rel (%p1127) target = $region60
    $region59: #{encoder_layer.5} parent=5 // pred_region
      %s1130 = ssub.s32 %s14, 2
      // Predicated region
      $region61: #{encoder_layer.5} parent=59 // pred_check
        %p1131 = pneg %p221
      $region62: #{encoder_layer.5} parent=59 // pred_check_branch
        %1133 = sbr.rel (%p1131) target = $region64
      $region63: #{encoder_layer.5} parent=59 // pred_region
        %p1134 = scmp.lt.s32.totalorder %s20, 1
        %s1135 = scalar_select %p1134, %s20, 1
        %s1136 = smul.addr %s1135, 2
        %s1137 = smul.addr %s1136, 8
        %s1138 = scalar_lea.vmem %s8, %s1137
      $region64: #{encoder_layer.5} parent=59 // pred_fallthru
        _
    $region60: #{encoder_layer.5} parent=5 // pred_fallthru
      _
  $region6: #{encoder_layer.5} parent=0 // loop_footer
    %s18 = sadd.s32 1, %s14
  $region7: #{encoder_layer.5} parent=0 // loop_footer_branch
    %13 = sbr.rel target = $region3
  $region8: #{encoder_layer.5} parent=0 // loop_exit
    _

// kernel: encoder_layer.7
$region0: #{encoder_layer.7}
  #allocation0 [shape = 'u32[]', space=smem, size = 0x4, offset = 0x4, fixed_abs, tag = 'smem constant byte address 0x4 - core index']
  #allocation1 [shape = 'u32[72,128]{1,0:T(1,128)}', space=vmem, size = 0x9000, scoped, tag = 'internal scratch']
  %s0 = inlined_call_operand.vmem [shape: f32[32,128], index: 0, kind: input, shape index: {}]
  %s1 = inlined_call_operand.vmem [shape: f32[1,128], index: 1, kind: input, shape index: {}]
  %s2 = inlined_call_operand.vmem [shape: f32[1,128], index: 2, kind: input, shape index: {}]
  %s3 = inlined_call_operand.vmem [shape: bf16[128,256], index: 3, kind: input, shape index: {}]
  %s4 = inlined_call_operand.vmem [shape: f32[1,256], index: 4, kind: input, shape index: {}]
  %s5 = inlined_call_operand.vmem [shape: bf16[256,128], index: 5, kind: input, shape index: {}]
  %s6 = inlined_call_operand.vmem [shape: f32[1,128], index: 6, kind: input, shape index: {}]
  %s7 = inlined_call_operand.vmem [shape: f32[1,128], index: 7, kind: input, shape index: {}]
  %s8 = inlined_call_operand.vmem [shape: f32[1,128], index: 8, kind: input, shape index: {}]
  %s9 = inlined_call_operand.hbm [shape: f32[32,128], index: 9, kind: output, shape index: {}]
  %s10 = sld [smem:[#allocation0]]
  $region46: #{encoder_layer.7} parent=0
    _
  %s12 = ssub.s32 1, %s10
  %s13 = scalar_select 0, %s12, %s10
  $region1: #{encoder_layer.7} parent=0
    #allocation2 [shape = 'u8[16384]{0}', space=vmem, size = 0x4000, scoped, tag = 'output window, operand 0, single buffered']
    #allocation3 [shape = 's32[1]{0}', space=sflag, size = 0x4, scoped, tag = 'scoped memory for encoder_layer.7']
    %14 = vsyncpa [#allocation3], 0
    // Predicated region
    $region2: #{encoder_layer.7} parent=1 // pred_check
      _
    $region3: #{encoder_layer.7} parent=1 // pred_check_branch
      %16 = sbr.rel (0) target = $region5
    $region4: #{encoder_layer.7} parent=1 // pred_region
      _
    $region5: #{encoder_layer.7} parent=1 // pred_fallthru
      _
    // Predicated region
    $region6: #{encoder_layer.7} parent=1 // pred_check
      _
    $region7: #{encoder_layer.7} parent=1 // pred_check_branch
      %18 = sbr.rel (0) target = $region9
    $region8: #{encoder_layer.7} parent=1 // pred_region
      _
    $region9: #{encoder_layer.7} parent=1 // pred_fallthru
      _
    // Predicated region
    $region10: #{encoder_layer.7} parent=1 // pred_check
      _
    $region11: #{encoder_layer.7} parent=1 // pred_check_branch
      %20 = sbr.rel (0) target = $region13
    $region12: #{encoder_layer.7} parent=1 // pred_region
      _
    $region13: #{encoder_layer.7} parent=1 // pred_fallthru
      _
    // Predicated region
    $region14: #{encoder_layer.7} parent=1 // pred_check
      _
    $region15: #{encoder_layer.7} parent=1 // pred_check_branch
      %22 = sbr.rel (0) target = $region17
    $region16: #{encoder_layer.7} parent=1 // pred_region
      _
    $region17: #{encoder_layer.7} parent=1 // pred_fallthru
      _
    // Predicated region
    $region18: #{encoder_layer.7} parent=1 // pred_check
      _
    $region19: #{encoder_layer.7} parent=1 // pred_check_branch
      %24 = sbr.rel (0) target = $region21
    $region20: #{encoder_layer.7} parent=1 // pred_region
      _
    $region21: #{encoder_layer.7} parent=1 // pred_fallthru
      _
    // Predicated region
    $region22: #{encoder_layer.7} parent=1 // pred_check
      _
    $region23: #{encoder_layer.7} parent=1 // pred_check_branch
      %26 = sbr.rel (0) target = $region25
    $region24: #{encoder_layer.7} parent=1 // pred_region
      _
    $region25: #{encoder_layer.7} parent=1 // pred_fallthru
      _
    // Predicated region
    $region26: #{encoder_layer.7} parent=1 // pred_check
      _
    $region27: #{encoder_layer.7} parent=1 // pred_check_branch
      %28 = sbr.rel (0) target = $region29
    $region28: #{encoder_layer.7} parent=1 // pred_region
      _
    $region29: #{encoder_layer.7} parent=1 // pred_fallthru
      _
    // Predicated region
    $region30: #{encoder_layer.7} parent=1 // pred_check
      _
    $region31: #{encoder_layer.7} parent=1 // pred_check_branch
      %30 = sbr.rel (0) target = $region33
    $region32: #{encoder_layer.7} parent=1 // pred_region
      _
    $region33: #{encoder_layer.7} parent=1 // pred_fallthru
      _
    // Predicated region
    $region34: #{encoder_layer.7} parent=1 // pred_check
      _
    $region35: #{encoder_layer.7} parent=1 // pred_check_branch
      %32 = sbr.rel (0) target = $region37
    $region36: #{encoder_layer.7} parent=1 // pred_region
      _
    $region37: #{encoder_layer.7} parent=1 // pred_fallthru
      _
    %v33 = vld [vmem:[%s0] sm:$0xff]
    %v34 = vld [vmem:[%s0 + $0x8] sm:$0xff]
    %v35 = vld [vmem:[%s0 + $0x10] sm:$0xff]
    %v36 = vld [vmem:[%s0 + $0x18] sm:$0xff]
    %v37 = vld [vmem:[%s1] sm:$0x1]
    %v38 = vld [vmem:[%s2] sm:$0x1]
    %39 = vadd.xlane.f32.xlu0 %v33
    %v40 = vpop.xlane.xlu0 %39
    %41 = vadd.xlane.f32.xlu0 %v34
    %v42 = vpop.xlane.xlu0 %41
    %43 = vadd.xlane.f32.xlu0 %v35
    %v44 = vpop.xlane.xlu0 %43
    %45 = vadd.xlane.f32.xlu0 %v36
    %v46 = vpop.xlane.xlu0 %45
    %v47 = vrcp.pop 128.0
    %v48 = vmul.f32 128.0, %v47
    %v49 = vsub.f32 1.0, %v48
    %v50 = vmul.f32 %v47, %v49
    %v51 = vadd.f32 %v47, %v50
    %vm52 = vweird.f32 %v47
    %v53 = vsel %vm52, %v47, %v51
    %v54 = vmul.f32 %v40, %v53
    %v55 = vmul.f32 %v42, %v53
    %v56 = vmul.f32 %v44, %v53
    %v57 = vmul.f32 %v46, %v53
    %v58 = vsub.f32 %v33, %v54
    %v59 = vsub.f32 %v34, %v55
    %v60 = vsub.f32 %v35, %v56
    %v61 = vsub.f32 %v36, %v57
    %v62 = vmul.f32 %v58, %v58
    %v63 = vmul.f32 %v59, %v59
    %v64 = vmul.f32 %v60, %v60
    %v65 = vmul.f32 %v61, %v61
    %66 = vadd.xlane.f32.xlu0 %v62
    %v67 = vpop.xlane.xlu0 %66
    %68 = vadd.xlane.f32.xlu0 %v63
    %v69 = vpop.xlane.xlu0 %68
    %70 = vadd.xlane.f32.xlu0 %v64
    %v71 = vpop.xlane.xlu0 %70
    %72 = vadd.xlane.f32.xlu0 %v65
    %v73 = vpop.xlane.xlu0 %72
    %v74 = vmul.f32 %v67, %v53
    %v75 = vmul.f32 %v69, %v53
    %v76 = vmul.f32 %v71, %v53
    %v77 = vmul.f32 %v73, %v53
    %v78 = vadd.f32 %v74, 1e-12
    %v79 = vadd.f32 %v75, 1e-12
    %v80 = vadd.f32 %v76, 1e-12
    %v81 = vadd.f32 %v77, 1e-12
    %v82 = vrsqrt.pop %v78
    %v83 = vmul.f32 %v82, %v78
    %v84 = vmul.f32 %v83, %v82
    %v85 = vmul.f32 0.5, %v84
    %v86 = vsub.f32 1.5, %v85
    %v87 = vmul.f32 %v82, %v86
    %vm88 = vweird.f32 %v78
    %vm89 = vweird.f32 %v82
    %vm90 = vmor %vm88, %vm89
    %v91 = vsel %vm90, %v82, %v87
    %v92 = vrsqrt.pop %v79
    %v93 = vmul.f32 %v92, %v79
    %v94 = vmul.f32 %v93, %v92
    %v95 = vmul.f32 0.5, %v94
    %v96 = vsub.f32 1.5, %v95
    %v97 = vmul.f32 %v92, %v96
    %vm98 = vweird.f32 %v79
    %vm99 = vweird.f32 %v92
    %vm100 = vmor %vm98, %vm99
    %v101 = vsel %vm100, %v92, %v97
    %v102 = vrsqrt.pop %v80
    %v103 = vmul.f32 %v102, %v80
    %v104 = vmul.f32 %v103, %v102
    %v105 = vmul.f32 0.5, %v104
    %v106 = vsub.f32 1.5, %v105
    %v107 = vmul.f32 %v102, %v106
    %vm108 = vweird.f32 %v80
    %vm109 = vweird.f32 %v102
    %vm110 = vmor %vm108, %vm109
    %v111 = vsel %vm110, %v102, %v107
    %v112 = vrsqrt.pop %v81
    %v113 = vmul.f32 %v112, %v81
    %v114 = vmul.f32 %v113, %v112
    %v115 = vmul.f32 0.5, %v114
    %v116 = vsub.f32 1.5, %v115
    %v117 = vmul.f32 %v112, %v116
    %vm118 = vweird.f32 %v81
    %vm119 = vweird.f32 %v112
    %vm120 = vmor %vm118, %vm119
    %v121 = vsel %vm120, %v112, %v117
    %v122 = vmul.f32 %v58, %v91
    %v123 = vmul.f32 %v59, %v101
    %v124 = vmul.f32 %v60, %v111
    %v125 = vmul.f32 %v61, %v121
    %v127 = vperm.slane %v37, 0
    %v129 = vmul.f32 %v122, %v127
    %v130 = vmul.f32 %v123, %v127
    %v131 = vmul.f32 %v124, %v127
    %v132 = vmul.f32 %v125, %v127
    %v134 = vperm.slane %v38, 0
    %v136 = vadd.f32 %v129, %v134
    %v137 = vadd.f32 %v130, %v134
    %v138 = vadd.f32 %v131, %v134
    %v139 = vadd.f32 %v132, %v134
    %v140 = vpack.c.bf16 %v137, %v136
    %v141 = vpack.c.bf16 %v139, %v138
    %v142 = vld [vmem:[%s3] sm:$0xff]
    %v143 = vld [vmem:[%s3 + $0x8] sm:$0xff]
    %v144 = vld [vmem:[%s3 + $0x10] sm:$0xff]
    %v145 = vld [vmem:[%s3 + $0x18] sm:$0xff]
    %v146 = vld [vmem:[%s3 + $0x20] sm:$0xff]
    %v147 = vld [vmem:[%s3 + $0x28] sm:$0xff]
    %v148 = vld [vmem:[%s3 + $0x30] sm:$0xff]
    %v149 = vld [vmem:[%s3 + $0x38] sm:$0xff]
    %v150 = vld [vmem:[%s3 + $0x40] sm:$0xff]
    %v151 = vld [vmem:[%s3 + $0x48] sm:$0xff]
    %v152 = vld [vmem:[%s3 + $0x50] sm:$0xff]
    %v153 = vld [vmem:[%s3 + $0x58] sm:$0xff]
    %v154 = vld [vmem:[%s3 + $0x60] sm:$0xff]
    %v155 = vld [vmem:[%s3 + $0x68] sm:$0xff]
    %v156 = vld [vmem:[%s3 + $0x70] sm:$0xff]
    %v157 = vld [vmem:[%s3 + $0x78] sm:$0xff]
    %v158 = vld [vmem:[%s4] sm:$0x3]
    %v160 = vperm.slane %v158, 0
    %v161 = vperm.slane %v158, 1
    %v180 = vunpack.c.l.b16 %v142
    %v181 = vunpack.c.h.b16 %v142
    %v182 = vunpack.c.l.b16 %v143
    %v183 = vunpack.c.h.b16 %v143
    %v184 = vunpack.c.l.b16 %v144
    %v185 = vunpack.c.h.b16 %v144
    %v186 = vunpack.c.l.b16 %v145
    %v187 = vunpack.c.h.b16 %v145
    %v188 = vunpack.c.l.b16 %v146
    %v189 = vunpack.c.h.b16 %v146
    %v190 = vunpack.c.l.b16 %v147
    %v191 = vunpack.c.h.b16 %v147
    %v192 = vunpack.c.l.b16 %v148
    %v193 = vunpack.c.h.b16 %v148
    %v194 = vunpack.c.l.b16 %v149
    %v195 = vunpack.c.h.b16 %v149
    %v196 = vunpack.c.l.b16 %v150
    %v197 = vunpack.c.h.b16 %v150
    %v198 = vunpack.c.l.b16 %v151
    %v199 = vunpack.c.h.b16 %v151
    %v200 = vunpack.c.l.b16 %v152
    %v201 = vunpack.c.h.b16 %v152
    %v202 = vunpack.c.l.b16 %v153
    %v203 = vunpack.c.h.b16 %v153
    %v204 = vunpack.c.l.b16 %v154
    %v205 = vunpack.c.h.b16 %v154
    %v206 = vunpack.c.l.b16 %v155
    %v207 = vunpack.c.h.b16 %v155
    %v208 = vunpack.c.l.b16 %v156
    %v209 = vunpack.c.h.b16 %v156
    %v210 = vunpack.c.l.b16 %v157
    %v211 = vunpack.c.h.b16 %v157
    %v212 = vpack.c.b16 %v182, %v180
    %v213 = vpack.c.b16 %v183, %v181
    %v214 = vpack.c.b16 %v186, %v184
    %v215 = vpack.c.b16 %v187, %v185
    %v216 = vpack.c.b16 %v190, %v188
    %v217 = vpack.c.b16 %v191, %v189
    %v218 = vpack.c.b16 %v194, %v192
    %v219 = vpack.c.b16 %v195, %v193
    %v220 = vpack.c.b16 %v198, %v196
    %v221 = vpack.c.b16 %v199, %v197
    %v222 = vpack.c.b16 %v202, %v200
    %v223 = vpack.c.b16 %v203, %v201
    %v224 = vpack.c.b16 %v206, %v204
    %v225 = vpack.c.b16 %v207, %v205
    %v226 = vpack.c.b16 %v210, %v208
    %v227 = vpack.c.b16 %v211, %v209
    %244 = vmatpush.bf16.msra.mxu0 %v226
    %245 = vmatpush.bf16.msra.mxu0 %v224
    %246 = vmatpush.bf16.msra.mxu0 %v222
    %247 = vmatpush.bf16.msra.mxu0 %v220
    %248 = vmatpush.bf16.msra.mxu0 %v218
    %249 = vmatpush.bf16.msra.mxu0 %v216
    %250 = vmatpush.bf16.msra.mxu0 %v214
    %251 = vmatpush.bf16.msra.mxu0 %v212
    %252 = vmatmul.bf16.gmra.mxu0 %v140
    %v253 = vpop.f32.mrf.mxu0
    %v254 = vadd.f32 %v160, %v253
    %v255 = vpop.f32.mrf.mxu0
    %v256 = vadd.f32 %v160, %v255
    %257 = vmatmul.bf16.gmra.mxu0 %v141
    %v258 = vpop.f32.mrf.mxu0
    %v259 = vadd.f32 %v160, %v258
    %v260 = vpop.f32.mrf.mxu0
    %v261 = vadd.f32 %v160, %v260
    %262 = vdwg.mxu0
    %263 = vmatpush.bf16.msra.mxu0 %v227
    %264 = vmatpush.bf16.msra.mxu0 %v225
    %265 = vmatpush.bf16.msra.mxu0 %v223
    %266 = vmatpush.bf16.msra.mxu0 %v221
    %267 = vmatpush.bf16.msra.mxu0 %v219
    %268 = vmatpush.bf16.msra.mxu0 %v217
    %269 = vmatpush.bf16.msra.mxu0 %v215
    %270 = vmatpush.bf16.msra.mxu0 %v213
    %271 = vmatmul.bf16.gmra.mxu0 %v140
    %v272 = vpop.f32.mrf.mxu0
    %v273 = vadd.f32 %v161, %v272
    %v274 = vpop.f32.mrf.mxu0
    %v275 = vadd.f32 %v161, %v274
    %276 = vmatmul.bf16.gmra.mxu0 %v141
    %v277 = vpop.f32.mrf.mxu0
    %v278 = vadd.f32 %v161, %v277
    %v279 = vpop.f32.mrf.mxu0
    %v280 = vadd.f32 %v161, %v279
    %281 = vdwg.mxu0
    %v282 = vmax.f32 %v254, 0.0
    %v283 = vmax.f32 %v273, 0.0
    %v284 = vmax.f32 %v256, 0.0
    %v285 = vmax.f32 %v275, 0.0
    %v286 = vmax.f32 %v259, 0.0
    %v287 = vmax.f32 %v278, 0.0
    %v288 = vmax.f32 %v261, 0.0
    %v289 = vmax.f32 %v280, 0.0
    %v290 = vpack.c.bf16 %v284, %v282
    %v291 = vpack.c.bf16 %v285, %v283
    %v292 = vpack.c.bf16 %v288, %v286
    %v293 = vpack.c.bf16 %v289, %v287
    %v294 = vld [vmem:[%s5] sm:$0xf]
    %v295 = vld [vmem:[%s5 + $0x4] sm:$0xf]
    %v296 = vld [vmem:[%s5 + $0x8] sm:$0xf]
    %v297 = vld [vmem:[%s5 + $0xc] sm:$0xf]
    %v298 = vld [vmem:[%s5 + $0x10] sm:$0xf]
    %v299 = vld [vmem:[%s5 + $0x14] sm:$0xf]
    %v300 = vld [vmem:[%s5 + $0x18] sm:$0xf]
    %v301 = vld [vmem:[%s5 + $0x1c] sm:$0xf]
    %v302 = vld [vmem:[%s5 + $0x20] sm:$0xf]
    %v303 = vld [vmem:[%s5 + $0x24] sm:$0xf]
    %v304 = vld [vmem:[%s5 + $0x28] sm:$0xf]
    %v305 = vld [vmem:[%s5 + $0x2c] sm:$0xf]
    %v306 = vld [vmem:[%s5 + $0x30] sm:$0xf]
    %v307 = vld [vmem:[%s5 + $0x34] sm:$0xf]
    %v308 = vld [vmem:[%s5 + $0x38] sm:$0xf]
    %v309 = vld [vmem:[%s5 + $0x3c] sm:$0xf]
    %v310 = vld [vmem:[%s5 + $0x40] sm:$0xf]
    %v311 = vld [vmem:[%s5 + $0x44] sm:$0xf]
    %v312 = vld [vmem:[%s5 + $0x48] sm:$0xf]
    %v313 = vld [vmem:[%s5 + $0x4c] sm:$0xf]
    %v314 = vld [vmem:[%s5 + $0x50] sm:$0xf]
    %v315 = vld [vmem:[%s5 + $0x54] sm:$0xf]
    %v316 = vld [vmem:[%s5 + $0x58] sm:$0xf]
    %v317 = vld [vmem:[%s5 + $0x5c] sm:$0xf]
    %v318 = vld [vmem:[%s5 + $0x60] sm:$0xf]
    %v319 = vld [vmem:[%s5 + $0x64] sm:$0xf]
    %v320 = vld [vmem:[%s5 + $0x68] sm:$0xf]
    %v321 = vld [vmem:[%s5 + $0x6c] sm:$0xf]
    %v322 = vld [vmem:[%s5 + $0x70] sm:$0xf]
    %v323 = vld [vmem:[%s5 + $0x74] sm:$0xf]
    %v324 = vld [vmem:[%s5 + $0x78] sm:$0xf]
    %v325 = vld [vmem:[%s5 + $0x7c] sm:$0xf]
    %v326 = vld [vmem:[%s6] sm:$0x1]
    %v328 = vperm.slane %v326, 0
    %v362 = vunpack.c.l.b16 %v294
    %v363 = vunpack.c.l.b16 %v295
    %v364 = vunpack.c.l.b16 %v296
    %v365 = vunpack.c.l.b16 %v297
    %v366 = vunpack.c.l.b16 %v298
    %v367 = vunpack.c.l.b16 %v299
    %v368 = vunpack.c.l.b16 %v300
    %v369 = vunpack.c.l.b16 %v301
    %v370 = vunpack.c.l.b16 %v302
    %v371 = vunpack.c.l.b16 %v303
    %v372 = vunpack.c.l.b16 %v304
    %v373 = vunpack.c.l.b16 %v305
    %v374 = vunpack.c.l.b16 %v306
    %v375 = vunpack.c.l.b16 %v307
    %v376 = vunpack.c.l.b16 %v308
    %v377 = vunpack.c.l.b16 %v309
    %v378 = vunpack.c.l.b16 %v310
    %v379 = vunpack.c.l.b16 %v311
    %v380 = vunpack.c.l.b16 %v312
    %v381 = vunpack.c.l.b16 %v313
    %v382 = vunpack.c.l.b16 %v314
    %v383 = vunpack.c.l.b16 %v315
    %v384 = vunpack.c.l.b16 %v316
    %v385 = vunpack.c.l.b16 %v317
    %v386 = vunpack.c.l.b16 %v318
    %v387 = vunpack.c.l.b16 %v319
    %v388 = vunpack.c.l.b16 %v320
    %v389 = vunpack.c.l.b16 %v321
    %v390 = vunpack.c.l.b16 %v322
    %v391 = vunpack.c.l.b16 %v323
    %v392 = vunpack.c.l.b16 %v324
    %v393 = vunpack.c.l.b16 %v325
    %v394 = vpack.c.b16 %v363, %v362
    %v395 = vpack.c.b16 %v365, %v364
    %v396 = vpack.c.b16 %v367, %v366
    %v397 = vpack.c.b16 %v369, %v368
    %v398 = vpack.c.b16 %v371, %v370
    %v399 = vpack.c.b16 %v373, %v372
    %v400 = vpack.c.b16 %v375, %v374
    %v401 = vpack.c.b16 %v377, %v376
    %v402 = vpack.c.b16 %v379, %v378
    %v403 = vpack.c.b16 %v381, %v380
    %v404 = vpack.c.b16 %v383, %v382
    %v405 = vpack.c.b16 %v385, %v384
    %v406 = vpack.c.b16 %v387, %v386
    %v407 = vpack.c.b16 %v389, %v388
    %v408 = vpack.c.b16 %v391, %v390
    %v409 = vpack.c.b16 %v393, %v392
    %426 = vmatpush.bf16.msra.mxu0 %v401
    %427 = vmatpush.bf16.msra.mxu0 %v400
    %428 = vmatpush.bf16.msra.mxu0 %v399
    %429 = vmatpush.bf16.msra.mxu0 %v398
    %430 = vmatpush.bf16.msra.mxu0 %v397
    %431 = vmatpush.bf16.msra.mxu0 %v396
    %432 = vmatpush.bf16.msra.mxu0 %v395
    %433 = vmatpush.bf16.msra.mxu0 %v394
    %434 = vmatmul.bf16.gmra.mxu0 %v290
    %v435 = vpop.f32.mrf.mxu0
    %v436 = vadd.f32 %v328, %v435
    %v437 = vpop.f32.mrf.mxu0
    %v438 = vadd.f32 %v328, %v437
    %439 = vmatmul.bf16.gmra.mxu0 %v292
    %v440 = vpop.f32.mrf.mxu0
    %v441 = vadd.f32 %v328, %v440
    %v442 = vpop.f32.mrf.mxu0
    %v443 = vadd.f32 %v328, %v442
    %444 = vdwg.mxu0
    %445 = vmatpush.bf16.msra.mxu0 %v409
    %446 = vmatpush.bf16.msra.mxu0 %v408
    %447 = vmatpush.bf16.msra.mxu0 %v407
    %448 = vmatpush.bf16.msra.mxu0 %v406
    %449 = vmatpush.bf16.msra.mxu0 %v405
    %450 = vmatpush.bf16.msra.mxu0 %v404
    %451 = vmatpush.bf16.msra.mxu0 %v403
    %452 = vmatpush.bf16.msra.mxu0 %v402
    %453 = vmatmul.bf16.gmra.mxu0 %v291
    %v454 = vpop.f32.mrf.mxu0
    %v455 = vadd.f32 %v436, %v454
    %v456 = vpop.f32.mrf.mxu0
    %v457 = vadd.f32 %v438, %v456
    %458 = vmatmul.bf16.gmra.mxu0 %v293
    %v459 = vpop.f32.mrf.mxu0
    %v460 = vadd.f32 %v441, %v459
    %v461 = vpop.f32.mrf.mxu0
    %v462 = vadd.f32 %v443, %v461
    %463 = vdwg.mxu0
    %v464 = vmul.f32 %v455, 0.5
    %v465 = vmul.f32 %v457, 0.5
    %v466 = vmul.f32 %v460, 0.5
    %v467 = vmul.f32 %v462, 0.5
    %v468 = vadd.f32 %v33, %v464
    %v469 = vadd.f32 %v34, %v465
    %v470 = vadd.f32 %v35, %v466
    %v471 = vadd.f32 %v36, %v467
    %v472 = vld [vmem:[%s7] sm:$0x1]
    %v473 = vld [vmem:[%s8] sm:$0x1]
    %474 = vadd.xlane.f32.xlu0 %v468
    %v475 = vpop.xlane.xlu0 %474
    %476 = vadd.xlane.f32.xlu0 %v469
    %v477 = vpop.xlane.xlu0 %476
    %478 = vadd.xlane.f32.xlu0 %v470
    %v479 = vpop.xlane.xlu0 %478
    %480 = vadd.xlane.f32.xlu0 %v471
    %v481 = vpop.xlane.xlu0 %480
    %v482 = vmul.f32 %v475, %v53
    %v483 = vmul.f32 %v477, %v53
    %v484 = vmul.f32 %v479, %v53
    %v485 = vmul.f32 %v481, %v53
    %v486 = vsub.f32 %v468, %v482
    %v487 = vsub.f32 %v469, %v483
    %v488 = vsub.f32 %v470, %v484
    %v489 = vsub.f32 %v471, %v485
    %v490 = vmul.f32 %v486, %v486
    %v491 = vmul.f32 %v487, %v487
    %v492 = vmul.f32 %v488, %v488
    %v493 = vmul.f32 %v489, %v489
    %494 = vadd.xlane.f32.xlu0 %v490
    %v495 = vpop.xlane.xlu0 %494
    %496 = vadd.xlane.f32.xlu0 %v491
    %v497 = vpop.xlane.xlu0 %496
    %498 = vadd.xlane.f32.xlu0 %v492
    %v499 = vpop.xlane.xlu0 %498
    %500 = vadd.xlane.f32.xlu0 %v493
    %v501 = vpop.xlane.xlu0 %500
    %v502 = vmul.f32 %v495, %v53
    %v503 = vmul.f32 %v497, %v53
    %v504 = vmul.f32 %v499, %v53
    %v505 = vmul.f32 %v501, %v53
    %v506 = vadd.f32 %v502, 1e-12
    %v507 = vadd.f32 %v503, 1e-12
    %v508 = vadd.f32 %v504, 1e-12
    %v509 = vadd.f32 %v505, 1e-12
    %v510 = vrsqrt.pop %v506
    %v511 = vmul.f32 %v510, %v506
    %v512 = vmul.f32 %v511, %v510
    %v513 = vmul.f32 0.5, %v512
    %v514 = vsub.f32 1.5, %v513
    %v515 = vmul.f32 %v510, %v514
    %vm516 = vweird.f32 %v506
    %vm517 = vweird.f32 %v510
    %vm518 = vmor %vm516, %vm517
    %v519 = vsel %vm518, %v510, %v515
    %v520 = vrsqrt.pop %v507
    %v521 = vmul.f32 %v520, %v507
    %v522 = vmul.f32 %v521, %v520
    %v523 = vmul.f32 0.5, %v522
    %v524 = vsub.f32 1.5, %v523
    %v525 = vmul.f32 %v520, %v524
    %vm526 = vweird.f32 %v507
    %vm527 = vweird.f32 %v520
    %vm528 = vmor %vm526, %vm527
    %v529 = vsel %vm528, %v520, %v525
    %v530 = vrsqrt.pop %v508
    %v531 = vmul.f32 %v530, %v508
    %v532 = vmul.f32 %v531, %v530
    %v533 = vmul.f32 0.5, %v532
    %v534 = vsub.f32 1.5, %v533
    %v535 = vmul.f32 %v530, %v534
    %vm536 = vweird.f32 %v508
    %vm537 = vweird.f32 %v530
    %vm538 = vmor %vm536, %vm537
    %v539 = vsel %vm538, %v530, %v535
    %v540 = vrsqrt.pop %v509
    %v541 = vmul.f32 %v540, %v509
    %v542 = vmul.f32 %v541, %v540
    %v543 = vmul.f32 0.5, %v542
    %v544 = vsub.f32 1.5, %v543
    %v545 = vmul.f32 %v540, %v544
    %vm546 = vweird.f32 %v509
    %vm547 = vweird.f32 %v540
    %vm548 = vmor %vm546, %vm547
    %v549 = vsel %vm548, %v540, %v545
    %v550 = vmul.f32 %v486, %v519
    %v551 = vmul.f32 %v487, %v529
    %v552 = vmul.f32 %v488, %v539
    %v553 = vmul.f32 %v489, %v549
    %v555 = vperm.slane %v472, 0
    %v557 = vmul.f32 %v550, %v555
    %v558 = vmul.f32 %v551, %v555
    %v559 = vmul.f32 %v552, %v555
    %v560 = vmul.f32 %v553, %v555
    %v562 = vperm.slane %v473, 0
    %v564 = vadd.f32 %v557, %v562
    %v565 = vadd.f32 %v558, %v562
    %v566 = vadd.f32 %v559, %v562
    %v567 = vadd.f32 %v560, %v562
    %568 = vst [vmem:[#allocation2] sm:$0xff] %v564
    %569 = vst [vmem:[#allocation2 + $0x8] sm:$0xff] %v565
    %570 = vst [vmem:[#allocation2 + $0x10] sm:$0xff] %v566
    %571 = vst [vmem:[#allocation2 + $0x18] sm:$0xff] %v567
    // Predicated region
    $region38: #{encoder_layer.7} parent=1 // pred_check
      _
    $region39: #{encoder_layer.7} parent=1 // pred_check_branch
      %573 = sbr.rel (0) target = $region41
    $region40: #{encoder_layer.7} parent=1 // pred_region
      %575 = vsyncadd [#allocation3], 0
      %s576 = sshll.u32 [#allocation2], 4
      %s577 = int_to_ptr.vmem [resolvable:$true] %s576
      %s578 = sshll.u32 %s9, 4
      %s579 = int_to_ptr.hbm [resolvable:$true] %s578
      %584 = dma.vmem_to_hbm [thread:$0]  %s577, 512, %s579, [#allocation3], 128, 128, 8
    $region41: #{encoder_layer.7} parent=1 // pred_fallthru
      _
    // Predicated region
    $region42: #{encoder_layer.7} parent=1 // pred_check
      _
    $region43: #{encoder_layer.7} parent=1 // pred_check_branch
      %586 = sbr.rel (0) target = $region45
    $region44: #{encoder_layer.7} parent=1 // pred_region
      %588 = dma.done [#allocation3], 512
    $region45: #{encoder_layer.7} parent=1 // pred_fallthru
      _
    %589 = vsyncpa [#allocation3], 1

// kernel: encoder_layer.6
$region0: #{encoder_layer.6}
  #allocation0 [shape = 'u32[]', space=smem, size = 0x4, offset = 0x4, fixed_abs, tag = 'smem constant byte address 0x4 - core index']
  #allocation1 [shape = 'u32[72,128]{1,0:T(1,128)}', space=vmem, size = 0x9000, scoped, tag = 'internal scratch']
  %s0 = inlined_call_operand.vmem [shape: f32[2,16,128], index: 0, kind: input, shape index: {}]
  %s1 = inlined_call_operand.vmem [shape: f32[1,128], index: 1, kind: input, shape index: {}]
  %s2 = inlined_call_operand.vmem [shape: f32[1,128], index: 2, kind: input, shape index: {}]
  %s3 = inlined_call_operand.vmem [shape: bf16[128,256], index: 3, kind: input, shape index: {}]
  %s4 = inlined_call_operand.vmem [shape: f32[1,256], index: 4, kind: input, shape index: {}]
  %s5 = inlined_call_operand.vmem [shape: f32[7,128], index: 5, kind: input, shape index: {}]
  %s6 = inlined_call_operand.vmem [shape: f32[1,128], index: 6, kind: input, shape index: {}]
  %s7 = inlined_call_operand.vmem [shape: f32[1,128], index: 7, kind: input, shape index: {}]
  %s8 = inlined_call_operand.vmem [shape: f32[1,128], index: 8, kind: input, shape index: {}]
  %s9 = inlined_call_operand.vmem [shape: f32[1,128], index: 9, kind: input, shape index: {}]
  %s10 = inlined_call_operand.vmem [shape: f32[1,128], index: 10, kind: input, shape index: {}]
  %s11 = inlined_call_operand.vmem [shape: bf16[128,128], index: 11, kind: input, shape index: {}]
  %s12 = inlined_call_operand.vmem [shape: f32[1,128], index: 12, kind: input, shape index: {}]
  %s13 = inlined_call_operand.vmem [shape: f32[2,16,128], index: 13, kind: output, shape index: {}]
  %s14 = sld [smem:[#allocation0]]
  $region85: #{encoder_layer.6} parent=0
    _
  %s16 = ssub.s32 1, %s14
  %s17 = scalar_select 0, %s16, %s14
  loop: start=0, step=1, limit=4
  $region2: #{encoder_layer.6} parent=0 // loop_pre_header
    _
  $region3: #{encoder_layer.6} parent=0 // loop_header
    %s19 = sphi 0, %s23
    %p20 = scmp.ge.s32.totalorder %s19, 4
    %s29 = sphi 0, %s31
    %s32 = sphi 0, %s29
    %s33 = sphi 0, %s32
    %s49 = sphi 0, %s33
    %s53 = sphi 0, %s53
    %s55 = sphi 0, %s53
    %s56 = sphi 0, %s55
    %s70 = sphi 0, %s56
    %s74 = sphi 0, %s74
    %s76 = sphi 0, %s74
    %s77 = sphi 0, %s76
    %s91 = sphi 0, %s77
    %s95 = sphi 0, %s95
    %s97 = sphi 0, %s95
    %s98 = sphi 0, %s97
    %s112 = sphi 0, %s98
    %s116 = sphi 0, %s116
    %s118 = sphi 0, %s116
    %s119 = sphi 0, %s118
    %s133 = sphi 0, %s119
    %s137 = sphi 0, %s137
    %s139 = sphi 0, %s137
    %s140 = sphi 0, %s139
    %s154 = sphi 0, %s140
    %s158 = sphi 0, %s158
    %s160 = sphi 0, %s158
    %s161 = sphi 0, %s160
    %s175 = sphi 0, %s161
    %s179 = sphi 0, %s179
    %s181 = sphi 0, %s179
    %s182 = sphi 0, %s181
    %s196 = sphi 0, %s182
    %s200 = sphi 0, %s200
    %s202 = sphi 0, %s200
    %s203 = sphi 0, %s202
    %s217 = sphi 0, %s203
    %s221 = sphi 0, %s221
    %s223 = sphi 0, %s221
    %s224 = sphi 0, %s223
    %s238 = sphi 0, %s224
    %s242 = sphi 0, %s242
    %s244 = sphi 0, %s242
    %s245 = sphi 0, %s244
    %s259 = sphi 0, %s245
    %s263 = sphi 0, %s263
    %s265 = sphi 0, %s263
    %s266 = sphi 0, %s265
    %s280 = sphi 0, %s266
    %s284 = sphi 0, %s284
    %s286 = sphi 0, %s284
    %s287 = sphi 0, %s286
    %s301 = sphi 0, %s287
    %s307 = sphi 0, %s309
    %s310 = sphi 0, %s307
    %s311 = sphi 0, %s310
    %s327 = sphi 0, %s311
  $region4: #{encoder_layer.6} parent=0 // loop_header_branch
    %22 = sbr.rel (%p20) target = $region8
  $region5: #{encoder_layer.6} parent=0 // loop_body
    %s24 = ssub.s32 %s19, 1
    %s25 = ssub.s32 %s19, 2
    %s26 = sadd.s32 %s19, 1
    %s27 = ssub.s32 %s19, %s26
    %p28 = scmp.eq.s32.totalorder %s27, 0
    %s30 = sadd.s32 %s29, 1
    %s31 = scalar_select %p28, %s29, %s30
    %p34 = pneg %p28
    %p35 = scmp.eq.s32.totalorder %s19, 1
    %p36 = por %p34, %p35
    %p37 = scmp.ne.s32.totalorder %s29, %s32
    %p38 = scmp.eq.s32.totalorder %s19, 0
    %p39 = por %p37, %p38
    %p40 = scmp.ne.s32.totalorder %s29, %s32
    %p41 = scmp.eq.s32.totalorder %s24, 1
    %p42 = por %p40, %p41
    %p43 = scmp.ne.s32.totalorder %s32, %s33
    %p44 = scmp.eq.s32.totalorder %s24, 0
    %p45 = por %p43, %p44
    %p46 = scmp.ne.s32.totalorder %s32, %s33
    %p47 = scmp.eq.s32.totalorder %s25, 1
    %p48 = por %p46, %p47
    %p50 = scmp.ne.s32.totalorder %s33, %s49
    %p51 = scmp.eq.s32.totalorder %s25, 0
    %p52 = por %p50, %p51
    %s54 = sadd.s32 %s53, 1
    %p57 = scmp.eq.s32.totalorder %s19, 1
    %p58 = scmp.ne.s32.totalorder %s53, %s55
    %p59 = scmp.eq.s32.totalorder %s19, 0
    %p60 = por %p58, %p59
    %p61 = scmp.ne.s32.totalorder %s53, %s55
    %p62 = scmp.eq.s32.totalorder %s24, 1
    %p63 = por %p61, %p62
    %p64 = scmp.ne.s32.totalorder %s55, %s56
    %p65 = scmp.eq.s32.totalorder %s24, 0
    %p66 = por %p64, %p65
    %p67 = scmp.ne.s32.totalorder %s55, %s56
    %p68 = scmp.eq.s32.totalorder %s25, 1
    %p69 = por %p67, %p68
    %p71 = scmp.ne.s32.totalorder %s56, %s70
    %p72 = scmp.eq.s32.totalorder %s25, 0
    %p73 = por %p71, %p72
    %s75 = sadd.s32 %s74, 1
    %p78 = scmp.eq.s32.totalorder %s19, 1
    %p79 = scmp.ne.s32.totalorder %s74, %s76
    %p80 = scmp.eq.s32.totalorder %s19, 0
    %p81 = por %p79, %p80
    %p82 = scmp.ne.s32.totalorder %s74, %s76
    %p83 = scmp.eq.s32.totalorder %s24, 1
    %p84 = por %p82, %p83
    %p85 = scmp.ne.s32.totalorder %s76, %s77
    %p86 = scmp.eq.s32.totalorder %s24, 0
    %p87 = por %p85, %p86
    %p88 = scmp.ne.s32.totalorder %s76, %s77
    %p89 = scmp.eq.s32.totalorder %s25, 1
    %p90 = por %p88, %p89
    %p92 = scmp.ne.s32.totalorder %s77, %s91
    %p93 = scmp.eq.s32.totalorder %s25, 0
    %p94 = por %p92, %p93
    %s96 = sadd.s32 %s95, 1
    %p99 = scmp.eq.s32.totalorder %s19, 1
    %p100 = scmp.ne.s32.totalorder %s95, %s97
    %p101 = scmp.eq.s32.totalorder %s19, 0
    %p102 = por %p100, %p101
    %p103 = scmp.ne.s32.totalorder %s95, %s97
    %p104 = scmp.eq.s32.totalorder %s24, 1
    %p105 = por %p103, %p104
    %p106 = scmp.ne.s32.totalorder %s97, %s98
    %p107 = scmp.eq.s32.totalorder %s24, 0
    %p108 = por %p106, %p107
    %p109 = scmp.ne.s32.totalorder %s97, %s98
    %p110 = scmp.eq.s32.totalorder %s25, 1
    %p111 = por %p109, %p110
    %p113 = scmp.ne.s32.totalorder %s98, %s112
    %p114 = scmp.eq.s32.totalorder %s25, 0
    %p115 = por %p113, %p114
    %s117 = sadd.s32 %s116, 1
    %p120 = scmp.eq.s32.totalorder %s19, 1
    %p121 = scmp.ne.s32.totalorder %s116, %s118
    %p122 = scmp.eq.s32.totalorder %s19, 0
    %p123 = por %p121, %p122
    %p124 = scmp.ne.s32.totalorder %s116, %s118
    %p125 = scmp.eq.s32.totalorder %s24, 1
    %p126 = por %p124, %p125
    %p127 = scmp.ne.s32.totalorder %s118, %s119
    %p128 = scmp.eq.s32.totalorder %s24, 0
    %p129 = por %p127, %p128
    %p130 = scmp.ne.s32.totalorder %s118, %s119
    %p131 = scmp.eq.s32.totalorder %s25, 1
    %p132 = por %p130, %p131
    %p134 = scmp.ne.s32.totalorder %s119, %s133
    %p135 = scmp.eq.s32.totalorder %s25, 0
    %p136 = por %p134, %p135
    %s138 = sadd.s32 %s137, 1
    %p141 = scmp.eq.s32.totalorder %s19, 1
    %p142 = scmp.ne.s32.totalorder %s137, %s139
    %p143 = scmp.eq.s32.totalorder %s19, 0
    %p144 = por %p142, %p143
    %p145 = scmp.ne.s32.totalorder %s137, %s139
    %p146 = scmp.eq.s32.totalorder %s24, 1
    %p147 = por %p145, %p146
    %p148 = scmp.ne.s32.totalorder %s139, %s140
    %p149 = scmp.eq.s32.totalorder %s24, 0
    %p150 = por %p148, %p149
    %p151 = scmp.ne.s32.totalorder %s139, %s140
    %p152 = scmp.eq.s32.totalorder %s25, 1
    %p153 = por %p151, %p152
    %p155 = scmp.ne.s32.totalorder %s140, %s154
    %p156 = scmp.eq.s32.totalorder %s25, 0
    %p157 = por %p155, %p156
    %s159 = sadd.s32 %s158, 1
    %p162 = scmp.eq.s32.totalorder %s19, 1
    %p163 = scmp.ne.s32.totalorder %s158, %s160
    %p164 = scmp.eq.s32.totalorder %s19, 0
    %p165 = por %p163, %p164
    %p166 = scmp.ne.s32.totalorder %s158, %s160
    %p167 = scmp.eq.s32.totalorder %s24, 1
    %p168 = por %p166, %p167
    %p169 = scmp.ne.s32.totalorder %s160, %s161
    %p170 = scmp.eq.s32.totalorder %s24, 0
    %p171 = por %p169, %p170
    %p172 = scmp.ne.s32.totalorder %s160, %s161
    %p173 = scmp.eq.s32.totalorder %s25, 1
    %p174 = por %p172, %p173
    %p176 = scmp.ne.s32.totalorder %s161, %s175
    %p177 = scmp.eq.s32.totalorder %s25, 0
    %p178 = por %p176, %p177
    %s180 = sadd.s32 %s179, 1
    %p183 = scmp.eq.s32.totalorder %s19, 1
    %p184 = scmp.ne.s32.totalorder %s179, %s181
    %p185 = scmp.eq.s32.totalorder %s19, 0
    %p186 = por %p184, %p185
    %p187 = scmp.ne.s32.totalorder %s179, %s181
    %p188 = scmp.eq.s32.totalorder %s24, 1
    %p189 = por %p187, %p188
    %p190 = scmp.ne.s32.totalorder %s181, %s182
    %p191 = scmp.eq.s32.totalorder %s24, 0
    %p192 = por %p190, %p191
    %p193 = scmp.ne.s32.totalorder %s181, %s182
    %p194 = scmp.eq.s32.totalorder %s25, 1
    %p195 = por %p193, %p194
    %p197 = scmp.ne.s32.totalorder %s182, %s196
    %p198 = scmp.eq.s32.totalorder %s25, 0
    %p199 = por %p197, %p198
    %s201 = sadd.s32 %s200, 1
    %p204 = scmp.eq.s32.totalorder %s19, 1
    %p205 = scmp.ne.s32.totalorder %s200, %s202
    %p206 = scmp.eq.s32.totalorder %s19, 0
    %p207 = por %p205, %p206
    %p208 = scmp.ne.s32.totalorder %s200, %s202
    %p209 = scmp.eq.s32.totalorder %s24, 1
    %p210 = por %p208, %p209
    %p211 = scmp.ne.s32.totalorder %s202, %s203
    %p212 = scmp.eq.s32.totalorder %s24, 0
    %p213 = por %p211, %p212
    %p214 = scmp.ne.s32.totalorder %s202, %s203
    %p215 = scmp.eq.s32.totalorder %s25, 1
    %p216 = por %p214, %p215
    %p218 = scmp.ne.s32.totalorder %s203, %s217
    %p219 = scmp.eq.s32.totalorder %s25, 0
    %p220 = por %p218, %p219
    %s222 = sadd.s32 %s221, 1
    %p225 = scmp.eq.s32.totalorder %s19, 1
    %p226 = scmp.ne.s32.totalorder %s221, %s223
    %p227 = scmp.eq.s32.totalorder %s19, 0
    %p228 = por %p226, %p227
    %p229 = scmp.ne.s32.totalorder %s221, %s223
    %p230 = scmp.eq.s32.totalorder %s24, 1
    %p231 = por %p229, %p230
    %p232 = scmp.ne.s32.totalorder %s223, %s224
    %p233 = scmp.eq.s32.totalorder %s24, 0
    %p234 = por %p232, %p233
    %p235 = scmp.ne.s32.totalorder %s223, %s224
    %p236 = scmp.eq.s32.totalorder %s25, 1
    %p237 = por %p235, %p236
    %p239 = scmp.ne.s32.totalorder %s224, %s238
    %p240 = scmp.eq.s32.totalorder %s25, 0
    %p241 = por %p239, %p240
    %s243 = sadd.s32 %s242, 1
    %p246 = scmp.eq.s32.totalorder %s19, 1
    %p247 = scmp.ne.s32.totalorder %s242, %s244
    %p248 = scmp.eq.s32.totalorder %s19, 0
    %p249 = por %p247, %p248
    %p250 = scmp.ne.s32.totalorder %s242, %s244
    %p251 = scmp.eq.s32.totalorder %s24, 1
    %p252 = por %p250, %p251
    %p253 = scmp.ne.s32.totalorder %s244, %s245
    %p254 = scmp.eq.s32.totalorder %s24, 0
    %p255 = por %p253, %p254
    %p256 = scmp.ne.s32.totalorder %s244, %s245
    %p257 = scmp.eq.s32.totalorder %s25, 1
    %p258 = por %p256, %p257
    %p260 = scmp.ne.s32.totalorder %s245, %s259
    %p261 = scmp.eq.s32.totalorder %s25, 0
    %p262 = por %p260, %p261
    %s264 = sadd.s32 %s263, 1
    %p267 = scmp.eq.s32.totalorder %s19, 1
    %p268 = scmp.ne.s32.totalorder %s263, %s265
    %p269 = scmp.eq.s32.totalorder %s19, 0
    %p270 = por %p268, %p269
    %p271 = scmp.ne.s32.totalorder %s263, %s265
    %p272 = scmp.eq.s32.totalorder %s24, 1
    %p273 = por %p271, %p272
    %p274 = scmp.ne.s32.totalorder %s265, %s266
    %p275 = scmp.eq.s32.totalorder %s24, 0
    %p276 = por %p274, %p275
    %p277 = scmp.ne.s32.totalorder %s265, %s266
    %p278 = scmp.eq.s32.totalorder %s25, 1
    %p279 = por %p277, %p278
    %p281 = scmp.ne.s32.totalorder %s266, %s280
    %p282 = scmp.eq.s32.totalorder %s25, 0
    %p283 = por %p281, %p282
    %s285 = sadd.s32 %s284, 1
    %p288 = scmp.eq.s32.totalorder %s19, 1
    %p289 = scmp.ne.s32.totalorder %s284, %s286
    %p290 = scmp.eq.s32.totalorder %s19, 0
    %p291 = por %p289, %p290
    %p292 = scmp.ne.s32.totalorder %s284, %s286
    %p293 = scmp.eq.s32.totalorder %s24, 1
    %p294 = por %p292, %p293
    %p295 = scmp.ne.s32.totalorder %s286, %s287
    %p296 = scmp.eq.s32.totalorder %s24, 0
    %p297 = por %p295, %p296
    %p298 = scmp.ne.s32.totalorder %s286, %s287
    %p299 = scmp.eq.s32.totalorder %s25, 1
    %p300 = por %p298, %p299
    %p302 = scmp.ne.s32.totalorder %s287, %s301
    %p303 = scmp.eq.s32.totalorder %s25, 0
    %p304 = por %p302, %p303
    %s305 = ssub.s32 %s19, %s26
    %p306 = scmp.eq.s32.totalorder %s305, 0
    %s308 = sadd.s32 %s307, 1
    %s309 = scalar_select %p306, %s307, %s308
    %p312 = pneg %p306
    %p313 = scmp.eq.s32.totalorder %s19, 1
    %p314 = por %p312, %p313
    %p315 = scmp.ne.s32.totalorder %s307, %s310
    %p316 = scmp.eq.s32.totalorder %s19, 0
    %p317 = por %p315, %p316
    %p318 = scmp.ne.s32.totalorder %s307, %s310
    %p319 = scmp.eq.s32.totalorder %s24, 1
    %p320 = por %p318, %p319
    %p321 = scmp.ne.s32.totalorder %s310, %s311
    %p322 = scmp.eq.s32.totalorder %s24, 0
    %p323 = por %p321, %p322
    %p324 = scmp.ne.s32.totalorder %s310, %s311
    %p325 = scmp.eq.s32.totalorder %s25, 1
    %p326 = por %p324, %p325
    %p328 = scmp.ne.s32.totalorder %s311, %s327
    %p329 = scmp.eq.s32.totalorder %s25, 0
    %p330 = por %p328, %p329
    %p331 = scmp.le.s32.totalorder 1, %s19
    %p332 = scmp.lt.s32.totalorder %s19, 3
    %p333 = pnand %p331, %p332
    %p334 = pneg %p333
    // Predicated region
    $region9: #{encoder_layer.6} parent=5 // pred_check
      _
    $region10: #{encoder_layer.6} parent=5 // pred_check_branch
      %336 = sbr.rel (%p333) target = $region12
    $region11: #{encoder_layer.6} parent=5 // pred_region
      %s337 = ssub.s32 %s19, 1
      // Predicated region
      $region13: #{encoder_layer.6} parent=11 // pred_check
        %p338 = pneg %p66
      $region14: #{encoder_layer.6} parent=11 // pred_check_branch
        %340 = sbr.rel (%p338) target = $region16
      $region15: #{encoder_layer.6} parent=11 // pred_region
        _
      $region16: #{encoder_layer.6} parent=11 // pred_fallthru
        _
      // Predicated region
      $region17: #{encoder_layer.6} parent=11 // pred_check
        %p341 = pneg %p87
      $region18: #{encoder_layer.6} parent=11 // pred_check_branch
        %343 = sbr.rel (%p341) target = $region20
      $region19: #{encoder_layer.6} parent=11 // pred_region
        _
      $region20: #{encoder_layer.6} parent=11 // pred_fallthru
        _
      // Predicated region
      $region21: #{encoder_layer.6} parent=11 // pred_check
        %p344 = pneg %p108
      $region22: #{encoder_layer.6} parent=11 // pred_check_branch
        %346 = sbr.rel (%p344) target = $region24
      $region23: #{encoder_layer.6} parent=11 // pred_region
        _
      $region24: #{encoder_layer.6} parent=11 // pred_fallthru
        _
      // Predicated region
      $region25: #{encoder_layer.6} parent=11 // pred_check
        %p347 = pneg %p129
      $region26: #{encoder_layer.6} parent=11 // pred_check_branch
        %349 = sbr.rel (%p347) target = $region28
      $region27: #{encoder_layer.6} parent=11 // pred_region
        _
      $region28: #{encoder_layer.6} parent=11 // pred_fallthru
        _
      // Predicated region
      $region29: #{encoder_layer.6} parent=11 // pred_check
        %p350 = pneg %p150
      $region30: #{encoder_layer.6} parent=11 // pred_check_branch
        %352 = sbr.rel (%p350) target = $region32
      $region31: #{encoder_layer.6} parent=11 // pred_region
        _
      $region32: #{encoder_layer.6} parent=11 // pred_fallthru
        _
      // Predicated region
      $region33: #{encoder_layer.6} parent=11 // pred_check
        %p353 = pneg %p171
      $region34: #{encoder_layer.6} parent=11 // pred_check_branch
        %355 = sbr.rel (%p353) target = $region36
      $region35: #{encoder_layer.6} parent=11 // pred_region
        _
      $region36: #{encoder_layer.6} parent=11 // pred_fallthru
        _
      // Predicated region
      $region37: #{encoder_layer.6} parent=11 // pred_check
        %p356 = pneg %p192
      $region38: #{encoder_layer.6} parent=11 // pred_check_branch
        %358 = sbr.rel (%p356) target = $region40
      $region39: #{encoder_layer.6} parent=11 // pred_region
        _
      $region40: #{encoder_layer.6} parent=11 // pred_fallthru
        _
      // Predicated region
      $region41: #{encoder_layer.6} parent=11 // pred_check
        %p359 = pneg %p213
      $region42: #{encoder_layer.6} parent=11 // pred_check_branch
        %361 = sbr.rel (%p359) target = $region44
      $region43: #{encoder_layer.6} parent=11 // pred_region
        _
      $region44: #{encoder_layer.6} parent=11 // pred_fallthru
        _
      // Predicated region
      $region45: #{encoder_layer.6} parent=11 // pred_check
        %p362 = pneg %p234
      $region46: #{encoder_layer.6} parent=11 // pred_check_branch
        %364 = sbr.rel (%p362) target = $region48
      $region47: #{encoder_layer.6} parent=11 // pred_region
        _
      $region48: #{encoder_layer.6} parent=11 // pred_fallthru
        _
      // Predicated region
      $region49: #{encoder_layer.6} parent=11 // pred_check
        %p365 = pneg %p255
      $region50: #{encoder_layer.6} parent=11 // pred_check_branch
        %367 = sbr.rel (%p365) target = $region52
      $region51: #{encoder_layer.6} parent=11 // pred_region
        _
      $region52: #{encoder_layer.6} parent=11 // pred_fallthru
        _
      // Predicated region
      $region53: #{encoder_layer.6} parent=11 // pred_check
        %p368 = pneg %p276
      $region54: #{encoder_layer.6} parent=11 // pred_check_branch
        %370 = sbr.rel (%p368) target = $region56
      $region55: #{encoder_layer.6} parent=11 // pred_region
        _
      $region56: #{encoder_layer.6} parent=11 // pred_fallthru
        _
      // Predicated region
      $region57: #{encoder_layer.6} parent=11 // pred_check
        %p371 = pneg %p297
      $region58: #{encoder_layer.6} parent=11 // pred_check_branch
        %373 = sbr.rel (%p371) target = $region60
      $region59: #{encoder_layer.6} parent=11 // pred_region
        _
      $region60: #{encoder_layer.6} parent=11 // pred_fallthru
        _
    $region12: #{encoder_layer.6} parent=5 // pred_fallthru
      _
    %p374 = scmp.lt.s32.totalorder %s19, 2
    // Predicated region
    $region61: #{encoder_layer.6} parent=5 // pred_check
      %p375 = pneg %p374
    $region62: #{encoder_layer.6} parent=5 // pred_check_branch
      %377 = sbr.rel (%p375) target = $region64
    $region63: #{encoder_layer.6} parent=5 // pred_region
      // Predicated region
      $region65: #{encoder_layer.6} parent=63 // pred_check
        %p378 = pneg %p39
      $region66: #{encoder_layer.6} parent=63 // pred_check_branch
        %380 = sbr.rel (%p378) target = $region68
      $region67: #{encoder_layer.6} parent=63 // pred_region
        %p381 = scmp.lt.s32.totalorder %s19, 1
        %s382 = scalar_select %p381, %s19, 1
        %s383 = smul.addr %s382, 2
        %s384 = smul.addr %s383, 8
        %s385 = scalar_lea.vmem %s0, %s384
      $region68: #{encoder_layer.6} parent=63 // pred_fallthru
        _
    $region64: #{encoder_layer.6} parent=5 // pred_fallthru
      _
    %p386 = scmp.le.s32.totalorder 1, %s19
    %p387 = scmp.lt.s32.totalorder %s19, 3
    %p388 = pnand %p386, %p387
    %p389 = pneg %p388
    // Predicated region
    $region69: #{encoder_layer.6} parent=5 // pred_check
      _
    $region70: #{encoder_layer.6} parent=5 // pred_check_branch
      %391 = sbr.rel (%p388) target = $region72
    $region71: #{encoder_layer.6} parent=5 // pred_region
      %s392 = ssub.s32 %s19, 1
      %p393 = scmp.lt.s32.totalorder %s24, 1
      %s394 = scalar_select %p393, %s24, 1
      %s395 = smul.addr %s394, 2
      %s396 = smul.addr %s395, 8
      %s397 = scalar_lea.vmem %s0, %s396
      %p398 = pneg %p45
      %p399 = pneg %p42
      %p400 = pneg %p66
      %p401 = pneg %p63
      %p402 = pneg %p87
      %p403 = pneg %p84
      %p404 = pneg %p108
      %p405 = pneg %p105
      %p406 = pneg %p129
      %p407 = pneg %p126
      %p408 = pneg %p150
      %p409 = pneg %p147
      %p410 = pneg %p171
      %p411 = pneg %p168
      %p412 = pneg %p192
      %p413 = pneg %p189
      %p414 = pneg %p213
      %p415 = pneg %p210
      %p416 = pneg %p234
      %p417 = pneg %p231
      %p418 = pneg %p255
      %p419 = pneg %p252
      %p420 = pneg %p276
      %p421 = pneg %p273
      %p422 = pneg %p297
      %p423 = pneg %p294
      %p424 = pneg %p323
      %p425 = pneg %p320
      %p426 = scmp.lt.s32.totalorder %s24, 1
      %s427 = scalar_select %p426, %s24, 1
      %s428 = smul.addr %s427, 2
      %s429 = smul.addr %s428, 8
      %s430 = scalar_lea.vmem %s13, %s429
      %p431 = scmp.lt.s32.totalorder %s24, 1
      %s432 = scalar_select %p431, %s24, 1
      %s433 = smul.addr %s432, 2
      %s434 = smul.addr %s433, 8
      %s435 = scalar_lea.vmem %s0, %s434
      %p436 = scmp.lt.s32.totalorder %s24, 1
      %s437 = scalar_select %p436, %s24, 1
      %s438 = smul.addr %s437, 2
      %s439 = smul.addr %s438, 8
      %s440 = scalar_lea.vmem %s13, %s439
      %v441 = vld [vmem:[%s435] sm:$0xff]
      %v442 = vld [vmem:[%s435 + $0x8] sm:$0xff]
      %v443 = vld [vmem:[%s1] sm:$0x1]
      %v444 = vld [vmem:[%s2] sm:$0x1]
      %445 = vadd.xlane.f32.xlu0 %v441
      %v446 = vpop.xlane.xlu0 %445
      %447 = vadd.xlane.f32.xlu0 %v442
      %v448 = vpop.xlane.xlu0 %447
      %v449 = vrcp.pop 128.0
      %v450 = vmul.f32 128.0, %v449
      %v451 = vsub.f32 1.0, %v450
      %v452 = vmul.f32 %v449, %v451
      %v453 = vadd.f32 %v449, %v452
      %vm454 = vweird.f32 %v449
      %v455 = vsel %vm454, %v449, %v453
      %v456 = vmul.f32 %v446, %v455
      %v457 = vmul.f32 %v448, %v455
      %v458 = vsub.f32 %v441, %v456
      %v459 = vsub.f32 %v442, %v457
      %v460 = vmul.f32 %v458, %v458
      %v461 = vmul.f32 %v459, %v459
      %462 = vadd.xlane.f32.xlu0 %v460
      %v463 = vpop.xlane.xlu0 %462
      %464 = vadd.xlane.f32.xlu0 %v461
      %v465 = vpop.xlane.xlu0 %464
      %v466 = vmul.f32 %v463, %v455
      %v467 = vmul.f32 %v465, %v455
      %v468 = vadd.f32 %v466, 1e-12
      %v469 = vadd.f32 %v467, 1e-12
      %v470 = vrsqrt.pop %v468
      %v471 = vmul.f32 %v470, %v468
      %v472 = vmul.f32 %v471, %v470
      %v473 = vmul.f32 0.5, %v472
      %v474 = vsub.f32 1.5, %v473
      %v475 = vmul.f32 %v470, %v474
      %vm476 = vweird.f32 %v468
      %vm477 = vweird.f32 %v470
      %vm478 = vmor %vm476, %vm477
      %v479 = vsel %vm478, %v470, %v475
      %v480 = vrsqrt.pop %v469
      %v481 = vmul.f32 %v480, %v469
      %v482 = vmul.f32 %v481, %v480
      %v483 = vmul.f32 0.5, %v482
      %v484 = vsub.f32 1.5, %v483
      %v485 = vmul.f32 %v480, %v484
      %vm486 = vweird.f32 %v469
      %vm487 = vweird.f32 %v480
      %vm488 = vmor %vm486, %vm487
      %v489 = vsel %vm488, %v480, %v485
      %v490 = vmul.f32 %v458, %v479
      %v491 = vmul.f32 %v459, %v489
      %v493 = vperm.slane %v443, 0
      %v495 = vmul.f32 %v490, %v493
      %v496 = vmul.f32 %v491, %v493
      %v498 = vperm.slane %v444, 0
      %v500 = vadd.f32 %v495, %v498
      %v501 = vadd.f32 %v496, %v498
      %v502 = vpack.c.bf16 %v501, %v500
      %v503 = vld [vmem:[%s3] sm:$0xff]
      %v504 = vld [vmem:[%s3 + $0x8] sm:$0xff]
      %v505 = vld [vmem:[%s3 + $0x10] sm:$0xff]
      %v506 = vld [vmem:[%s3 + $0x18] sm:$0xff]
      %v507 = vld [vmem:[%s3 + $0x20] sm:$0xff]
      %v508 = vld [vmem:[%s3 + $0x28] sm:$0xff]
      %v509 = vld [vmem:[%s3 + $0x30] sm:$0xff]
      %v510 = vld [vmem:[%s3 + $0x38] sm:$0xff]
      %v511 = vld [vmem:[%s3 + $0x40] sm:$0xff]
      %v512 = vld [vmem:[%s3 + $0x48] sm:$0xff]
      %v513 = vld [vmem:[%s3 + $0x50] sm:$0xff]
      %v514 = vld [vmem:[%s3 + $0x58] sm:$0xff]
      %v515 = vld [vmem:[%s3 + $0x60] sm:$0xff]
      %v516 = vld [vmem:[%s3 + $0x68] sm:$0xff]
      %v517 = vld [vmem:[%s3 + $0x70] sm:$0xff]
      %v518 = vld [vmem:[%s3 + $0x78] sm:$0xff]
      %v519 = vld [vmem:[%s4] sm:$0x3]
      %v521 = vperm.slane %v519, 0
      %v522 = vperm.slane %v519, 1
      %v541 = vunpack.c.l.b16 %v503
      %v542 = vunpack.c.h.b16 %v503
      %v543 = vunpack.c.l.b16 %v504
      %v544 = vunpack.c.h.b16 %v504
      %v545 = vunpack.c.l.b16 %v505
      %v546 = vunpack.c.h.b16 %v505
      %v547 = vunpack.c.l.b16 %v506
      %v548 = vunpack.c.h.b16 %v506
      %v549 = vunpack.c.l.b16 %v507
      %v550 = vunpack.c.h.b16 %v507
      %v551 = vunpack.c.l.b16 %v508
      %v552 = vunpack.c.h.b16 %v508
      %v553 = vunpack.c.l.b16 %v509
      %v554 = vunpack.c.h.b16 %v509
      %v555 = vunpack.c.l.b16 %v510
      %v556 = vunpack.c.h.b16 %v510
      %v557 = vunpack.c.l.b16 %v511
      %v558 = vunpack.c.h.b16 %v511
      %v559 = vunpack.c.l.b16 %v512
      %v560 = vunpack.c.h.b16 %v512
      %v561 = vunpack.c.l.b16 %v513
      %v562 = vunpack.c.h.b16 %v513
      %v563 = vunpack.c.l.b16 %v514
      %v564 = vunpack.c.h.b16 %v514
      %v565 = vunpack.c.l.b16 %v515
      %v566 = vunpack.c.h.b16 %v515
      %v567 = vunpack.c.l.b16 %v516
      %v568 = vunpack.c.h.b16 %v516
      %v569 = vunpack.c.l.b16 %v517
      %v570 = vunpack.c.h.b16 %v517
      %v571 = vunpack.c.l.b16 %v518
      %v572 = vunpack.c.h.b16 %v518
      %v573 = vpack.c.b16 %v543, %v541
      %v574 = vpack.c.b16 %v544, %v542
      %v575 = vpack.c.b16 %v547, %v545
      %v576 = vpack.c.b16 %v548, %v546
      %v577 = vpack.c.b16 %v551, %v549
      %v578 = vpack.c.b16 %v552, %v550
      %v579 = vpack.c.b16 %v555, %v553
      %v580 = vpack.c.b16 %v556, %v554
      %v581 = vpack.c.b16 %v559, %v557
      %v582 = vpack.c.b16 %v560, %v558
      %v583 = vpack.c.b16 %v563, %v561
      %v584 = vpack.c.b16 %v564, %v562
      %v585 = vpack.c.b16 %v567, %v565
      %v586 = vpack.c.b16 %v568, %v566
      %v587 = vpack.c.b16 %v571, %v569
      %v588 = vpack.c.b16 %v572, %v570
      %605 = vmatpush.bf16.msra.mxu0 %v587
      %606 = vmatpush.bf16.msra.mxu0 %v585
      %607 = vmatpush.bf16.msra.mxu0 %v583
      %608 = vmatpush.bf16.msra.mxu0 %v581
      %609 = vmatpush.bf16.msra.mxu0 %v579
      %610 = vmatpush.bf16.msra.mxu0 %v577
      %611 = vmatpush.bf16.msra.mxu0 %v575
      %612 = vmatpush.bf16.msra.mxu0 %v573
      %613 = vmatmul.bf16.gmra.mxu0 %v502
      %v614 = vpop.f32.mrf.mxu0
      %v615 = vadd.f32 %v521, %v614
      %v616 = vpop.f32.mrf.mxu0
      %v617 = vadd.f32 %v521, %v616
      %618 = vdwg.mxu0
      %619 = vmatpush.bf16.msra.mxu0 %v588
      %620 = vmatpush.bf16.msra.mxu0 %v586
      %621 = vmatpush.bf16.msra.mxu0 %v584
      %622 = vmatpush.bf16.msra.mxu0 %v582
      %623 = vmatpush.bf16.msra.mxu0 %v580
      %624 = vmatpush.bf16.msra.mxu0 %v578
      %625 = vmatpush.bf16.msra.mxu0 %v576
      %626 = vmatpush.bf16.msra.mxu0 %v574
      %627 = vmatmul.bf16.gmra.mxu0 %v502
      %v628 = vpop.f32.mrf.mxu0
      %v629 = vadd.f32 %v522, %v628
      %v630 = vpop.f32.mrf.mxu0
      %v631 = vadd.f32 %v522, %v630
      %632 = vdwg.mxu0
      %v633 = vxor.u32 %v629, 2147483648
      %v634 = vxor.u32 %v631, 2147483648
      %v635 = vmul.f32 %v633, 1.442695
      %v636 = vpow.pop %v635
      %v637 = vmul.f32 %v634, 1.442695
      %v638 = vpow.pop %v637
      %v639 = vadd.f32 %v636, 1.0
      %v640 = vadd.f32 %v638, 1.0
      %v641 = vrcp.pop %v639
      %v642 = vmul.f32 %v639, %v641
      %v643 = vsub.f32 1.0, %v642
      %v644 = vmul.f32 %v641, %v643
      %v645 = vadd.f32 %v641, %v644
      %vm646 = vweird.f32 %v639
      %vm647 = vweird.f32 %v641
      %vm648 = vmor %vm646, %vm647
      %v649 = vsel %vm648, %v641, %v645
      %v650 = vand.u32 2147483647, %v639
      %vm651 = vcmp.eq.f32.partialorder %v650, 8.507059e+37
      %v652 = vand.u32 %v639, 2147483648
      %v653 = vor.u32 1.1754944e-38, %v652
      %v654 = vsel %vm651, %v653, %v649
      %v655 = vmul.f32 1.0, %v654
      %v656 = vrcp.pop %v640
      %v657 = vmul.f32 %v640, %v656
      %v658 = vsub.f32 1.0, %v657
      %v659 = vmul.f32 %v656, %v658
      %v660 = vadd.f32 %v656, %v659
      %vm661 = vweird.f32 %v640
      %vm662 = vweird.f32 %v656
      %vm663 = vmor %vm661, %vm662
      %v664 = vsel %vm663, %v656, %v660
      %v665 = vand.u32 2147483647, %v640
      %vm666 = vcmp.eq.f32.partialorder %v665, 8.507059e+37
      %v667 = vand.u32 %v640, 2147483648
      %v668 = vor.u32 1.1754944e-38, %v667
      %v669 = vsel %vm666, %v668, %v664
      %v670 = vmul.f32 1.0, %v669
      %v671 = vmul.f32 %v615, %v655
      %v672 = vmul.f32 %v617, %v670
      %v673 = vlaneseq
      %v674 = vshrl.u32 %v673, 7
      %v675 = vadd.s32 %v674, 8
      %v676 = vld [vmem:[%s5] sm:$0x7f]
      %v677 = vrot.slane %v671, 5
      %v678 = vrot.slane %v672, 5
      %vm679 = vcmp.lt.s32.totalorder %v674, 3
      %v680 = vsel %vm679, %v677, %v678
      %v681 = vsel %vm679, %v678, %v677
      %v682 = vadd.s32 %v674, 4294967293
      %v683 = vadd.s32 %v675, 4294967293
      %vm684 = vcmp.ge.s32.totalorder %v682, 0
      %vm685 = vcmp.ge.s32.totalorder %v683, 0
      %vm686 = vcmp.lt.s32.totalorder %v682, 16
      %vm687 = vcmp.lt.s32.totalorder %v683, 16
      %vm688 = vmand %vm684, %vm686
      %vm689 = vmand %vm685, %vm687
      %v690 = vsel %vm688, 1, 0
      %v691 = vsel %vm689, 1, 0
      %vm692 = vcmp.eq.s32.totalorder %v690, 1
      %vm693 = vcmp.eq.s32.totalorder %v691, 1
      %v694 = vsel %vm692, %v681, 0.0
      %v695 = vsel %vm693, %v680, 0.0
      %v696 = vperm.slane %v676, 0
      %v697 = vmul.f32 %v694, %v696
      %v698 = vmul.f32 %v695, %v696
      %v699 = vadd.f32 %v697, 0.0
      %v700 = vadd.f32 %v698, 0.0
      %v701 = vrot.slane %v671, 6
      %v702 = vrot.slane %v672, 6
      %vm703 = vcmp.lt.s32.totalorder %v674, 2
      %v704 = vsel %vm703, %v701, %v702
      %v705 = vsel %vm703, %v702, %v701
      %v706 = vadd.s32 %v674, 4294967294
      %v707 = vadd.s32 %v675, 4294967294
      %vm708 = vcmp.ge.s32.totalorder %v706, 0
      %vm709 = vcmp.ge.s32.totalorder %v707, 0
      %vm710 = vcmp.lt.s32.totalorder %v706, 16
      %vm711 = vcmp.lt.s32.totalorder %v707, 16
      %vm712 = vmand %vm708, %vm710
      %vm713 = vmand %vm709, %vm711
      %v714 = vsel %vm712, 1, 0
      %v715 = vsel %vm713, 1, 0
      %vm716 = vcmp.eq.s32.totalorder %v714, 1
      %vm717 = vcmp.eq.s32.totalorder %v715, 1
      %v718 = vsel %vm716, %v705, 0.0
      %v719 = vsel %vm717, %v704, 0.0
      %v720 = vperm.slane %v676, 1
      %v721 = vmul.f32 %v718, %v720
      %v722 = vmul.f32 %v719, %v720
      %v723 = vadd.f32 %v699, %v721
      %v724 = vadd.f32 %v700, %v722
      %v725 = vrot.slane %v671, 7
      %v726 = vrot.slane %v672, 7
      %vm727 = vcmp.lt.s32.totalorder %v674, 1
      %v728 = vsel %vm727, %v725, %v726
      %v729 = vsel %vm727, %v726, %v725
      %v730 = vadd.s32 %v674, 4294967295
      %v731 = vadd.s32 %v675, 4294967295
      %vm732 = vcmp.ge.s32.totalorder %v730, 0
      %vm733 = vcmp.ge.s32.totalorder %v731, 0
      %vm734 = vcmp.lt.s32.totalorder %v730, 16
      %vm735 = vcmp.lt.s32.totalorder %v731, 16
      %vm736 = vmand %vm732, %vm734
      %vm737 = vmand %vm733, %vm735
      %v738 = vsel %vm736, 1, 0
      %v739 = vsel %vm737, 1, 0
      %vm740 = vcmp.eq.s32.totalorder %v738, 1
      %vm741 = vcmp.eq.s32.totalorder %v739, 1
      %v742 = vsel %vm740, %v729, 0.0
      %v743 = vsel %vm741, %v728, 0.0
      %v744 = vperm.slane %v676, 2
      %v745 = vmul.f32 %v742, %v744
      %v746 = vmul.f32 %v743, %v744
      %v747 = vadd.f32 %v723, %v745
      %v748 = vadd.f32 %v724, %v746
      %vm749 = vcmp.ge.s32.totalorder %v674, 0
      %vm750 = vcmp.ge.s32.totalorder %v675, 0
      %vm751 = vcmp.lt.s32.totalorder %v674, 16
      %vm752 = vcmp.lt.s32.totalorder %v675, 16
      %vm753 = vmand %vm749, %vm751
      %vm754 = vmand %vm750, %vm752
      %v755 = vsel %vm753, 1, 0
      %v756 = vsel %vm754, 1, 0
      %vm757 = vcmp.eq.s32.totalorder %v755, 1
      %vm758 = vcmp.eq.s32.totalorder %v756, 1
      %v759 = vsel %vm757, %v671, 0.0
      %v760 = vsel %vm758, %v672, 0.0
      %v761 = vperm.slane %v676, 3
      %v762 = vmul.f32 %v759, %v761
      %v763 = vmul.f32 %v760, %v761
      %v764 = vadd.f32 %v747, %v762
      %v765 = vadd.f32 %v748, %v763
      %v766 = vrot.slane %v671, 1
      %v767 = vrot.slane %v672, 1
      %vm768 = vcmp.lt.s32.totalorder %v674, 7
      %v769 = vsel %vm768, %v766, %v767
      %v770 = vsel %vm768, %v767, %v766
      %v771 = vadd.s32 %v674, 1
      %v772 = vadd.s32 %v675, 1
      %vm773 = vcmp.ge.s32.totalorder %v771, 0
      %vm774 = vcmp.ge.s32.totalorder %v772, 0
      %vm775 = vcmp.lt.s32.totalorder %v771, 16
      %vm776 = vcmp.lt.s32.totalorder %v772, 16
      %vm777 = vmand %vm773, %vm775
      %vm778 = vmand %vm774, %vm776
      %v779 = vsel %vm777, 1, 0
      %v780 = vsel %vm778, 1, 0
      %vm781 = vcmp.eq.s32.totalorder %v779, 1
      %vm782 = vcmp.eq.s32.totalorder %v780, 1
      %v783 = vsel %vm781, %v769, 0.0
      %v784 = vsel %vm782, %v770, 0.0
      %v785 = vperm.slane %v676, 4
      %v786 = vmul.f32 %v783, %v785
      %v787 = vmul.f32 %v784, %v785
      %v788 = vadd.f32 %v764, %v786
      %v789 = vadd.f32 %v765, %v787
      %v790 = vrot.slane %v671, 2
      %v791 = vrot.slane %v672, 2
      %vm792 = vcmp.lt.s32.totalorder %v674, 6
      %v793 = vsel %vm792, %v790, %v791
      %v794 = vsel %vm792, %v791, %v790
      %v795 = vadd.s32 %v674, 2
      %v796 = vadd.s32 %v675, 2
      %vm797 = vcmp.ge.s32.totalorder %v795, 0
      %vm798 = vcmp.ge.s32.totalorder %v796, 0
      %vm799 = vcmp.lt.s32.totalorder %v795, 16
      %vm800 = vcmp.lt.s32.totalorder %v796, 16
      %vm801 = vmand %vm797, %vm799
      %vm802 = vmand %vm798, %vm800
      %v803 = vsel %vm801, 1, 0
      %v804 = vsel %vm802, 1, 0
      %vm805 = vcmp.eq.s32.totalorder %v803, 1
      %vm806 = vcmp.eq.s32.totalorder %v804, 1
      %v807 = vsel %vm805, %v793, 0.0
      %v808 = vsel %vm806, %v794, 0.0
      %v809 = vperm.slane %v676, 5
      %v810 = vmul.f32 %v807, %v809
      %v811 = vmul.f32 %v808, %v809
      %v812 = vadd.f32 %v788, %v810
      %v813 = vadd.f32 %v789, %v811
      %v814 = vrot.slane %v671, 3
      %v815 = vrot.slane %v672, 3
      %vm816 = vcmp.lt.s32.totalorder %v674, 5
      %v817 = vsel %vm816, %v814, %v815
      %v818 = vsel %vm816, %v815, %v814
      %v819 = vadd.s32 %v674, 3
      %v820 = vadd.s32 %v675, 3
      %vm821 = vcmp.ge.s32.totalorder %v819, 0
      %vm822 = vcmp.ge.s32.totalorder %v820, 0
      %vm823 = vcmp.lt.s32.totalorder %v819, 16
      %vm824 = vcmp.lt.s32.totalorder %v820, 16
      %vm825 = vmand %vm821, %vm823
      %vm826 = vmand %vm822, %vm824
      %v827 = vsel %vm825, 1, 0
      %v828 = vsel %vm826, 1, 0
      %vm829 = vcmp.eq.s32.totalorder %v827, 1
      %vm830 = vcmp.eq.s32.totalorder %v828, 1
      %v831 = vsel %vm829, %v817, 0.0
      %v832 = vsel %vm830, %v818, 0.0
      %v833 = vperm.slane %v676, 6
      %v834 = vmul.f32 %v831, %v833
      %v835 = vmul.f32 %v832, %v833
      %v836 = vadd.f32 %v812, %v834
      %v837 = vadd.f32 %v813, %v835
      %v838 = vld [vmem:[%s6] sm:$0x1]
      %v840 = vperm.slane %v838, 0
      %v842 = vadd.f32 %v836, %v840
      %v843 = vadd.f32 %v837, %v840
      %v844 = vld [vmem:[%s9] sm:$0x1]
      %v846 = vperm.slane %v844, 0
      %v848 = vsub.f32 %v842, %v846
      %v849 = vsub.f32 %v843, %v846
      %v850 = vld [vmem:[%s10] sm:$0x1]
      %v851 = vadd.f32 %v850, 1e-05
      %v852 = vrsqrt.pop %v851
      %v853 = vmul.f32 %v852, %v851
      %v854 = vmul.f32 %v853, %v852
      %v855 = vmul.f32 0.5, %v854
      %v856 = vsub.f32 1.5, %v855
      %v857 = vmul.f32 %v852, %v856
      %vm858 = vweird.f32 %v851
      %vm859 = vweird.f32 %v852
      %vm860 = vmor %vm858, %vm859
      %v861 = vsel %vm860, %v852, %v857
      %v863 = vperm.slane %v861, 0
      %v865 = vmul.f32 %v848, %v863
      %v866 = vmul.f32 %v849, %v863
      %v867 = vld [vmem:[%s7] sm:$0x1]
      %v869 = vperm.slane %v867, 0
      %v871 = vmul.f32 %v865, %v869
      %v872 = vmul.f32 %v866, %v869
      %v873 = vld [vmem:[%s8] sm:$0x1]
      %v875 = vperm.slane %v873, 0
      %v877 = vadd.f32 %v871, %v875
      %v878 = vadd.f32 %v872, %v875
      %v879 = vxor.u32 %v877, 2147483648
      %v880 = vxor.u32 %v878, 2147483648
      %v881 = vmul.f32 %v879, 1.442695
      %v882 = vpow.pop %v881
      %v883 = vmul.f32 %v880, 1.442695
      %v884 = vpow.pop %v883
      %v885 = vadd.f32 %v882, 1.0
      %v886 = vadd.f32 %v884, 1.0
      %v887 = vrcp.pop %v885
      %v888 = vmul.f32 %v885, %v887
      %v889 = vsub.f32 1.0, %v888
      %v890 = vmul.f32 %v887, %v889
      %v891 = vadd.f32 %v887, %v890
      %vm892 = vweird.f32 %v885
      %vm893 = vweird.f32 %v887
      %vm894 = vmor %vm892, %vm893
      %v895 = vsel %vm894, %v887, %v891
      %v896 = vand.u32 2147483647, %v885
      %vm897 = vcmp.eq.f32.partialorder %v896, 8.507059e+37
      %v898 = vand.u32 %v885, 2147483648
      %v899 = vor.u32 1.1754944e-38, %v898
      %v900 = vsel %vm897, %v899, %v895
      %v901 = vmul.f32 1.0, %v900
      %v902 = vrcp.pop %v886
      %v903 = vmul.f32 %v886, %v902
      %v904 = vsub.f32 1.0, %v903
      %v905 = vmul.f32 %v902, %v904
      %v906 = vadd.f32 %v902, %v905
      %vm907 = vweird.f32 %v886
      %vm908 = vweird.f32 %v902
      %vm909 = vmor %vm907, %vm908
      %v910 = vsel %vm909, %v902, %v906
      %v911 = vand.u32 2147483647, %v886
      %vm912 = vcmp.eq.f32.partialorder %v911, 8.507059e+37
      %v913 = vand.u32 %v886, 2147483648
      %v914 = vor.u32 1.1754944e-38, %v913
      %v915 = vsel %vm912, %v914, %v910
      %v916 = vmul.f32 1.0, %v915
      %v917 = vmul.f32 %v877, %v901
      %v918 = vmul.f32 %v878, %v916
      %v919 = vpack.c.bf16 %v918, %v917
      %v920 = vld [vmem:[%s11] sm:$0xf]
      %v921 = vld [vmem:[%s11 + $0x4] sm:$0xf]
      %v922 = vld [vmem:[%s11 + $0x8] sm:$0xf]
      %v923 = vld [vmem:[%s11 + $0xc] sm:$0xf]
      %v924 = vld [vmem:[%s11 + $0x10] sm:$0xf]
      %v925 = vld [vmem:[%s11 + $0x14] sm:$0xf]
      %v926 = vld [vmem:[%s11 + $0x18] sm:$0xf]
      %v927 = vld [vmem:[%s11 + $0x1c] sm:$0xf]
      %v928 = vld [vmem:[%s11 + $0x20] sm:$0xf]
      %v929 = vld [vmem:[%s11 + $0x24] sm:$0xf]
      %v930 = vld [vmem:[%s11 + $0x28] sm:$0xf]
      %v931 = vld [vmem:[%s11 + $0x2c] sm:$0xf]
      %v932 = vld [vmem:[%s11 + $0x30] sm:$0xf]
      %v933 = vld [vmem:[%s11 + $0x34] sm:$0xf]
      %v934 = vld [vmem:[%s11 + $0x38] sm:$0xf]
      %v935 = vld [vmem:[%s11 + $0x3c] sm:$0xf]
      %v936 = vld [vmem:[%s12] sm:$0x1]
      %v938 = vperm.slane %v936, 0
      %v956 = vunpack.c.l.b16 %v920
      %v957 = vunpack.c.l.b16 %v921
      %v958 = vunpack.c.l.b16 %v922
      %v959 = vunpack.c.l.b16 %v923
      %v960 = vunpack.c.l.b16 %v924
      %v961 = vunpack.c.l.b16 %v925
      %v962 = vunpack.c.l.b16 %v926
      %v963 = vunpack.c.l.b16 %v927
      %v964 = vunpack.c.l.b16 %v928
      %v965 = vunpack.c.l.b16 %v929
      %v966 = vunpack.c.l.b16 %v930
      %v967 = vunpack.c.l.b16 %v931
      %v968 = vunpack.c.l.b16 %v932
      %v969 = vunpack.c.l.b16 %v933
      %v970 = vunpack.c.l.b16 %v934
      %v971 = vunpack.c.l.b16 %v935
      %v972 = vpack.c.b16 %v957, %v956
      %v973 = vpack.c.b16 %v959, %v958
      %v974 = vpack.c.b16 %v961, %v960
      %v975 = vpack.c.b16 %v963, %v962
      %v976 = vpack.c.b16 %v965, %v964
      %v977 = vpack.c.b16 %v967, %v966
      %v978 = vpack.c.b16 %v969, %v968
      %v979 = vpack.c.b16 %v971, %v970
      %988 = vmatpush.bf16.msra.mxu0 %v979
      %989 = vmatpush.bf16.msra.mxu0 %v978
      %990 = vmatpush.bf16.msra.mxu0 %v977
      %991 = vmatpush.bf16.msra.mxu0 %v976
      %992 = vmatpush.bf16.msra.mxu0 %v975
      %993 = vmatpush.bf16.msra.mxu0 %v974
      %994 = vmatpush.bf16.msra.mxu0 %v973
      %995 = vmatpush.bf16.msra.mxu0 %v972
      %996 = vmatmul.bf16.gmra.mxu0 %v919
      %v997 = vpop.f32.mrf.mxu0
      %v998 = vadd.f32 %v938, %v997
      %v999 = vpop.f32.mrf.mxu0
      %v1000 = vadd.f32 %v938, %v999
      %1001 = vdwg.mxu0
      %v1002 = vadd.f32 %v441, %v998
      %v1003 = vadd.f32 %v442, %v1000
      %1004 = vst [vmem:[%s440] sm:$0xff] %v1002
      %1005 = vst [vmem:[%s440 + $0x8] sm:$0xff] %v1003
      %p1006 = scmp.lt.s32.totalorder %s24, 1
      %s1007 = scalar_select %p1006, %s24, 1
      %s1008 = smul.addr %s1007, 2
      %s1009 = smul.addr %s1008, 8
      %s1010 = scalar_lea.vmem %s13, %s1009
      // Predicated region
      $region73: #{encoder_layer.6} parent=71 // pred_check
        %p1011 = pneg %p320
      $region74: #{encoder_layer.6} parent=71 // pred_check_branch
        %1013 = sbr.rel (%p1011) target = $region76
      $region75: #{encoder_layer.6} parent=71 // pred_region
        _
      $region76: #{encoder_layer.6} parent=71 // pred_fallthru
        _
    $region72: #{encoder_layer.6} parent=5 // pred_fallthru
      _
    %p1014 = scmp.le.s32.totalorder 2, %s19
    // Predicated region
    $region77: #{encoder_layer.6} parent=5 // pred_check
      %p1015 = pneg %p1014
    $region78: #{encoder_layer.6} parent=5 // pred_check_branch
      %1017 = sbr.rel (%p1015) target = $region80
    $region79: #{encoder_layer.6} parent=5 // pred_region
      %s1018 = ssub.s32 %s19, 2
      // Predicated region
      $region81: #{encoder_layer.6} parent=79 // pred_check
        %p1019 = pneg %p326
      $region82: #{encoder_layer.6} parent=79 // pred_check_branch
        %1021 = sbr.rel (%p1019) target = $region84
      $region83: #{encoder_layer.6} parent=79 // pred_region
        %p1022 = scmp.lt.s32.totalorder %s25, 1
        %s1023 = scalar_select %p1022, %s25, 1
        %s1024 = smul.addr %s1023, 2
        %s1025 = smul.addr %s1024, 8
        %s1026 = scalar_lea.vmem %s13, %s1025
      $region84: #{encoder_layer.6} parent=79 // pred_fallthru
        _
    $region80: #{encoder_layer.6} parent=5 // pred_fallthru
      _
  $region6: #{encoder_layer.6} parent=0 // loop_footer
    %s23 = sadd.s32 1, %s19
  $region7: #{encoder_layer.6} parent=0 // loop_footer_branch
    %18 = sbr.rel target = $region3
  $region8: #{encoder_layer.6} parent=0 // loop_exit
    _

</llo_original>
